<compile_context>
chip_gen: v6e
topology: v6e:2x2x1
jax: 0.10.0
libtpu: 0.0.40
codegen_flags: <defaults>
</compile_context>

<pallas_src>
import functools

import jax
import jax.numpy as jnp
from jax.experimental import pallas as pl
from jax.experimental.pallas import tpu as pltpu


def _largest_divisor_leq(n, k):
    k = max(1, min(n, k))
    while n % k != 0:
        k -= 1
    return int(k)


def _plan_tiling(B, C, H, W, P, in_itemsize, out_itemsize):
    """Pick (batch_tile, channel_chunk, vmem_limit_bytes) per TPU generation."""
    HW = H * W
    Hp, Wp = H + 2 * P, W + 2 * P
    CC = min(C, 32)  # channel chunk for the mean/max accumulation

    kind = ""
    try:
        kind = (jax.devices()[0].device_kind or "").lower()
    except Exception:
        pass
    is_v7 = ("v7" in kind) or ("7x" in kind)
    num_tc = 2 if is_v7 else 1

    vmem_physical = (64 << 20) if is_v7 else (128 << 20)
    try:
        info = pltpu.get_tpu_info()
        vmem_physical = int(getattr(info, "vmem_capacity_bytes", vmem_physical))
    except Exception:
        pass
    # Leave headroom for compiler-internal scratch; never ask for more than
    # ~100 MiB even on 128-MiB parts.
    cap = min(vmem_physical - (8 << 20), 100 << 20)

    per_batch_x = C * HW * in_itemsize
    target_block = 8 << 20  # bigger blocks amortize the ~0.35us/step overhead

    tb = _largest_divisor_leq(B, max(1, target_block // max(per_batch_x, 1)))
    if num_tc >= 2 and B >= 2:
        # Keep >= 2 grid steps so both TensorCores get work, and prefer an even
        # number of steps so neither core idles for a tail step.
        tb = min(tb, _largest_divisor_leq(B, max(1, B // 2)))
        t = tb
        while t > 1 and (B // t) % num_tc != 0:
            t = _largest_divisor_leq(B, t - 1)
        tb = t

    def _need(tb_):
        x_blk = tb_ * C * HW * in_itemsize          # double-buffered input block
        out_blk = tb_ * HW * out_itemsize           # double-buffered output block
        scratch = 2 * tb_ * Hp * Wp * 4             # padded pooled planes
        live = (tb_ * CC * HW * 4                   # one f32 channel chunk
                + 8 * tb_ * HW * 4                  # pooled maps + accumulators
                + 4 * tb_ * Hp * Wp * 4)            # hoisted padded plane values
        return 2 * x_blk + 2 * out_blk + scratch + live + (4 << 20)

    while tb > 1 and _need(tb) > cap:
        tb = _largest_divisor_leq(B, tb - 1)
    # TODO(synk): add halo-aware H-tiling for the case where a single batch
    # element (tb == 1) still exceeds the VMEM budget.

    vmem_limit = int(min(max(_need(tb), 32 << 20), cap))
    return tb, CC, vmem_limit


def _spatial_attention_kernel(x_ref, w_ref, o_ref, pad_ref, *, K, P, H, W, CC):
    # x_ref:   (TB, C, H*W)          VMEM block (lane-dense last dim)
    # w_ref:   (2*K*K,)              SMEM (flattened OIHW conv weight, O=1)
    # o_ref:   (TB, 1, H*W)          VMEM block (lane-dense last dim)
    # pad_ref: (2, TB, H+2P, W+2P)   VMEM scratch (zero-padded pooled maps)
    TB, C, HW = x_ref.shape
    Hp, Wp = H + 2 * P, W + 2 * P

    # ---- channel mean/max, chunked over C (bounded f32 live footprint) ----
    s = None
    m = None
    c0 = 0
    while c0 < C:
        cc = min(CC, C - c0)
        xc = x_ref[:, c0:c0 + cc, :]                      # (TB, cc, HW) static slice
        cs = jnp.sum(xc.astype(jnp.float32), axis=1)      # (TB, HW) f32
        cm = jnp.max(xc, axis=1)                          # (TB, HW) input dtype
        s = cs if s is None else s + cs
        m = cm if m is None else jnp.maximum(m, cm)
        c0 += cc
    avg2d = (s * (1.0 / C)).reshape(TB, H, W)
    max2d = m.astype(jnp.float32).reshape(TB, H, W)

    # ---- zero only the halo strips (interior is fully overwritten below).
    # NOTE: a once-only init under program_id==0 would be skipped on the
    # second TensorCore when the "parallel" batch axis is megacore-split.
    pad_ref[:, :, 0:P, :] = jnp.zeros((2, TB, P, Wp), jnp.float32)
    pad_ref[:, :, P + H:Hp, :] = jnp.zeros((2, TB, P, Wp), jnp.float32)
    pad_ref[:, :, :, 0:P] = jnp.zeros((2, TB, Hp, P), jnp.float32)
    pad_ref[:, :, :, P + W:Wp] = jnp.zeros((2, TB, Hp, P), jnp.float32)

    pad_ref[0, :, P:P + H, P:P + W] = avg2d
    pad_ref[1, :, P:P + H, P:P + W] = max2d

    # ---- KxK cross-correlation, 2 in-channels -> 1 out-channel (VPU only).
    # Load each padded plane once as a value; the shifted windows are value
    # slices, not repeated ref passes.  Two partial accumulators.
    pad_a = pad_ref[0]                                    # (TB, Hp, Wp) value
    pad_m = pad_ref[1]
    acc_a = jnp.zeros((TB, H, W), jnp.float32)
    acc_m = jnp.zeros((TB, H, W), jnp.float32)
    for ky in range(K):
        for kx in range(K):
            wa = w_ref[ky * K + kx]                       # SMEM scalars
            wm = w_ref[K * K + ky * K + kx]
            acc_a = acc_a + wa * pad_a[:, ky:ky + H, kx:kx + W]
            acc_m = acc_m + wm * pad_m[:, ky:ky + H, kx:kx + W]

    y = jax.nn.sigmoid(acc_a + acc_m)                     # (TB, H, W)
    o_ref[...] = y.reshape(TB, 1, HW).astype(o_ref.dtype)


def spatial_attention(x_nchw, conv_w, kernel_size=7):
    """x_nchw: (B, C, H, W); conv_w: (1, 2, K, K) PyTorch OIHW weight (bias=False).
    Returns (B, 1, H, W), matching SpatialAttention.forward."""
    assert kernel_size in (3, 7), "kernel size must be 3 or 7"
    K = kernel_size
    P = 3 if kernel_size == 7 else 1
    B, C, H, W = x_nchw.shape
    assert conv_w.shape == (1, 2, K, K)

    HW = H * W
    Hp, Wp = H + 2 * P, W + 2 * P

    x_flat = x_nchw.reshape(B, C, HW)                     # free view, lane-dense
    w_flat = conv_w.reshape(2 * K * K).astype(jnp.float32)

    in_itemsize = jnp.dtype(x_nchw.dtype).itemsize
    out_itemsize = in_itemsize
    TB, CC, vmem_limit = _plan_tiling(B, C, H, W, P, in_itemsize, out_itemsize)

    kernel = functools.partial(_spatial_attention_kernel, K=K, P=P, H=H, W=W, CC=CC)

    out = pl.pallas_call(
        kernel,
        out_shape=jax.ShapeDtypeStruct((B, 1, HW), x_nchw.dtype),
        grid_spec=pltpu.PrefetchScalarGridSpec(
            num_scalar_prefetch=0,
            grid=(B // TB,),
            in_specs=[
                pl.BlockSpec((TB, C, HW), lambda b: (b, 0, 0)),
                pl.BlockSpec(memory_space=pltpu.MemorySpace.SMEM),
            ],
            out_specs=pl.BlockSpec((TB, 1, HW), lambda b: (b, 0, 0)),
            scratch_shapes=[pltpu.VMEM((2, TB, Hp, Wp), jnp.float32)],
        ),
        compiler_params=pltpu.CompilerParams(
            dimension_semantics=("parallel",),
            vmem_limit_bytes=vmem_limit,
        ),
        cost_estimate=pl.CostEstimate(
            flops=B * HW * (2 * C + 4 * K * K),
            transcendentals=B * HW,
            bytes_accessed=B * C * HW * in_itemsize + B * HW * out_itemsize,
        ),
    )(x_flat, w_flat)

    return out.reshape(B, 1, H, W)


def reference(x_nchw, conv_w, kernel_size=7):
    # Pure-JAX reference of the PyTorch forward.
    p = 3 if kernel_size == 7 else 1
    avg = jnp.mean(x_nchw, axis=1, keepdims=True)
    mx = jnp.max(x_nchw, axis=1, keepdims=True)
    cat = jnp.concatenate([avg, mx], axis=1)              # (B, 2, H, W)
    y = jax.lax.conv_general_dilated(
        cat, conv_w, window_strides=(1, 1), padding=((p, p), (p, p)),
        dimension_numbers=("NCHW", "OIHW", "NCHW"))
    return jax.nn.sigmoid(y)


if __name__ == "__main__":
    key = jax.random.PRNGKey(0)
    kx, kw = jax.random.split(key, 2)

    B, C, H, W = 2, 4, 16, 16
    KS = 7
    x = jax.random.normal(kx, (B, C, H, W), dtype=jnp.float32)
    conv_w = jax.random.normal(kw, (1, 2, KS, KS), dtype=jnp.float32) * 0.1

    out = spatial_attention(x, conv_w, kernel_size=KS)
    jax.block_until_ready(out)

    ref = reference(x, conv_w, kernel_size=KS)
    assert out.shape == (B, 1, H, W)
    assert jnp.allclose(out, ref, atol=1e-5, rtol=1e-5)

    print("KERNEL_OK")
</pallas_src>

<mosaic_0001>
module attributes {stable_mosaic.version = 11 : i64} {
  func.func @_spatial_attention_kernel(%arg0: i32, %arg1: memref<2x4x256xf32, #tpu.memory_space<vmem>>, %arg2: memref<98xf32, #tpu.memory_space<smem>>, %arg3: memref<2x1x256xf32, #tpu.memory_space<vmem>>, %arg4: memref<2x2x22x22xf32, #tpu.memory_space<vmem>>) attributes {dimension_semantics = [#tpu.dimension_semantics<parallel>], iteration_bounds = array<i64: 1>, scalar_prefetch = 0 : i64, scratch_operands = 1 : i64, tpu.core_type = #tpu.core_type<tc>, window_params = [{transform_indices = @transform_0, window_bounds = array<i64: 2, 4, 256>}, {transform_indices = @transform_1, window_bounds = array<i64: 98>}, {transform_indices = @transform_2, window_bounds = array<i64: 2, 1, 256>}]} {
    %c0 = arith.constant 0 : index
    %c0_0 = arith.constant 0 : index
    %c0_1 = arith.constant 0 : index
    %0 = vector.load %arg1[%c0, %c0_0, %c0_1] : memref<2x4x256xf32, #tpu.memory_space<vmem>>, vector<2x4x256xf32>
    %cst = arith.constant dense<0.000000e+00> : vector<2x256xf32>
    %1 = vector.multi_reduction <add>, %0, %cst [1] : vector<2x4x256xf32> to vector<2x256xf32>
    %cst_2 = arith.constant dense<0xFF800000> : vector<2x256xf32>
    %2 = vector.multi_reduction <maximumf>, %0, %cst_2 [1] : vector<2x4x256xf32> to vector<2x256xf32>
    %cst_3 = arith.constant 2.500000e-01 : f32
    %3 = vector.broadcast %cst_3 : f32 to vector<2x256xf32>
    %4 = arith.mulf %1, %3 : vector<2x256xf32>
    %5 = vector.shape_cast %4 : vector<2x256xf32> to vector<2x16x16xf32>
    %6 = vector.shape_cast %2 : vector<2x256xf32> to vector<2x16x16xf32>
    %cst_4 = arith.constant 0.000000e+00 : f32
    %7 = vector.broadcast %cst_4 : f32 to vector<2x2x3x22xf32>
    %c0_5 = arith.constant 0 : index
    %c0_6 = arith.constant 0 : index
    %c0_7 = arith.constant 0 : index
    %c0_8 = arith.constant 0 : index
    %8 = vector.load %arg4[%c0_5, %c0_6, %c0_7, %c0_8] : memref<2x2x22x22xf32, #tpu.memory_space<vmem>>, vector<2x2x3x22xf32>
    tpu.vector_store %arg4[%c0_5, %c0_6, %c0_7, %c0_8], %7 {strides = array<i32>} : memref<2x2x22x22xf32, #tpu.memory_space<vmem>>, vector<2x2x3x22xf32>,
    %cst_9 = arith.constant 0.000000e+00 : f32
    %9 = vector.broadcast %cst_9 : f32 to vector<2x2x3x22xf32>
    %c0_10 = arith.constant 0 : index
    %c0_11 = arith.constant 0 : index
    %c19 = arith.constant 19 : index
    %c0_12 = arith.constant 0 : index
    %10 = vector.load %arg4[%c0_10, %c0_11, %c19, %c0_12] : memref<2x2x22x22xf32, #tpu.memory_space<vmem>>, vector<2x2x3x22xf32>
    tpu.vector_store %arg4[%c0_10, %c0_11, %c19, %c0_12], %9 {strides = array<i32>} : memref<2x2x22x22xf32, #tpu.memory_space<vmem>>, vector<2x2x3x22xf32>,
    %cst_13 = arith.constant 0.000000e+00 : f32
    %11 = vector.broadcast %cst_13 : f32 to vector<2x2x22x3xf32>
    %c0_14 = arith.constant 0 : index
    %c0_15 = arith.constant 0 : index
    %c0_16 = arith.constant 0 : index
    %c0_17 = arith.constant 0 : index
    %12 = vector.load %arg4[%c0_14, %c0_15, %c0_16, %c0_17] : memref<2x2x22x22xf32, #tpu.memory_space<vmem>>, vector<2x2x22x3xf32>
    tpu.vector_store %arg4[%c0_14, %c0_15, %c0_16, %c0_17], %11 {strides = array<i32>} : memref<2x2x22x22xf32, #tpu.memory_space<vmem>>, vector<2x2x22x3xf32>,
    %cst_18 = arith.constant 0.000000e+00 : f32
    %13 = vector.broadcast %cst_18 : f32 to vector<2x2x22x3xf32>
    %c0_19 = arith.constant 0 : index
    %c0_20 = arith.constant 0 : index
    %c0_21 = arith.constant 0 : index
    %c19_22 = arith.constant 19 : index
    %14 = vector.load %arg4[%c0_19, %c0_20, %c0_21, %c19_22] : memref<2x2x22x22xf32, #tpu.memory_space<vmem>>, vector<2x2x22x3xf32>
    tpu.vector_store %arg4[%c0_19, %c0_20, %c0_21, %c19_22], %13 {strides = array<i32>} : memref<2x2x22x22xf32, #tpu.memory_space<vmem>>, vector<2x2x22x3xf32>,
    %c0_23 = arith.constant 0 : index
    %c0_24 = arith.constant 0 : index
    %c3 = arith.constant 3 : index
    %c3_25 = arith.constant 3 : index
    %15 = vector.load %arg4[%c0_23, %c0_24, %c3, %c3_25] : memref<2x2x22x22xf32, #tpu.memory_space<vmem>>, vector<1x2x16x16xf32>
    %16 = vector.shape_cast %15 : vector<1x2x16x16xf32> to vector<2x16x16xf32>
    %17 = vector.shape_cast %5 : vector<2x16x16xf32> to vector<1x2x16x16xf32>
    tpu.vector_store %arg4[%c0_23, %c0_24, %c3, %c3_25], %17 {strides = array<i32>} : memref<2x2x22x22xf32, #tpu.memory_space<vmem>>, vector<1x2x16x16xf32>,
    %c1 = arith.constant 1 : index
    %c0_26 = arith.constant 0 : index
    %c3_27 = arith.constant 3 : index
    %c3_28 = arith.constant 3 : index
    %18 = vector.load %arg4[%c1, %c0_26, %c3_27, %c3_28] : memref<2x2x22x22xf32, #tpu.memory_space<vmem>>, vector<1x2x16x16xf32>
    %19 = vector.shape_cast %18 : vector<1x2x16x16xf32> to vector<2x16x16xf32>
    %20 = vector.shape_cast %6 : vector<2x16x16xf32> to vector<1x2x16x16xf32>
    tpu.vector_store %arg4[%c1, %c0_26, %c3_27, %c3_28], %20 {strides = array<i32>} : memref<2x2x22x22xf32, #tpu.memory_space<vmem>>, vector<1x2x16x16xf32>,
    %c0_29 = arith.constant 0 : index
    %c0_30 = arith.constant 0 : index
    %c0_31 = arith.constant 0 : index
    %c0_32 = arith.constant 0 : index
    %21 = vector.load %arg4[%c0_29, %c0_30, %c0_31, %c0_32] : memref<2x2x22x22xf32, #tpu.memory_space<vmem>>, vector<1x2x22x22xf32>
    %22 = vector.shape_cast %21 : vector<1x2x22x22xf32> to vector<2x22x22xf32>
    %c1_33 = arith.constant 1 : index
    %c0_34 = arith.constant 0 : index
    %c0_35 = arith.constant 0 : index
    %c0_36 = arith.constant 0 : index
    %23 = vector.load %arg4[%c1_33, %c0_34, %c0_35, %c0_36] : memref<2x2x22x22xf32, #tpu.memory_space<vmem>>, vector<1x2x22x22xf32>
    %24 = vector.shape_cast %23 : vector<1x2x22x22xf32> to vector<2x22x22xf32>
    %cst_37 = arith.constant 0.000000e+00 : f32
    %25 = vector.broadcast %cst_37 : f32 to vector<2x16x16xf32>
    %cst_38 = arith.constant 0.000000e+00 : f32
    %26 = vector.broadcast %cst_38 : f32 to vector<2x16x16xf32>
    %c0_39 = arith.constant 0 : index
    %27 = memref.load %arg2[%c0_39] : memref<98xf32, #tpu.memory_space<smem>>
    %c49 = arith.constant 49 : index
    %28 = memref.load %arg2[%c49] : memref<98xf32, #tpu.memory_space<smem>>
    %29 = vector.extract_strided_slice %22 {offsets = [0, 0, 0], sizes = [2, 16, 16], strides = [1, 1, 1]} : vector<2x22x22xf32> to vector<2x16x16xf32>
    %30 = vector.broadcast %27 : f32 to vector<2x16x16xf32>
    %31 = arith.mulf %30, %29 : vector<2x16x16xf32>
    %32 = arith.addf %25, %31 : vector<2x16x16xf32>
    %33 = vector.extract_strided_slice %24 {offsets = [0, 0, 0], sizes = [2, 16, 16], strides = [1, 1, 1]} : vector<2x22x22xf32> to vector<2x16x16xf32>
    %34 = vector.broadcast %28 : f32 to vector<2x16x16xf32>
    %35 = arith.mulf %34, %33 : vector<2x16x16xf32>
    %36 = arith.addf %26, %35 : vector<2x16x16xf32>
    %c1_40 = arith.constant 1 : index
    %37 = memref.load %arg2[%c1_40] : memref<98xf32, #tpu.memory_space<smem>>
    %c50 = arith.constant 50 : index
    %38 = memref.load %arg2[%c50] : memref<98xf32, #tpu.memory_space<smem>>
    %39 = vector.extract_strided_slice %22 {offsets = [0, 0, 1], sizes = [2, 16, 16], strides = [1, 1, 1]} : vector<2x22x22xf32> to vector<2x16x16xf32>
    %40 = vector.broadcast %37 : f32 to vector<2x16x16xf32>
    %41 = arith.mulf %40, %39 : vector<2x16x16xf32>
    %42 = arith.addf %32, %41 : vector<2x16x16xf32>
    %43 = vector.extract_strided_slice %24 {offsets = [0, 0, 1], sizes = [2, 16, 16], strides = [1, 1, 1]} : vector<2x22x22xf32> to vector<2x16x16xf32>
    %44 = vector.broadcast %38 : f32 to vector<2x16x16xf32>
    %45 = arith.mulf %44, %43 : vector<2x16x16xf32>
    %46 = arith.addf %36, %45 : vector<2x16x16xf32>
    %c2 = arith.constant 2 : index
    %47 = memref.load %arg2[%c2] : memref<98xf32, #tpu.memory_space<smem>>
    %c51 = arith.constant 51 : index
    %48 = memref.load %arg2[%c51] : memref<98xf32, #tpu.memory_space<smem>>
    %49 = vector.extract_strided_slice %22 {offsets = [0, 0, 2], sizes = [2, 16, 16], strides = [1, 1, 1]} : vector<2x22x22xf32> to vector<2x16x16xf32>
    %50 = vector.broadcast %47 : f32 to vector<2x16x16xf32>
    %51 = arith.mulf %50, %49 : vector<2x16x16xf32>
    %52 = arith.addf %42, %51 : vector<2x16x16xf32>
    %53 = vector.extract_strided_slice %24 {offsets = [0, 0, 2], sizes = [2, 16, 16], strides = [1, 1, 1]} : vector<2x22x22xf32> to vector<2x16x16xf32>
    %54 = vector.broadcast %48 : f32 to vector<2x16x16xf32>
    %55 = arith.mulf %54, %53 : vector<2x16x16xf32>
    %56 = arith.addf %46, %55 : vector<2x16x16xf32>
    %c3_41 = arith.constant 3 : index
    %57 = memref.load %arg2[%c3_41] : memref<98xf32, #tpu.memory_space<smem>>
    %c52 = arith.constant 52 : index
    %58 = memref.load %arg2[%c52] : memref<98xf32, #tpu.memory_space<smem>>
    %59 = vector.extract_strided_slice %22 {offsets = [0, 0, 3], sizes = [2, 16, 16], strides = [1, 1, 1]} : vector<2x22x22xf32> to vector<2x16x16xf32>
    %60 = vector.broadcast %57 : f32 to vector<2x16x16xf32>
    %61 = arith.mulf %60, %59 : vector<2x16x16xf32>
    %62 = arith.addf %52, %61 : vector<2x16x16xf32>
    %63 = vector.extract_strided_slice %24 {offsets = [0, 0, 3], sizes = [2, 16, 16], strides = [1, 1, 1]} : vector<2x22x22xf32> to vector<2x16x16xf32>
    %64 = vector.broadcast %58 : f32 to vector<2x16x16xf32>
    %65 = arith.mulf %64, %63 : vector<2x16x16xf32>
    %66 = arith.addf %56, %65 : vector<2x16x16xf32>
    %c4 = arith.constant 4 : index
    %67 = memref.load %arg2[%c4] : memref<98xf32, #tpu.memory_space<smem>>
    %c53 = arith.constant 53 : index
    %68 = memref.load %arg2[%c53] : memref<98xf32, #tpu.memory_space<smem>>
    %69 = vector.extract_strided_slice %22 {offsets = [0, 0, 4], sizes = [2, 16, 16], strides = [1, 1, 1]} : vector<2x22x22xf32> to vector<2x16x16xf32>
    %70 = vector.broadcast %67 : f32 to vector<2x16x16xf32>
    %71 = arith.mulf %70, %69 : vector<2x16x16xf32>
    %72 = arith.addf %62, %71 : vector<2x16x16xf32>
    %73 = vector.extract_strided_slice %24 {offsets = [0, 0, 4], sizes = [2, 16, 16], strides = [1, 1, 1]} : vector<2x22x22xf32> to vector<2x16x16xf32>
    %74 = vector.broadcast %68 : f32 to vector<2x16x16xf32>
    %75 = arith.mulf %74, %73 : vector<2x16x16xf32>
    %76 = arith.addf %66, %75 : vector<2x16x16xf32>
    %c5 = arith.constant 5 : index
    %77 = memref.load %arg2[%c5] : memref<98xf32, #tpu.memory_space<smem>>
    %c54 = arith.constant 54 : index
    %78 = memref.load %arg2[%c54] : memref<98xf32, #tpu.memory_space<smem>>
    %79 = vector.extract_strided_slice %22 {offsets = [0, 0, 5], sizes = [2, 16, 16], strides = [1, 1, 1]} : vector<2x22x22xf32> to vector<2x16x16xf32>
    %80 = vector.broadcast %77 : f32 to vector<2x16x16xf32>
    %81 = arith.mulf %80, %79 : vector<2x16x16xf32>
    %82 = arith.addf %72, %81 : vector<2x16x16xf32>
    %83 = vector.extract_strided_slice %24 {offsets = [0, 0, 5], sizes = [2, 16, 16], strides = [1, 1, 1]} : vector<2x22x22xf32> to vector<2x16x16xf32>
    %84 = vector.broadcast %78 : f32 to vector<2x16x16xf32>
    %85 = arith.mulf %84, %83 : vector<2x16x16xf32>
    %86 = arith.addf %76, %85 : vector<2x16x16xf32>
    %c6 = arith.constant 6 : index
    %87 = memref.load %arg2[%c6] : memref<98xf32, #tpu.memory_space<smem>>
    %c55 = arith.constant 55 : index
    %88 = memref.load %arg2[%c55] : memref<98xf32, #tpu.memory_space<smem>>
    %89 = vector.extract_strided_slice %22 {offsets = [0, 0, 6], sizes = [2, 16, 16], strides = [1, 1, 1]} : vector<2x22x22xf32> to vector<2x16x16xf32>
    %90 = vector.broadcast %87 : f32 to vector<2x16x16xf32>
    %91 = arith.mulf %90, %89 : vector<2x16x16xf32>
    %92 = arith.addf %82, %91 : vector<2x16x16xf32>
    %93 = vector.extract_strided_slice %24 {offsets = [0, 0, 6], sizes = [2, 16, 16], strides = [1, 1, 1]} : vector<2x22x22xf32> to vector<2x16x16xf32>
    %94 = vector.broadcast %88 : f32 to vector<2x16x16xf32>
    %95 = arith.mulf %94, %93 : vector<2x16x16xf32>
    %96 = arith.addf %86, %95 : vector<2x16x16xf32>
    %c7 = arith.constant 7 : index
    %97 = memref.load %arg2[%c7] : memref<98xf32, #tpu.memory_space<smem>>
    %c56 = arith.constant 56 : index
    %98 = memref.load %arg2[%c56] : memref<98xf32, #tpu.memory_space<smem>>
    %99 = vector.extract_strided_slice %22 {offsets = [0, 1, 0], sizes = [2, 16, 16], strides = [1, 1, 1]} : vector<2x22x22xf32> to vector<2x16x16xf32>
    %100 = vector.broadcast %97 : f32 to vector<2x16x16xf32>
    %101 = arith.mulf %100, %99 : vector<2x16x16xf32>
    %102 = arith.addf %92, %101 : vector<2x16x16xf32>
    %103 = vector.extract_strided_slice %24 {offsets = [0, 1, 0], sizes = [2, 16, 16], strides = [1, 1, 1]} : vector<2x22x22xf32> to vector<2x16x16xf32>
    %104 = vector.broadcast %98 : f32 to vector<2x16x16xf32>
    %105 = arith.mulf %104, %103 : vector<2x16x16xf32>
    %106 = arith.addf %96, %105 : vector<2x16x16xf32>
    %c8 = arith.constant 8 : index
    %107 = memref.load %arg2[%c8] : memref<98xf32, #tpu.memory_space<smem>>
    %c57 = arith.constant 57 : index
    %108 = memref.load %arg2[%c57] : memref<98xf32, #tpu.memory_space<smem>>
    %109 = vector.extract_strided_slice %22 {offsets = [0, 1, 1], sizes = [2, 16, 16], strides = [1, 1, 1]} : vector<2x22x22xf32> to vector<2x16x16xf32>
    %110 = vector.broadcast %107 : f32 to vector<2x16x16xf32>
    %111 = arith.mulf %110, %109 : vector<2x16x16xf32>
    %112 = arith.addf %102, %111 : vector<2x16x16xf32>
    %113 = vector.extract_strided_slice %24 {offsets = [0, 1, 1], sizes = [2, 16, 16], strides = [1, 1, 1]} : vector<2x22x22xf32> to vector<2x16x16xf32>
    %114 = vector.broadcast %108 : f32 to vector<2x16x16xf32>
    %115 = arith.mulf %114, %113 : vector<2x16x16xf32>
    %116 = arith.addf %106, %115 : vector<2x16x16xf32>
    %c9 = arith.constant 9 : index
    %117 = memref.load %arg2[%c9] : memref<98xf32, #tpu.memory_space<smem>>
    %c58 = arith.constant 58 : index
    %118 = memref.load %arg2[%c58] : memref<98xf32, #tpu.memory_space<smem>>
    %119 = vector.extract_strided_slice %22 {offsets = [0, 1, 2], sizes = [2, 16, 16], strides = [1, 1, 1]} : vector<2x22x22xf32> to vector<2x16x16xf32>
    %120 = vector.broadcast %117 : f32 to vector<2x16x16xf32>
    %121 = arith.mulf %120, %119 : vector<2x16x16xf32>
    %122 = arith.addf %112, %121 : vector<2x16x16xf32>
    %123 = vector.extract_strided_slice %24 {offsets = [0, 1, 2], sizes = [2, 16, 16], strides = [1, 1, 1]} : vector<2x22x22xf32> to vector<2x16x16xf32>
    %124 = vector.broadcast %118 : f32 to vector<2x16x16xf32>
    %125 = arith.mulf %124, %123 : vector<2x16x16xf32>
    %126 = arith.addf %116, %125 : vector<2x16x16xf32>
    %c10 = arith.constant 10 : index
    %127 = memref.load %arg2[%c10] : memref<98xf32, #tpu.memory_space<smem>>
    %c59 = arith.constant 59 : index
    %128 = memref.load %arg2[%c59] : memref<98xf32, #tpu.memory_space<smem>>
    %129 = vector.extract_strided_slice %22 {offsets = [0, 1, 3], sizes = [2, 16, 16], strides = [1, 1, 1]} : vector<2x22x22xf32> to vector<2x16x16xf32>
    %130 = vector.broadcast %127 : f32 to vector<2x16x16xf32>
    %131 = arith.mulf %130, %129 : vector<2x16x16xf32>
    %132 = arith.addf %122, %131 : vector<2x16x16xf32>
    %133 = vector.extract_strided_slice %24 {offsets = [0, 1, 3], sizes = [2, 16, 16], strides = [1, 1, 1]} : vector<2x22x22xf32> to vector<2x16x16xf32>
    %134 = vector.broadcast %128 : f32 to vector<2x16x16xf32>
    %135 = arith.mulf %134, %133 : vector<2x16x16xf32>
    %136 = arith.addf %126, %135 : vector<2x16x16xf32>
    %c11 = arith.constant 11 : index
    %137 = memref.load %arg2[%c11] : memref<98xf32, #tpu.memory_space<smem>>
    %c60 = arith.constant 60 : index
    %138 = memref.load %arg2[%c60] : memref<98xf32, #tpu.memory_space<smem>>
    %139 = vector.extract_strided_slice %22 {offsets = [0, 1, 4], sizes = [2, 16, 16], strides = [1, 1, 1]} : vector<2x22x22xf32> to vector<2x16x16xf32>
    %140 = vector.broadcast %137 : f32 to vector<2x16x16xf32>
    %141 = arith.mulf %140, %139 : vector<2x16x16xf32>
    %142 = arith.addf %132, %141 : vector<2x16x16xf32>
    %143 = vector.extract_strided_slice %24 {offsets = [0, 1, 4], sizes = [2, 16, 16], strides = [1, 1, 1]} : vector<2x22x22xf32> to vector<2x16x16xf32>
    %144 = vector.broadcast %138 : f32 to vector<2x16x16xf32>
    %145 = arith.mulf %144, %143 : vector<2x16x16xf32>
    %146 = arith.addf %136, %145 : vector<2x16x16xf32>
    %c12 = arith.constant 12 : index
    %147 = memref.load %arg2[%c12] : memref<98xf32, #tpu.memory_space<smem>>
    %c61 = arith.constant 61 : index
    %148 = memref.load %arg2[%c61] : memref<98xf32, #tpu.memory_space<smem>>
    %149 = vector.extract_strided_slice %22 {offsets = [0, 1, 5], sizes = [2, 16, 16], strides = [1, 1, 1]} : vector<2x22x22xf32> to vector<2x16x16xf32>
    %150 = vector.broadcast %147 : f32 to vector<2x16x16xf32>
    %151 = arith.mulf %150, %149 : vector<2x16x16xf32>
    %152 = arith.addf %142, %151 : vector<2x16x16xf32>
    %153 = vector.extract_strided_slice %24 {offsets = [0, 1, 5], sizes = [2, 16, 16], strides = [1, 1, 1]} : vector<2x22x22xf32> to vector<2x16x16xf32>
    %154 = vector.broadcast %148 : f32 to vector<2x16x16xf32>
    %155 = arith.mulf %154, %153 : vector<2x16x16xf32>
    %156 = arith.addf %146, %155 : vector<2x16x16xf32>
    %c13 = arith.constant 13 : index
    %157 = memref.load %arg2[%c13] : memref<98xf32, #tpu.memory_space<smem>>
    %c62 = arith.constant 62 : index
    %158 = memref.load %arg2[%c62] : memref<98xf32, #tpu.memory_space<smem>>
    %159 = vector.extract_strided_slice %22 {offsets = [0, 1, 6], sizes = [2, 16, 16], strides = [1, 1, 1]} : vector<2x22x22xf32> to vector<2x16x16xf32>
    %160 = vector.broadcast %157 : f32 to vector<2x16x16xf32>
    %161 = arith.mulf %160, %159 : vector<2x16x16xf32>
    %162 = arith.addf %152, %161 : vector<2x16x16xf32>
    %163 = vector.extract_strided_slice %24 {offsets = [0, 1, 6], sizes = [2, 16, 16], strides = [1, 1, 1]} : vector<2x22x22xf32> to vector<2x16x16xf32>
    %164 = vector.broadcast %158 : f32 to vector<2x16x16xf32>
    %165 = arith.mulf %164, %163 : vector<2x16x16xf32>
    %166 = arith.addf %156, %165 : vector<2x16x16xf32>
    %c14 = arith.constant 14 : index
    %167 = memref.load %arg2[%c14] : memref<98xf32, #tpu.memory_space<smem>>
    %c63 = arith.constant 63 : index
    %168 = memref.load %arg2[%c63] : memref<98xf32, #tpu.memory_space<smem>>
    %169 = vector.extract_strided_slice %22 {offsets = [0, 2, 0], sizes = [2, 16, 16], strides = [1, 1, 1]} : vector<2x22x22xf32> to vector<2x16x16xf32>
    %170 = vector.broadcast %167 : f32 to vector<2x16x16xf32>
    %171 = arith.mulf %170, %169 : vector<2x16x16xf32>
    %172 = arith.addf %162, %171 : vector<2x16x16xf32>
    %173 = vector.extract_strided_slice %24 {offsets = [0, 2, 0], sizes = [2, 16, 16], strides = [1, 1, 1]} : vector<2x22x22xf32> to vector<2x16x16xf32>
    %174 = vector.broadcast %168 : f32 to vector<2x16x16xf32>
    %175 = arith.mulf %174, %173 : vector<2x16x16xf32>
    %176 = arith.addf %166, %175 : vector<2x16x16xf32>
    %c15 = arith.constant 15 : index
    %177 = memref.load %arg2[%c15] : memref<98xf32, #tpu.memory_space<smem>>
    %c64 = arith.constant 64 : index
    %178 = memref.load %arg2[%c64] : memref<98xf32, #tpu.memory_space<smem>>
    %179 = vector.extract_strided_slice %22 {offsets = [0, 2, 1], sizes = [2, 16, 16], strides = [1, 1, 1]} : vector<2x22x22xf32> to vector<2x16x16xf32>
    %180 = vector.broadcast %177 : f32 to vector<2x16x16xf32>
    %181 = arith.mulf %180, %179 : vector<2x16x16xf32>
    %182 = arith.addf %172, %181 : vector<2x16x16xf32>
    %183 = vector.extract_strided_slice %24 {offsets = [0, 2, 1], sizes = [2, 16, 16], strides = [1, 1, 1]} : vector<2x22x22xf32> to vector<2x16x16xf32>
    %184 = vector.broadcast %178 : f32 to vector<2x16x16xf32>
    %185 = arith.mulf %184, %183 : vector<2x16x16xf32>
    %186 = arith.addf %176, %185 : vector<2x16x16xf32>
    %c16 = arith.constant 16 : index
    %187 = memref.load %arg2[%c16] : memref<98xf32, #tpu.memory_space<smem>>
    %c65 = arith.constant 65 : index
    %188 = memref.load %arg2[%c65] : memref<98xf32, #tpu.memory_space<smem>>
    %189 = vector.extract_strided_slice %22 {offsets = [0, 2, 2], sizes = [2, 16, 16], strides = [1, 1, 1]} : vector<2x22x22xf32> to vector<2x16x16xf32>
    %190 = vector.broadcast %187 : f32 to vector<2x16x16xf32>
    %191 = arith.mulf %190, %189 : vector<2x16x16xf32>
    %192 = arith.addf %182, %191 : vector<2x16x16xf32>
    %193 = vector.extract_strided_slice %24 {offsets = [0, 2, 2], sizes = [2, 16, 16], strides = [1, 1, 1]} : vector<2x22x22xf32> to vector<2x16x16xf32>
    %194 = vector.broadcast %188 : f32 to vector<2x16x16xf32>
    %195 = arith.mulf %194, %193 : vector<2x16x16xf32>
    %196 = arith.addf %186, %195 : vector<2x16x16xf32>
    %c17 = arith.constant 17 : index
    %197 = memref.load %arg2[%c17] : memref<98xf32, #tpu.memory_space<smem>>
    %c66 = arith.constant 66 : index
    %198 = memref.load %arg2[%c66] : memref<98xf32, #tpu.memory_space<smem>>
    %199 = vector.extract_strided_slice %22 {offsets = [0, 2, 3], sizes = [2, 16, 16], strides = [1, 1, 1]} : vector<2x22x22xf32> to vector<2x16x16xf32>
    %200 = vector.broadcast %197 : f32 to vector<2x16x16xf32>
    %201 = arith.mulf %200, %199 : vector<2x16x16xf32>
    %202 = arith.addf %192, %201 : vector<2x16x16xf32>
    %203 = vector.extract_strided_slice %24 {offsets = [0, 2, 3], sizes = [2, 16, 16], strides = [1, 1, 1]} : vector<2x22x22xf32> to vector<2x16x16xf32>
    %204 = vector.broadcast %198 : f32 to vector<2x16x16xf32>
    %205 = arith.mulf %204, %203 : vector<2x16x16xf32>
    %206 = arith.addf %196, %205 : vector<2x16x16xf32>
    %c18 = arith.constant 18 : index
    %207 = memref.load %arg2[%c18] : memref<98xf32, #tpu.memory_space<smem>>
    %c67 = arith.constant 67 : index
    %208 = memref.load %arg2[%c67] : memref<98xf32, #tpu.memory_space<smem>>
    %209 = vector.extract_strided_slice %22 {offsets = [0, 2, 4], sizes = [2, 16, 16], strides = [1, 1, 1]} : vector<2x22x22xf32> to vector<2x16x16xf32>
    %210 = vector.broadcast %207 : f32 to vector<2x16x16xf32>
    %211 = arith.mulf %210, %209 : vector<2x16x16xf32>
    %212 = arith.addf %202, %211 : vector<2x16x16xf32>
    %213 = vector.extract_strided_slice %24 {offsets = [0, 2, 4], sizes = [2, 16, 16], strides = [1, 1, 1]} : vector<2x22x22xf32> to vector<2x16x16xf32>
    %214 = vector.broadcast %208 : f32 to vector<2x16x16xf32>
    %215 = arith.mulf %214, %213 : vector<2x16x16xf32>
    %216 = arith.addf %206, %215 : vector<2x16x16xf32>
    %c19_42 = arith.constant 19 : index
    %217 = memref.load %arg2[%c19_42] : memref<98xf32, #tpu.memory_space<smem>>
    %c68 = arith.constant 68 : index
    %218 = memref.load %arg2[%c68] : memref<98xf32, #tpu.memory_space<smem>>
    %219 = vector.extract_strided_slice %22 {offsets = [0, 2, 5], sizes = [2, 16, 16], strides = [1, 1, 1]} : vector<2x22x22xf32> to vector<2x16x16xf32>
    %220 = vector.broadcast %217 : f32 to vector<2x16x16xf32>
    %221 = arith.mulf %220, %219 : vector<2x16x16xf32>
    %222 = arith.addf %212, %221 : vector<2x16x16xf32>
    %223 = vector.extract_strided_slice %24 {offsets = [0, 2, 5], sizes = [2, 16, 16], strides = [1, 1, 1]} : vector<2x22x22xf32> to vector<2x16x16xf32>
    %224 = vector.broadcast %218 : f32 to vector<2x16x16xf32>
    %225 = arith.mulf %224, %223 : vector<2x16x16xf32>
    %226 = arith.addf %216, %225 : vector<2x16x16xf32>
    %c20 = arith.constant 20 : index
    %227 = memref.load %arg2[%c20] : memref<98xf32, #tpu.memory_space<smem>>
    %c69 = arith.constant 69 : index
    %228 = memref.load %arg2[%c69] : memref<98xf32, #tpu.memory_space<smem>>
    %229 = vector.extract_strided_slice %22 {offsets = [0, 2, 6], sizes = [2, 16, 16], strides = [1, 1, 1]} : vector<2x22x22xf32> to vector<2x16x16xf32>
    %230 = vector.broadcast %227 : f32 to vector<2x16x16xf32>
    %231 = arith.mulf %230, %229 : vector<2x16x16xf32>
    %232 = arith.addf %222, %231 : vector<2x16x16xf32>
    %233 = vector.extract_strided_slice %24 {offsets = [0, 2, 6], sizes = [2, 16, 16], strides = [1, 1, 1]} : vector<2x22x22xf32> to vector<2x16x16xf32>
    %234 = vector.broadcast %228 : f32 to vector<2x16x16xf32>
    %235 = arith.mulf %234, %233 : vector<2x16x16xf32>
    %236 = arith.addf %226, %235 : vector<2x16x16xf32>
    %c21 = arith.constant 21 : index
    %237 = memref.load %arg2[%c21] : memref<98xf32, #tpu.memory_space<smem>>
    %c70 = arith.constant 70 : index
    %238 = memref.load %arg2[%c70] : memref<98xf32, #tpu.memory_space<smem>>
    %239 = vector.extract_strided_slice %22 {offsets = [0, 3, 0], sizes = [2, 16, 16], strides = [1, 1, 1]} : vector<2x22x22xf32> to vector<2x16x16xf32>
    %240 = vector.broadcast %237 : f32 to vector<2x16x16xf32>
    %241 = arith.mulf %240, %239 : vector<2x16x16xf32>
    %242 = arith.addf %232, %241 : vector<2x16x16xf32>
    %243 = vector.extract_strided_slice %24 {offsets = [0, 3, 0], sizes = [2, 16, 16], strides = [1, 1, 1]} : vector<2x22x22xf32> to vector<2x16x16xf32>
    %244 = vector.broadcast %238 : f32 to vector<2x16x16xf32>
    %245 = arith.mulf %244, %243 : vector<2x16x16xf32>
    %246 = arith.addf %236, %245 : vector<2x16x16xf32>
    %c22 = arith.constant 22 : index
    %247 = memref.load %arg2[%c22] : memref<98xf32, #tpu.memory_space<smem>>
    %c71 = arith.constant 71 : index
    %248 = memref.load %arg2[%c71] : memref<98xf32, #tpu.memory_space<smem>>
    %249 = vector.extract_strided_slice %22 {offsets = [0, 3, 1], sizes = [2, 16, 16], strides = [1, 1, 1]} : vector<2x22x22xf32> to vector<2x16x16xf32>
    %250 = vector.broadcast %247 : f32 to vector<2x16x16xf32>
    %251 = arith.mulf %250, %249 : vector<2x16x16xf32>
    %252 = arith.addf %242, %251 : vector<2x16x16xf32>
    %253 = vector.extract_strided_slice %24 {offsets = [0, 3, 1], sizes = [2, 16, 16], strides = [1, 1, 1]} : vector<2x22x22xf32> to vector<2x16x16xf32>
    %254 = vector.broadcast %248 : f32 to vector<2x16x16xf32>
    %255 = arith.mulf %254, %253 : vector<2x16x16xf32>
    %256 = arith.addf %246, %255 : vector<2x16x16xf32>
    %c23 = arith.constant 23 : index
    %257 = memref.load %arg2[%c23] : memref<98xf32, #tpu.memory_space<smem>>
    %c72 = arith.constant 72 : index
    %258 = memref.load %arg2[%c72] : memref<98xf32, #tpu.memory_space<smem>>
    %259 = vector.extract_strided_slice %22 {offsets = [0, 3, 2], sizes = [2, 16, 16], strides = [1, 1, 1]} : vector<2x22x22xf32> to vector<2x16x16xf32>
    %260 = vector.broadcast %257 : f32 to vector<2x16x16xf32>
    %261 = arith.mulf %260, %259 : vector<2x16x16xf32>
    %262 = arith.addf %252, %261 : vector<2x16x16xf32>
    %263 = vector.extract_strided_slice %24 {offsets = [0, 3, 2], sizes = [2, 16, 16], strides = [1, 1, 1]} : vector<2x22x22xf32> to vector<2x16x16xf32>
    %264 = vector.broadcast %258 : f32 to vector<2x16x16xf32>
    %265 = arith.mulf %264, %263 : vector<2x16x16xf32>
    %266 = arith.addf %256, %265 : vector<2x16x16xf32>
    %c24 = arith.constant 24 : index
    %267 = memref.load %arg2[%c24] : memref<98xf32, #tpu.memory_space<smem>>
    %c73 = arith.constant 73 : index
    %268 = memref.load %arg2[%c73] : memref<98xf32, #tpu.memory_space<smem>>
    %269 = vector.extract_strided_slice %22 {offsets = [0, 3, 3], sizes = [2, 16, 16], strides = [1, 1, 1]} : vector<2x22x22xf32> to vector<2x16x16xf32>
    %270 = vector.broadcast %267 : f32 to vector<2x16x16xf32>
    %271 = arith.mulf %270, %269 : vector<2x16x16xf32>
    %272 = arith.addf %262, %271 : vector<2x16x16xf32>
    %273 = vector.extract_strided_slice %24 {offsets = [0, 3, 3], sizes = [2, 16, 16], strides = [1, 1, 1]} : vector<2x22x22xf32> to vector<2x16x16xf32>
    %274 = vector.broadcast %268 : f32 to vector<2x16x16xf32>
    %275 = arith.mulf %274, %273 : vector<2x16x16xf32>
    %276 = arith.addf %266, %275 : vector<2x16x16xf32>
    %c25 = arith.constant 25 : index
    %277 = memref.load %arg2[%c25] : memref<98xf32, #tpu.memory_space<smem>>
    %c74 = arith.constant 74 : index
    %278 = memref.load %arg2[%c74] : memref<98xf32, #tpu.memory_space<smem>>
    %279 = vector.extract_strided_slice %22 {offsets = [0, 3, 4], sizes = [2, 16, 16], strides = [1, 1, 1]} : vector<2x22x22xf32> to vector<2x16x16xf32>
    %280 = vector.broadcast %277 : f32 to vector<2x16x16xf32>
    %281 = arith.mulf %280, %279 : vector<2x16x16xf32>
    %282 = arith.addf %272, %281 : vector<2x16x16xf32>
    %283 = vector.extract_strided_slice %24 {offsets = [0, 3, 4], sizes = [2, 16, 16], strides = [1, 1, 1]} : vector<2x22x22xf32> to vector<2x16x16xf32>
    %284 = vector.broadcast %278 : f32 to vector<2x16x16xf32>
    %285 = arith.mulf %284, %283 : vector<2x16x16xf32>
    %286 = arith.addf %276, %285 : vector<2x16x16xf32>
    %c26 = arith.constant 26 : index
    %287 = memref.load %arg2[%c26] : memref<98xf32, #tpu.memory_space<smem>>
    %c75 = arith.constant 75 : index
    %288 = memref.load %arg2[%c75] : memref<98xf32, #tpu.memory_space<smem>>
    %289 = vector.extract_strided_slice %22 {offsets = [0, 3, 5], sizes = [2, 16, 16], strides = [1, 1, 1]} : vector<2x22x22xf32> to vector<2x16x16xf32>
    %290 = vector.broadcast %287 : f32 to vector<2x16x16xf32>
    %291 = arith.mulf %290, %289 : vector<2x16x16xf32>
    %292 = arith.addf %282, %291 : vector<2x16x16xf32>
    %293 = vector.extract_strided_slice %24 {offsets = [0, 3, 5], sizes = [2, 16, 16], strides = [1, 1, 1]} : vector<2x22x22xf32> to vector<2x16x16xf32>
    %294 = vector.broadcast %288 : f32 to vector<2x16x16xf32>
    %295 = arith.mulf %294, %293 : vector<2x16x16xf32>
    %296 = arith.addf %286, %295 : vector<2x16x16xf32>
    %c27 = arith.constant 27 : index
    %297 = memref.load %arg2[%c27] : memref<98xf32, #tpu.memory_space<smem>>
    %c76 = arith.constant 76 : index
    %298 = memref.load %arg2[%c76] : memref<98xf32, #tpu.memory_space<smem>>
    %299 = vector.extract_strided_slice %22 {offsets = [0, 3, 6], sizes = [2, 16, 16], strides = [1, 1, 1]} : vector<2x22x22xf32> to vector<2x16x16xf32>
    %300 = vector.broadcast %297 : f32 to vector<2x16x16xf32>
    %301 = arith.mulf %300, %299 : vector<2x16x16xf32>
    %302 = arith.addf %292, %301 : vector<2x16x16xf32>
    %303 = vector.extract_strided_slice %24 {offsets = [0, 3, 6], sizes = [2, 16, 16], strides = [1, 1, 1]} : vector<2x22x22xf32> to vector<2x16x16xf32>
    %304 = vector.broadcast %298 : f32 to vector<2x16x16xf32>
    %305 = arith.mulf %304, %303 : vector<2x16x16xf32>
    %306 = arith.addf %296, %305 : vector<2x16x16xf32>
    %c28 = arith.constant 28 : index
    %307 = memref.load %arg2[%c28] : memref<98xf32, #tpu.memory_space<smem>>
    %c77 = arith.constant 77 : index
    %308 = memref.load %arg2[%c77] : memref<98xf32, #tpu.memory_space<smem>>
    %309 = vector.extract_strided_slice %22 {offsets = [0, 4, 0], sizes = [2, 16, 16], strides = [1, 1, 1]} : vector<2x22x22xf32> to vector<2x16x16xf32>
    %310 = vector.broadcast %307 : f32 to vector<2x16x16xf32>
    %311 = arith.mulf %310, %309 : vector<2x16x16xf32>
    %312 = arith.addf %302, %311 : vector<2x16x16xf32>
    %313 = vector.extract_strided_slice %24 {offsets = [0, 4, 0], sizes = [2, 16, 16], strides = [1, 1, 1]} : vector<2x22x22xf32> to vector<2x16x16xf32>
    %314 = vector.broadcast %308 : f32 to vector<2x16x16xf32>
    %315 = arith.mulf %314, %313 : vector<2x16x16xf32>
    %316 = arith.addf %306, %315 : vector<2x16x16xf32>
    %c29 = arith.constant 29 : index
    %317 = memref.load %arg2[%c29] : memref<98xf32, #tpu.memory_space<smem>>
    %c78 = arith.constant 78 : index
    %318 = memref.load %arg2[%c78] : memref<98xf32, #tpu.memory_space<smem>>
    %319 = vector.extract_strided_slice %22 {offsets = [0, 4, 1], sizes = [2, 16, 16], strides = [1, 1, 1]} : vector<2x22x22xf32> to vector<2x16x16xf32>
    %320 = vector.broadcast %317 : f32 to vector<2x16x16xf32>
    %321 = arith.mulf %320, %319 : vector<2x16x16xf32>
    %322 = arith.addf %312, %321 : vector<2x16x16xf32>
    %323 = vector.extract_strided_slice %24 {offsets = [0, 4, 1], sizes = [2, 16, 16], strides = [1, 1, 1]} : vector<2x22x22xf32> to vector<2x16x16xf32>
    %324 = vector.broadcast %318 : f32 to vector<2x16x16xf32>
    %325 = arith.mulf %324, %323 : vector<2x16x16xf32>
    %326 = arith.addf %316, %325 : vector<2x16x16xf32>
    %c30 = arith.constant 30 : index
    %327 = memref.load %arg2[%c30] : memref<98xf32, #tpu.memory_space<smem>>
    %c79 = arith.constant 79 : index
    %328 = memref.load %arg2[%c79] : memref<98xf32, #tpu.memory_space<smem>>
    %329 = vector.extract_strided_slice %22 {offsets = [0, 4, 2], sizes = [2, 16, 16], strides = [1, 1, 1]} : vector<2x22x22xf32> to vector<2x16x16xf32>
    %330 = vector.broadcast %327 : f32 to vector<2x16x16xf32>
    %331 = arith.mulf %330, %329 : vector<2x16x16xf32>
    %332 = arith.addf %322, %331 : vector<2x16x16xf32>
    %333 = vector.extract_strided_slice %24 {offsets = [0, 4, 2], sizes = [2, 16, 16], strides = [1, 1, 1]} : vector<2x22x22xf32> to vector<2x16x16xf32>
    %334 = vector.broadcast %328 : f32 to vector<2x16x16xf32>
    %335 = arith.mulf %334, %333 : vector<2x16x16xf32>
    %336 = arith.addf %326, %335 : vector<2x16x16xf32>
    %c31 = arith.constant 31 : index
    %337 = memref.load %arg2[%c31] : memref<98xf32, #tpu.memory_space<smem>>
    %c80 = arith.constant 80 : index
    %338 = memref.load %arg2[%c80] : memref<98xf32, #tpu.memory_space<smem>>
    %339 = vector.extract_strided_slice %22 {offsets = [0, 4, 3], sizes = [2, 16, 16], strides = [1, 1, 1]} : vector<2x22x22xf32> to vector<2x16x16xf32>
    %340 = vector.broadcast %337 : f32 to vector<2x16x16xf32>
    %341 = arith.mulf %340, %339 : vector<2x16x16xf32>
    %342 = arith.addf %332, %341 : vector<2x16x16xf32>
    %343 = vector.extract_strided_slice %24 {offsets = [0, 4, 3], sizes = [2, 16, 16], strides = [1, 1, 1]} : vector<2x22x22xf32> to vector<2x16x16xf32>
    %344 = vector.broadcast %338 : f32 to vector<2x16x16xf32>
    %345 = arith.mulf %344, %343 : vector<2x16x16xf32>
    %346 = arith.addf %336, %345 : vector<2x16x16xf32>
    %c32 = arith.constant 32 : index
    %347 = memref.load %arg2[%c32] : memref<98xf32, #tpu.memory_space<smem>>
    %c81 = arith.constant 81 : index
    %348 = memref.load %arg2[%c81] : memref<98xf32, #tpu.memory_space<smem>>
    %349 = vector.extract_strided_slice %22 {offsets = [0, 4, 4], sizes = [2, 16, 16], strides = [1, 1, 1]} : vector<2x22x22xf32> to vector<2x16x16xf32>
    %350 = vector.broadcast %347 : f32 to vector<2x16x16xf32>
    %351 = arith.mulf %350, %349 : vector<2x16x16xf32>
    %352 = arith.addf %342, %351 : vector<2x16x16xf32>
    %353 = vector.extract_strided_slice %24 {offsets = [0, 4, 4], sizes = [2, 16, 16], strides = [1, 1, 1]} : vector<2x22x22xf32> to vector<2x16x16xf32>
    %354 = vector.broadcast %348 : f32 to vector<2x16x16xf32>
    %355 = arith.mulf %354, %353 : vector<2x16x16xf32>
    %356 = arith.addf %346, %355 : vector<2x16x16xf32>
    %c33 = arith.constant 33 : index
    %357 = memref.load %arg2[%c33] : memref<98xf32, #tpu.memory_space<smem>>
    %c82 = arith.constant 82 : index
    %358 = memref.load %arg2[%c82] : memref<98xf32, #tpu.memory_space<smem>>
    %359 = vector.extract_strided_slice %22 {offsets = [0, 4, 5], sizes = [2, 16, 16], strides = [1, 1, 1]} : vector<2x22x22xf32> to vector<2x16x16xf32>
    %360 = vector.broadcast %357 : f32 to vector<2x16x16xf32>
    %361 = arith.mulf %360, %359 : vector<2x16x16xf32>
    %362 = arith.addf %352, %361 : vector<2x16x16xf32>
    %363 = vector.extract_strided_slice %24 {offsets = [0, 4, 5], sizes = [2, 16, 16], strides = [1, 1, 1]} : vector<2x22x22xf32> to vector<2x16x16xf32>
    %364 = vector.broadcast %358 : f32 to vector<2x16x16xf32>
    %365 = arith.mulf %364, %363 : vector<2x16x16xf32>
    %366 = arith.addf %356, %365 : vector<2x16x16xf32>
    %c34 = arith.constant 34 : index
    %367 = memref.load %arg2[%c34] : memref<98xf32, #tpu.memory_space<smem>>
    %c83 = arith.constant 83 : index
    %368 = memref.load %arg2[%c83] : memref<98xf32, #tpu.memory_space<smem>>
    %369 = vector.extract_strided_slice %22 {offsets = [0, 4, 6], sizes = [2, 16, 16], strides = [1, 1, 1]} : vector<2x22x22xf32> to vector<2x16x16xf32>
    %370 = vector.broadcast %367 : f32 to vector<2x16x16xf32>
    %371 = arith.mulf %370, %369 : vector<2x16x16xf32>
    %372 = arith.addf %362, %371 : vector<2x16x16xf32>
    %373 = vector.extract_strided_slice %24 {offsets = [0, 4, 6], sizes = [2, 16, 16], strides = [1, 1, 1]} : vector<2x22x22xf32> to vector<2x16x16xf32>
    %374 = vector.broadcast %368 : f32 to vector<2x16x16xf32>
    %375 = arith.mulf %374, %373 : vector<2x16x16xf32>
    %376 = arith.addf %366, %375 : vector<2x16x16xf32>
    %c35 = arith.constant 35 : index
    %377 = memref.load %arg2[%c35] : memref<98xf32, #tpu.memory_space<smem>>
    %c84 = arith.constant 84 : index
    %378 = memref.load %arg2[%c84] : memref<98xf32, #tpu.memory_space<smem>>
    %379 = vector.extract_strided_slice %22 {offsets = [0, 5, 0], sizes = [2, 16, 16], strides = [1, 1, 1]} : vector<2x22x22xf32> to vector<2x16x16xf32>
    %380 = vector.broadcast %377 : f32 to vector<2x16x16xf32>
    %381 = arith.mulf %380, %379 : vector<2x16x16xf32>
    %382 = arith.addf %372, %381 : vector<2x16x16xf32>
    %383 = vector.extract_strided_slice %24 {offsets = [0, 5, 0], sizes = [2, 16, 16], strides = [1, 1, 1]} : vector<2x22x22xf32> to vector<2x16x16xf32>
    %384 = vector.broadcast %378 : f32 to vector<2x16x16xf32>
    %385 = arith.mulf %384, %383 : vector<2x16x16xf32>
    %386 = arith.addf %376, %385 : vector<2x16x16xf32>
    %c36 = arith.constant 36 : index
    %387 = memref.load %arg2[%c36] : memref<98xf32, #tpu.memory_space<smem>>
    %c85 = arith.constant 85 : index
    %388 = memref.load %arg2[%c85] : memref<98xf32, #tpu.memory_space<smem>>
    %389 = vector.extract_strided_slice %22 {offsets = [0, 5, 1], sizes = [2, 16, 16], strides = [1, 1, 1]} : vector<2x22x22xf32> to vector<2x16x16xf32>
    %390 = vector.broadcast %387 : f32 to vector<2x16x16xf32>
    %391 = arith.mulf %390, %389 : vector<2x16x16xf32>
    %392 = arith.addf %382, %391 : vector<2x16x16xf32>
    %393 = vector.extract_strided_slice %24 {offsets = [0, 5, 1], sizes = [2, 16, 16], strides = [1, 1, 1]} : vector<2x22x22xf32> to vector<2x16x16xf32>
    %394 = vector.broadcast %388 : f32 to vector<2x16x16xf32>
    %395 = arith.mulf %394, %393 : vector<2x16x16xf32>
    %396 = arith.addf %386, %395 : vector<2x16x16xf32>
    %c37 = arith.constant 37 : index
    %397 = memref.load %arg2[%c37] : memref<98xf32, #tpu.memory_space<smem>>
    %c86 = arith.constant 86 : index
    %398 = memref.load %arg2[%c86] : memref<98xf32, #tpu.memory_space<smem>>
    %399 = vector.extract_strided_slice %22 {offsets = [0, 5, 2], sizes = [2, 16, 16], strides = [1, 1, 1]} : vector<2x22x22xf32> to vector<2x16x16xf32>
    %400 = vector.broadcast %397 : f32 to vector<2x16x16xf32>
    %401 = arith.mulf %400, %399 : vector<2x16x16xf32>
    %402 = arith.addf %392, %401 : vector<2x16x16xf32>
    %403 = vector.extract_strided_slice %24 {offsets = [0, 5, 2], sizes = [2, 16, 16], strides = [1, 1, 1]} : vector<2x22x22xf32> to vector<2x16x16xf32>
    %404 = vector.broadcast %398 : f32 to vector<2x16x16xf32>
    %405 = arith.mulf %404, %403 : vector<2x16x16xf32>
    %406 = arith.addf %396, %405 : vector<2x16x16xf32>
    %c38 = arith.constant 38 : index
    %407 = memref.load %arg2[%c38] : memref<98xf32, #tpu.memory_space<smem>>
    %c87 = arith.constant 87 : index
    %408 = memref.load %arg2[%c87] : memref<98xf32, #tpu.memory_space<smem>>
    %409 = vector.extract_strided_slice %22 {offsets = [0, 5, 3], sizes = [2, 16, 16], strides = [1, 1, 1]} : vector<2x22x22xf32> to vector<2x16x16xf32>
    %410 = vector.broadcast %407 : f32 to vector<2x16x16xf32>
    %411 = arith.mulf %410, %409 : vector<2x16x16xf32>
    %412 = arith.addf %402, %411 : vector<2x16x16xf32>
    %413 = vector.extract_strided_slice %24 {offsets = [0, 5, 3], sizes = [2, 16, 16], strides = [1, 1, 1]} : vector<2x22x22xf32> to vector<2x16x16xf32>
    %414 = vector.broadcast %408 : f32 to vector<2x16x16xf32>
    %415 = arith.mulf %414, %413 : vector<2x16x16xf32>
    %416 = arith.addf %406, %415 : vector<2x16x16xf32>
    %c39 = arith.constant 39 : index
    %417 = memref.load %arg2[%c39] : memref<98xf32, #tpu.memory_space<smem>>
    %c88 = arith.constant 88 : index
    %418 = memref.load %arg2[%c88] : memref<98xf32, #tpu.memory_space<smem>>
    %419 = vector.extract_strided_slice %22 {offsets = [0, 5, 4], sizes = [2, 16, 16], strides = [1, 1, 1]} : vector<2x22x22xf32> to vector<2x16x16xf32>
    %420 = vector.broadcast %417 : f32 to vector<2x16x16xf32>
    %421 = arith.mulf %420, %419 : vector<2x16x16xf32>
    %422 = arith.addf %412, %421 : vector<2x16x16xf32>
    %423 = vector.extract_strided_slice %24 {offsets = [0, 5, 4], sizes = [2, 16, 16], strides = [1, 1, 1]} : vector<2x22x22xf32> to vector<2x16x16xf32>
    %424 = vector.broadcast %418 : f32 to vector<2x16x16xf32>
    %425 = arith.mulf %424, %423 : vector<2x16x16xf32>
    %426 = arith.addf %416, %425 : vector<2x16x16xf32>
    %c40 = arith.constant 40 : index
    %427 = memref.load %arg2[%c40] : memref<98xf32, #tpu.memory_space<smem>>
    %c89 = arith.constant 89 : index
    %428 = memref.load %arg2[%c89] : memref<98xf32, #tpu.memory_space<smem>>
    %429 = vector.extract_strided_slice %22 {offsets = [0, 5, 5], sizes = [2, 16, 16], strides = [1, 1, 1]} : vector<2x22x22xf32> to vector<2x16x16xf32>
    %430 = vector.broadcast %427 : f32 to vector<2x16x16xf32>
    %431 = arith.mulf %430, %429 : vector<2x16x16xf32>
    %432 = arith.addf %422, %431 : vector<2x16x16xf32>
    %433 = vector.extract_strided_slice %24 {offsets = [0, 5, 5], sizes = [2, 16, 16], strides = [1, 1, 1]} : vector<2x22x22xf32> to vector<2x16x16xf32>
    %434 = vector.broadcast %428 : f32 to vector<2x16x16xf32>
    %435 = arith.mulf %434, %433 : vector<2x16x16xf32>
    %436 = arith.addf %426, %435 : vector<2x16x16xf32>
    %c41 = arith.constant 41 : index
    %437 = memref.load %arg2[%c41] : memref<98xf32, #tpu.memory_space<smem>>
    %c90 = arith.constant 90 : index
    %438 = memref.load %arg2[%c90] : memref<98xf32, #tpu.memory_space<smem>>
    %439 = vector.extract_strided_slice %22 {offsets = [0, 5, 6], sizes = [2, 16, 16], strides = [1, 1, 1]} : vector<2x22x22xf32> to vector<2x16x16xf32>
    %440 = vector.broadcast %437 : f32 to vector<2x16x16xf32>
    %441 = arith.mulf %440, %439 : vector<2x16x16xf32>
    %442 = arith.addf %432, %441 : vector<2x16x16xf32>
    %443 = vector.extract_strided_slice %24 {offsets = [0, 5, 6], sizes = [2, 16, 16], strides = [1, 1, 1]} : vector<2x22x22xf32> to vector<2x16x16xf32>
    %444 = vector.broadcast %438 : f32 to vector<2x16x16xf32>
    %445 = arith.mulf %444, %443 : vector<2x16x16xf32>
    %446 = arith.addf %436, %445 : vector<2x16x16xf32>
    %c42 = arith.constant 42 : index
    %447 = memref.load %arg2[%c42] : memref<98xf32, #tpu.memory_space<smem>>
    %c91 = arith.constant 91 : index
    %448 = memref.load %arg2[%c91] : memref<98xf32, #tpu.memory_space<smem>>
    %449 = vector.extract_strided_slice %22 {offsets = [0, 6, 0], sizes = [2, 16, 16], strides = [1, 1, 1]} : vector<2x22x22xf32> to vector<2x16x16xf32>
    %450 = vector.broadcast %447 : f32 to vector<2x16x16xf32>
    %451 = arith.mulf %450, %449 : vector<2x16x16xf32>
    %452 = arith.addf %442, %451 : vector<2x16x16xf32>
    %453 = vector.extract_strided_slice %24 {offsets = [0, 6, 0], sizes = [2, 16, 16], strides = [1, 1, 1]} : vector<2x22x22xf32> to vector<2x16x16xf32>
    %454 = vector.broadcast %448 : f32 to vector<2x16x16xf32>
    %455 = arith.mulf %454, %453 : vector<2x16x16xf32>
    %456 = arith.addf %446, %455 : vector<2x16x16xf32>
    %c43 = arith.constant 43 : index
    %457 = memref.load %arg2[%c43] : memref<98xf32, #tpu.memory_space<smem>>
    %c92 = arith.constant 92 : index
    %458 = memref.load %arg2[%c92] : memref<98xf32, #tpu.memory_space<smem>>
    %459 = vector.extract_strided_slice %22 {offsets = [0, 6, 1], sizes = [2, 16, 16], strides = [1, 1, 1]} : vector<2x22x22xf32> to vector<2x16x16xf32>
    %460 = vector.broadcast %457 : f32 to vector<2x16x16xf32>
    %461 = arith.mulf %460, %459 : vector<2x16x16xf32>
    %462 = arith.addf %452, %461 : vector<2x16x16xf32>
    %463 = vector.extract_strided_slice %24 {offsets = [0, 6, 1], sizes = [2, 16, 16], strides = [1, 1, 1]} : vector<2x22x22xf32> to vector<2x16x16xf32>
    %464 = vector.broadcast %458 : f32 to vector<2x16x16xf32>
    %465 = arith.mulf %464, %463 : vector<2x16x16xf32>
    %466 = arith.addf %456, %465 : vector<2x16x16xf32>
    %c44 = arith.constant 44 : index
    %467 = memref.load %arg2[%c44] : memref<98xf32, #tpu.memory_space<smem>>
    %c93 = arith.constant 93 : index
    %468 = memref.load %arg2[%c93] : memref<98xf32, #tpu.memory_space<smem>>
    %469 = vector.extract_strided_slice %22 {offsets = [0, 6, 2], sizes = [2, 16, 16], strides = [1, 1, 1]} : vector<2x22x22xf32> to vector<2x16x16xf32>
    %470 = vector.broadcast %467 : f32 to vector<2x16x16xf32>
    %471 = arith.mulf %470, %469 : vector<2x16x16xf32>
    %472 = arith.addf %462, %471 : vector<2x16x16xf32>
    %473 = vector.extract_strided_slice %24 {offsets = [0, 6, 2], sizes = [2, 16, 16], strides = [1, 1, 1]} : vector<2x22x22xf32> to vector<2x16x16xf32>
    %474 = vector.broadcast %468 : f32 to vector<2x16x16xf32>
    %475 = arith.mulf %474, %473 : vector<2x16x16xf32>
    %476 = arith.addf %466, %475 : vector<2x16x16xf32>
    %c45 = arith.constant 45 : index
    %477 = memref.load %arg2[%c45] : memref<98xf32, #tpu.memory_space<smem>>
    %c94 = arith.constant 94 : index
    %478 = memref.load %arg2[%c94] : memref<98xf32, #tpu.memory_space<smem>>
    %479 = vector.extract_strided_slice %22 {offsets = [0, 6, 3], sizes = [2, 16, 16], strides = [1, 1, 1]} : vector<2x22x22xf32> to vector<2x16x16xf32>
    %480 = vector.broadcast %477 : f32 to vector<2x16x16xf32>
    %481 = arith.mulf %480, %479 : vector<2x16x16xf32>
    %482 = arith.addf %472, %481 : vector<2x16x16xf32>
    %483 = vector.extract_strided_slice %24 {offsets = [0, 6, 3], sizes = [2, 16, 16], strides = [1, 1, 1]} : vector<2x22x22xf32> to vector<2x16x16xf32>
    %484 = vector.broadcast %478 : f32 to vector<2x16x16xf32>
    %485 = arith.mulf %484, %483 : vector<2x16x16xf32>
    %486 = arith.addf %476, %485 : vector<2x16x16xf32>
    %c46 = arith.constant 46 : index
    %487 = memref.load %arg2[%c46] : memref<98xf32, #tpu.memory_space<smem>>
    %c95 = arith.constant 95 : index
    %488 = memref.load %arg2[%c95] : memref<98xf32, #tpu.memory_space<smem>>
    %489 = vector.extract_strided_slice %22 {offsets = [0, 6, 4], sizes = [2, 16, 16], strides = [1, 1, 1]} : vector<2x22x22xf32> to vector<2x16x16xf32>
    %490 = vector.broadcast %487 : f32 to vector<2x16x16xf32>
    %491 = arith.mulf %490, %489 : vector<2x16x16xf32>
    %492 = arith.addf %482, %491 : vector<2x16x16xf32>
    %493 = vector.extract_strided_slice %24 {offsets = [0, 6, 4], sizes = [2, 16, 16], strides = [1, 1, 1]} : vector<2x22x22xf32> to vector<2x16x16xf32>
    %494 = vector.broadcast %488 : f32 to vector<2x16x16xf32>
    %495 = arith.mulf %494, %493 : vector<2x16x16xf32>
    %496 = arith.addf %486, %495 : vector<2x16x16xf32>
    %c47 = arith.constant 47 : index
    %497 = memref.load %arg2[%c47] : memref<98xf32, #tpu.memory_space<smem>>
    %c96 = arith.constant 96 : index
    %498 = memref.load %arg2[%c96] : memref<98xf32, #tpu.memory_space<smem>>
    %499 = vector.extract_strided_slice %22 {offsets = [0, 6, 5], sizes = [2, 16, 16], strides = [1, 1, 1]} : vector<2x22x22xf32> to vector<2x16x16xf32>
    %500 = vector.broadcast %497 : f32 to vector<2x16x16xf32>
    %501 = arith.mulf %500, %499 : vector<2x16x16xf32>
    %502 = arith.addf %492, %501 : vector<2x16x16xf32>
    %503 = vector.extract_strided_slice %24 {offsets = [0, 6, 5], sizes = [2, 16, 16], strides = [1, 1, 1]} : vector<2x22x22xf32> to vector<2x16x16xf32>
    %504 = vector.broadcast %498 : f32 to vector<2x16x16xf32>
    %505 = arith.mulf %504, %503 : vector<2x16x16xf32>
    %506 = arith.addf %496, %505 : vector<2x16x16xf32>
    %c48 = arith.constant 48 : index
    %507 = memref.load %arg2[%c48] : memref<98xf32, #tpu.memory_space<smem>>
    %c97 = arith.constant 97 : index
    %508 = memref.load %arg2[%c97] : memref<98xf32, #tpu.memory_space<smem>>
    %509 = vector.extract_strided_slice %22 {offsets = [0, 6, 6], sizes = [2, 16, 16], strides = [1, 1, 1]} : vector<2x22x22xf32> to vector<2x16x16xf32>
    %510 = vector.broadcast %507 : f32 to vector<2x16x16xf32>
    %511 = arith.mulf %510, %509 : vector<2x16x16xf32>
    %512 = arith.addf %502, %511 : vector<2x16x16xf32>
    %513 = vector.extract_strided_slice %24 {offsets = [0, 6, 6], sizes = [2, 16, 16], strides = [1, 1, 1]} : vector<2x22x22xf32> to vector<2x16x16xf32>
    %514 = vector.broadcast %508 : f32 to vector<2x16x16xf32>
    %515 = arith.mulf %514, %513 : vector<2x16x16xf32>
    %516 = arith.addf %506, %515 : vector<2x16x16xf32>
    %517 = arith.addf %512, %516 : vector<2x16x16xf32>
    %518 = arith.negf %517 : vector<2x16x16xf32>
    %519 = math.exp %518 : vector<2x16x16xf32>
    %cst_43 = arith.constant 1.000000e+00 : f32
    %520 = vector.broadcast %cst_43 : f32 to vector<2x16x16xf32>
    %521 = arith.addf %520, %519 : vector<2x16x16xf32>
    %522 = arith.divf %520, %521 : vector<2x16x16xf32>
    %523 = vector.shape_cast %522 : vector<2x16x16xf32> to vector<2x1x256xf32>
    %c0_44 = arith.constant 0 : index
    %c0_45 = arith.constant 0 : index
    %c0_46 = arith.constant 0 : index
    %524 = vector.load %arg3[%c0_44, %c0_45, %c0_46] : memref<2x1x256xf32, #tpu.memory_space<vmem>>, vector<2x1x256xf32>
    tpu.vector_store %arg3[%c0_44, %c0_45, %c0_46], %523 {strides = array<i32>} : memref<2x1x256xf32, #tpu.memory_space<vmem>>, vector<2x1x256xf32>,
    return
  }
  func.func @transform_0(%arg0: i32) -> (i32, i32, i32) {
    %c0_i32 = arith.constant 0 : i32
    %c0_i32_0 = arith.constant 0 : i32
    %c0_i32_1 = arith.constant 0 : i32
    return %arg0, %c0_i32, %c0_i32_0 : i32, i32, i32
  }
  func.func @transform_1(%arg0: i32) -> i32 {
    %c0_i32 = arith.constant 0 : i32
    %c0_i32_0 = arith.constant 0 : i32
    return %c0_i32 : i32
  }
  func.func @transform_2(%arg0: i32) -> (i32, i32, i32) {
    %c0_i32 = arith.constant 0 : i32
    %c0_i32_0 = arith.constant 0 : i32
    %c0_i32_1 = arith.constant 0 : i32
    return %arg0, %c0_i32, %c0_i32_0 : i32, i32, i32
  }
}

</mosaic_0001>

<llo_original>
// kernel: tpu_custom_call.1
$region0: #{tpu_custom_call.1}
  #allocation0 [shape = 'u32[]', space=smem, size = 0x4, offset = 0x4, fixed_abs, tag = 'smem constant byte address 0x4 - core index']
  #allocation1 [shape = 'u32[144,128]{1,0:T(1,128)}', space=vmem, size = 0x12000, scoped, tag = 'internal scratch']
  #allocation2 [shape = 'f32[2,2,22,22]{3,2,1,0:T(8,128)}', space=vmem, size = 0xc000, scoped, tag = 'scratch operand']
  %s0 = inlined_call_operand.hbm [shape: f32[2,4,256], index: 0, kind: input, shape index: {}]
  %s1 = inlined_call_operand.vmem [shape: f32[98], index: 1, kind: input, shape index: {}]
  %s2 = inlined_call_operand.hbm [shape: f32[2,1,256], index: 2, kind: output, shape index: {}]
  %s3 = sld [smem:[#allocation0]]
  $region26: #{tpu_custom_call.1} parent=0
    _
  %s5 = ssub.s32 1, %s3
  %s6 = scalar_select 0, %s5, %s3
  $region1: #{tpu_custom_call.1} parent=0
    #allocation3 [shape = 'u8[8192]{0}', space=vmem, size = 0x2000, scoped, tag = 'input window, operand 0, single buffered']
    #allocation4 [shape = 's32[1]{0}', space=sflag, size = 0x4, scoped, tag = 'scoped memory for tpu_custom_call.1']
    #allocation5 [shape = 's32[1]{0}', space=sflag, size = 0x4, scoped, tag = 'scoped memory for tpu_custom_call.1']
    #allocation6 [shape = 's32[1]{0}', space=sflag, size = 0x4, scoped, tag = 'scoped memory for tpu_custom_call.1']
    #allocation7 [shape = 'u8[512]{0}', space=smem, size = 0x200, scoped, tag = 'input window, operand 1, single buffered']
    #allocation8 [shape = 'u8[2048]{0}', space=vmem, size = 0x800, scoped, tag = 'output window, operand 0, single buffered']
    %7 = vsyncpa [#allocation4], 0
    %8 = vsyncpa [#allocation6], 0
    %9 = vsyncpa [#allocation5], 0
    // Predicated region
    $region2: #{tpu_custom_call.1} parent=1 // pred_check
      _
    $region3: #{tpu_custom_call.1} parent=1 // pred_check_branch
      %11 = sbr.rel (0) target = $region5
    $region4: #{tpu_custom_call.1} parent=1 // pred_region
      %s13 = ssub.s32 256, 256
      %14 = vsyncadd [#allocation4], %s13
      %s15 = sshll.u32 [#allocation3], 4
      %s16 = int_to_ptr.vmem [resolvable:$true] %s15
      %21 = dma.hbm_to_vmem [thread:$0]  %s0, 256, %s16, [#allocation4], 128, 128, 8
    $region5: #{tpu_custom_call.1} parent=1 // pred_fallthru
      _
    // Predicated region
    $region6: #{tpu_custom_call.1} parent=1 // pred_check
      _
    $region7: #{tpu_custom_call.1} parent=1 // pred_check_branch
      %23 = sbr.rel (0) target = $region9
    $region8: #{tpu_custom_call.1} parent=1 // pred_region
      %s25 = ssub.s32 16, 16
      %26 = vsyncadd [#allocation6], %s25
      %s28 = sshll.u32 %s1, 4
      %s29 = int_to_ptr.vmem [resolvable:$true] %s28
      %31 = dma.vmem_to_smem %s29, 16, [#allocation7], [#allocation6]
    $region9: #{tpu_custom_call.1} parent=1 // pred_fallthru
      _
    // Predicated region
    $region10: #{tpu_custom_call.1} parent=1 // pred_check
      _
    $region11: #{tpu_custom_call.1} parent=1 // pred_check_branch
      %33 = sbr.rel (0) target = $region13
    $region12: #{tpu_custom_call.1} parent=1 // pred_region
      %34 = dma.done [#allocation4], 256
    $region13: #{tpu_custom_call.1} parent=1 // pred_fallthru
      _
    // Predicated region
    $region14: #{tpu_custom_call.1} parent=1 // pred_check
      _
    $region15: #{tpu_custom_call.1} parent=1 // pred_check_branch
      %36 = sbr.rel (0) target = $region17
    $region16: #{tpu_custom_call.1} parent=1 // pred_region
      %37 = dma.done [#allocation6], 16
    $region17: #{tpu_custom_call.1} parent=1 // pred_fallthru
      _
    %38 = sfence
    %v39 = vld [vmem:[#allocation3] sm:$0xff]
    %v40 = vld [vmem:[#allocation3 + $0x8] sm:$0xff]
    %v43 = vcombine.high %v39, %v39
    %v44 = vcombine.high %v40, %v40
    %vm47 = vcmask 1043456
    %v48 = vsel %vm47, %v39, 0.0
    %v49 = vrot.slane %v48, 4
    %v50 = vadd.f32 %v48, %v49
    %v51 = vrot.slane %v50, 2
    %v52 = vadd.f32 %v50, %v51
    %v53 = vrot.slane %v52, 1
    %v54 = vadd.f32 %v52, %v53
    %v55 = vsel %vm47, %v43, 0.0
    %v56 = vrot.slane %v55, 4
    %v57 = vadd.f32 %v55, %v56
    %v58 = vrot.slane %v57, 2
    %v59 = vadd.f32 %v57, %v58
    %v60 = vrot.slane %v59, 1
    %v61 = vadd.f32 %v59, %v60
    %v62 = vsel %vm47, %v40, 0.0
    %v63 = vrot.slane %v62, 4
    %v64 = vadd.f32 %v62, %v63
    %v65 = vrot.slane %v64, 2
    %v66 = vadd.f32 %v64, %v65
    %v67 = vrot.slane %v66, 1
    %v68 = vadd.f32 %v66, %v67
    %v69 = vsel %vm47, %v44, 0.0
    %v70 = vrot.slane %v69, 4
    %v71 = vadd.f32 %v69, %v70
    %v72 = vrot.slane %v71, 2
    %v73 = vadd.f32 %v71, %v72
    %v74 = vrot.slane %v73, 1
    %v75 = vadd.f32 %v73, %v74
    %v76 = vsel %vm47, %v39, -inf
    %v77 = vrot.slane %v76, 4
    %v78 = vmax.f32 %v76, %v77
    %v79 = vrot.slane %v78, 2
    %v80 = vmax.f32 %v78, %v79
    %v81 = vrot.slane %v80, 1
    %v82 = vmax.f32 %v80, %v81
    %v83 = vsel %vm47, %v43, -inf
    %v84 = vrot.slane %v83, 4
    %v85 = vmax.f32 %v83, %v84
    %v86 = vrot.slane %v85, 2
    %v87 = vmax.f32 %v85, %v86
    %v88 = vrot.slane %v87, 1
    %v89 = vmax.f32 %v87, %v88
    %v90 = vsel %vm47, %v40, -inf
    %v91 = vrot.slane %v90, 4
    %v92 = vmax.f32 %v90, %v91
    %v93 = vrot.slane %v92, 2
    %v94 = vmax.f32 %v92, %v93
    %v95 = vrot.slane %v94, 1
    %v96 = vmax.f32 %v94, %v95
    %v97 = vsel %vm47, %v44, -inf
    %v98 = vrot.slane %v97, 4
    %v99 = vmax.f32 %v97, %v98
    %v100 = vrot.slane %v99, 2
    %v101 = vmax.f32 %v99, %v100
    %v102 = vrot.slane %v101, 1
    %v103 = vmax.f32 %v101, %v102
    %v104 = vmul.f32 %v54, 0.25
    %v105 = vmul.f32 %v61, 0.25
    %v106 = vmul.f32 %v68, 0.25
    %v107 = vmul.f32 %v75, 0.25
    %vm108 = vcmask 174080
    %109 = vst.msk [vmem:[#allocation2] sm:$0x7] %vm108, 0.0
    %110 = vst.msk [vmem:[#allocation2 + $0x18] sm:$0x7] %vm108, 0.0
    %111 = vst.msk [vmem:[#allocation2 + $0x30] sm:$0x7] %vm108, 0.0
    %112 = vst.msk [vmem:[#allocation2 + $0x48] sm:$0x7] %vm108, 0.0
    %113 = vst.msk [vmem:[#allocation2 + $0x13] sm:$0x7] %vm108, 0.0
    %114 = vst.msk [vmem:[#allocation2 + $0x2b] sm:$0x7] %vm108, 0.0
    %115 = vst.msk [vmem:[#allocation2 + $0x43] sm:$0x7] %vm108, 0.0
    %116 = vst.msk [vmem:[#allocation2 + $0x5b] sm:$0x7] %vm108, 0.0
    %vm117 = vcmask 23552
    %118 = vst.msk [vmem:[#allocation2] sm:$0xff] %vm117, 0.0
    %119 = vst.msk [vmem:[#allocation2 + $0x8] sm:$0xff] %vm117, 0.0
    %vm120 = vcmask 21504
    %121 = vst.msk [vmem:[#allocation2 + $0x10] sm:$0x3f] %vm120, 0.0
    %122 = vst.msk [vmem:[#allocation2 + $0x18] sm:$0xff] %vm117, 0.0
    %123 = vst.msk [vmem:[#allocation2 + $0x20] sm:$0xff] %vm117, 0.0
    %124 = vst.msk [vmem:[#allocation2 + $0x28] sm:$0x3f] %vm120, 0.0
    %125 = vst.msk [vmem:[#allocation2 + $0x30] sm:$0xff] %vm117, 0.0
    %126 = vst.msk [vmem:[#allocation2 + $0x38] sm:$0xff] %vm117, 0.0
    %127 = vst.msk [vmem:[#allocation2 + $0x40] sm:$0x3f] %vm120, 0.0
    %128 = vst.msk [vmem:[#allocation2 + $0x48] sm:$0xff] %vm117, 0.0
    %129 = vst.msk [vmem:[#allocation2 + $0x50] sm:$0xff] %vm117, 0.0
    %130 = vst.msk [vmem:[#allocation2 + $0x58] sm:$0x3f] %vm120, 0.0
    %vm131 = vcmask 179352
    %132 = vst.msk [vmem:[#allocation2] sm:$0xff] %vm131, 0.0
    %133 = vst.msk [vmem:[#allocation2 + $0x8] sm:$0xff] %vm131, 0.0
    %vm134 = vcmask 177304
    %135 = vst.msk [vmem:[#allocation2 + $0x10] sm:$0x3f] %vm134, 0.0
    %136 = vst.msk [vmem:[#allocation2 + $0x18] sm:$0xff] %vm131, 0.0
    %137 = vst.msk [vmem:[#allocation2 + $0x20] sm:$0xff] %vm131, 0.0
    %138 = vst.msk [vmem:[#allocation2 + $0x28] sm:$0x3f] %vm134, 0.0
    %139 = vst.msk [vmem:[#allocation2 + $0x30] sm:$0xff] %vm131, 0.0
    %140 = vst.msk [vmem:[#allocation2 + $0x38] sm:$0xff] %vm131, 0.0
    %141 = vst.msk [vmem:[#allocation2 + $0x40] sm:$0x3f] %vm134, 0.0
    %142 = vst.msk [vmem:[#allocation2 + $0x48] sm:$0xff] %vm131, 0.0
    %143 = vst.msk [vmem:[#allocation2 + $0x50] sm:$0xff] %vm131, 0.0
    %144 = vst.msk [vmem:[#allocation2 + $0x58] sm:$0x3f] %vm134, 0.0
    %147 = vrot.lane.b32.xlu0 %v104, 112
    %v148 = vpop.permute.xlu0 %147
    %149 = vrot.lane.b32.xlu0 %v106, 112
    %v150 = vpop.permute.xlu0 %149
    %151 = vrot.lane.b32.xlu0 %v104, 96
    %v152 = vpop.permute.xlu0 %151
    %153 = vrot.lane.b32.xlu0 %v106, 96
    %v154 = vpop.permute.xlu0 %153
    %155 = vrot.lane.b32.xlu0 %v104, 80
    %v156 = vpop.permute.xlu0 %155
    %157 = vrot.lane.b32.xlu0 %v106, 80
    %v158 = vpop.permute.xlu0 %157
    %159 = vrot.lane.b32.xlu0 %v104, 64
    %v160 = vpop.permute.xlu0 %159
    %161 = vrot.lane.b32.xlu0 %v106, 64
    %v162 = vpop.permute.xlu0 %161
    %163 = vrot.lane.b32.xlu0 %v104, 48
    %v164 = vpop.permute.xlu0 %163
    %165 = vrot.lane.b32.xlu0 %v106, 48
    %v166 = vpop.permute.xlu0 %165
    %167 = vrot.lane.b32.xlu0 %v104, 32
    %v168 = vpop.permute.xlu0 %167
    %169 = vrot.lane.b32.xlu0 %v106, 32
    %v170 = vpop.permute.xlu0 %169
    %171 = vrot.lane.b32.xlu0 %v104, 16
    %v172 = vpop.permute.xlu0 %171
    %173 = vrot.lane.b32.xlu0 %v106, 16
    %v174 = vpop.permute.xlu0 %173
    %177 = vrot.lane.b32.xlu0 %v105, 112
    %v178 = vpop.permute.xlu0 %177
    %179 = vrot.lane.b32.xlu0 %v107, 112
    %v180 = vpop.permute.xlu0 %179
    %181 = vrot.lane.b32.xlu0 %v105, 96
    %v182 = vpop.permute.xlu0 %181
    %183 = vrot.lane.b32.xlu0 %v107, 96
    %v184 = vpop.permute.xlu0 %183
    %185 = vrot.lane.b32.xlu0 %v105, 80
    %v186 = vpop.permute.xlu0 %185
    %187 = vrot.lane.b32.xlu0 %v107, 80
    %v188 = vpop.permute.xlu0 %187
    %189 = vrot.lane.b32.xlu0 %v105, 64
    %v190 = vpop.permute.xlu0 %189
    %191 = vrot.lane.b32.xlu0 %v107, 64
    %v192 = vpop.permute.xlu0 %191
    %193 = vrot.lane.b32.xlu0 %v105, 48
    %v194 = vpop.permute.xlu0 %193
    %195 = vrot.lane.b32.xlu0 %v107, 48
    %v196 = vpop.permute.xlu0 %195
    %197 = vrot.lane.b32.xlu0 %v105, 32
    %v198 = vpop.permute.xlu0 %197
    %199 = vrot.lane.b32.xlu0 %v107, 32
    %v200 = vpop.permute.xlu0 %199
    %201 = vrot.lane.b32.xlu0 %v105, 16
    %v202 = vpop.permute.xlu0 %201
    %203 = vrot.lane.b32.xlu0 %v107, 16
    %v204 = vpop.permute.xlu0 %203
    %v205 = vrot.slane %v106, 7
    %vm206 = vcmask 1041409
    %v207 = vsel %vm206, %v205, %v104
    %v208 = vrot.slane %v150, 7
    %v209 = vsel %vm206, %v208, %v148
    %v210 = vrot.slane %v154, 7
    %v211 = vsel %vm206, %v210, %v152
    %v212 = vrot.slane %v158, 7
    %v213 = vsel %vm206, %v212, %v156
    %v214 = vrot.slane %v162, 7
    %v215 = vsel %vm206, %v214, %v160
    %v216 = vrot.slane %v166, 7
    %v217 = vsel %vm206, %v216, %v164
    %v218 = vrot.slane %v170, 7
    %v219 = vsel %vm206, %v218, %v168
    %v220 = vrot.slane %v174, 7
    %v221 = vsel %vm206, %v220, %v172
    %v222 = vrot.slane %v107, 7
    %v223 = vsel %vm206, %v222, %v105
    %v224 = vrot.slane %v180, 7
    %v225 = vsel %vm206, %v224, %v178
    %v226 = vrot.slane %v184, 7
    %v227 = vsel %vm206, %v226, %v182
    %v228 = vrot.slane %v188, 7
    %v229 = vsel %vm206, %v228, %v186
    %v230 = vrot.slane %v192, 7
    %v231 = vsel %vm206, %v230, %v190
    %v232 = vrot.slane %v196, 7
    %v233 = vsel %vm206, %v232, %v194
    %v234 = vrot.slane %v200, 7
    %v235 = vsel %vm206, %v234, %v198
    %v236 = vrot.slane %v204, 7
    %v237 = vsel %vm206, %v236, %v202
    %v254 = vcombine.low %v207, %v211
    %v256 = vunpack.c.l.s4 1983009808
    %v257 = vunpack.c.0.s8 %v256
    %v258 = vlaneseq
    %v259 = vshrl.u32 %v258, 7
    %v260 = vsub.s32 %v257, %v259
    %v261 = vrot.slane %v254, %v260
    %v262 = vcombine.low %v209, %v213
    %v264 = vunpack.c.l.s4 1983009808
    %v265 = vunpack.c.0.s8 %v264
    %v266 = vlaneseq
    %v267 = vshrl.u32 %v266, 7
    %v268 = vsub.s32 %v265, %v267
    %v269 = vrot.slane %v262, %v268
    %v270 = vcombine.low %v215, %v219
    %v272 = vunpack.c.l.s4 1983009808
    %v273 = vunpack.c.0.s8 %v272
    %v274 = vlaneseq
    %v275 = vshrl.u32 %v274, 7
    %v276 = vsub.s32 %v273, %v275
    %v277 = vrot.slane %v270, %v276
    %v278 = vcombine.low %v217, %v221
    %v280 = vunpack.c.l.s4 1983009808
    %v281 = vunpack.c.0.s8 %v280
    %v282 = vlaneseq
    %v283 = vshrl.u32 %v282, 7
    %v284 = vsub.s32 %v281, %v283
    %v285 = vrot.slane %v278, %v284
    %v286 = vcombine.low %v261, %v269
    %v288 = vunpack.c.l.s4 1934713408
    %v289 = vunpack.c.0.s8 %v288
    %v290 = vlaneseq
    %v291 = vshrl.u32 %v290, 7
    %v292 = vsub.s32 %v289, %v291
    %v293 = vrot.slane %v286, %v292
    %v294 = vcombine.low %v277, %v285
    %v296 = vunpack.c.l.s4 1934713408
    %v297 = vunpack.c.0.s8 %v296
    %v298 = vlaneseq
    %v299 = vshrl.u32 %v298, 7
    %v300 = vsub.s32 %v297, %v299
    %v301 = vrot.slane %v294, %v300
    %v302 = vcombine.low %v293, %v301
    %v303 = vcombine.high %v293, %v301
    %v304 = vcombine.low %v223, %v227
    %v306 = vunpack.c.l.s4 1983009808
    %v307 = vunpack.c.0.s8 %v306
    %v308 = vlaneseq
    %v309 = vshrl.u32 %v308, 7
    %v310 = vsub.s32 %v307, %v309
    %v311 = vrot.slane %v304, %v310
    %v312 = vcombine.low %v225, %v229
    %v314 = vunpack.c.l.s4 1983009808
    %v315 = vunpack.c.0.s8 %v314
    %v316 = vlaneseq
    %v317 = vshrl.u32 %v316, 7
    %v318 = vsub.s32 %v315, %v317
    %v319 = vrot.slane %v312, %v318
    %v320 = vcombine.low %v231, %v235
    %v322 = vunpack.c.l.s4 1983009808
    %v323 = vunpack.c.0.s8 %v322
    %v324 = vlaneseq
    %v325 = vshrl.u32 %v324, 7
    %v326 = vsub.s32 %v323, %v325
    %v327 = vrot.slane %v320, %v326
    %v328 = vcombine.low %v233, %v237
    %v330 = vunpack.c.l.s4 1983009808
    %v331 = vunpack.c.0.s8 %v330
    %v332 = vlaneseq
    %v333 = vshrl.u32 %v332, 7
    %v334 = vsub.s32 %v331, %v333
    %v335 = vrot.slane %v328, %v334
    %v336 = vcombine.low %v311, %v319
    %v338 = vunpack.c.l.s4 1934713408
    %v339 = vunpack.c.0.s8 %v338
    %v340 = vlaneseq
    %v341 = vshrl.u32 %v340, 7
    %v342 = vsub.s32 %v339, %v341
    %v343 = vrot.slane %v336, %v342
    %v344 = vcombine.low %v327, %v335
    %v346 = vunpack.c.l.s4 1934713408
    %v347 = vunpack.c.0.s8 %v346
    %v348 = vlaneseq
    %v349 = vshrl.u32 %v348, 7
    %v350 = vsub.s32 %v347, %v349
    %v351 = vrot.slane %v344, %v350
    %v352 = vcombine.low %v343, %v351
    %v353 = vcombine.high %v343, %v351
    %358 = vrot.lane.b32.xlu0 %v302, 3
    %v359 = vpop.permute.xlu0 %358
    %360 = vrot.lane.b32.xlu0 %v352, 3
    %v361 = vpop.permute.xlu0 %360
    %362 = vrot.lane.b32.xlu0 %v303, 3
    %v363 = vpop.permute.xlu0 %362
    %364 = vrot.lane.b32.xlu0 %v353, 3
    %v365 = vpop.permute.xlu0 %364
    %vm370 = vcmask 154648
    %371 = vst.msk [vmem:[#allocation2 + $0x3] sm:$0xff] %vm370, %v359
    %372 = vst.msk [vmem:[#allocation2 + $0xb] sm:$0xff] %vm370, %v361
    %373 = vst.msk [vmem:[#allocation2 + $0x1b] sm:$0xff] %vm370, %v363
    %374 = vst.msk [vmem:[#allocation2 + $0x23] sm:$0xff] %vm370, %v365
    %377 = vrot.lane.b32.xlu0 %v82, 112
    %v378 = vpop.permute.xlu0 %377
    %379 = vrot.lane.b32.xlu0 %v96, 112
    %v380 = vpop.permute.xlu0 %379
    %381 = vrot.lane.b32.xlu0 %v82, 96
    %v382 = vpop.permute.xlu0 %381
    %383 = vrot.lane.b32.xlu0 %v96, 96
    %v384 = vpop.permute.xlu0 %383
    %385 = vrot.lane.b32.xlu0 %v82, 80
    %v386 = vpop.permute.xlu0 %385
    %387 = vrot.lane.b32.xlu0 %v96, 80
    %v388 = vpop.permute.xlu0 %387
    %389 = vrot.lane.b32.xlu0 %v82, 64
    %v390 = vpop.permute.xlu0 %389
    %391 = vrot.lane.b32.xlu0 %v96, 64
    %v392 = vpop.permute.xlu0 %391
    %393 = vrot.lane.b32.xlu0 %v82, 48
    %v394 = vpop.permute.xlu0 %393
    %395 = vrot.lane.b32.xlu0 %v96, 48
    %v396 = vpop.permute.xlu0 %395
    %397 = vrot.lane.b32.xlu0 %v82, 32
    %v398 = vpop.permute.xlu0 %397
    %399 = vrot.lane.b32.xlu0 %v96, 32
    %v400 = vpop.permute.xlu0 %399
    %401 = vrot.lane.b32.xlu0 %v82, 16
    %v402 = vpop.permute.xlu0 %401
    %403 = vrot.lane.b32.xlu0 %v96, 16
    %v404 = vpop.permute.xlu0 %403
    %407 = vrot.lane.b32.xlu0 %v89, 112
    %v408 = vpop.permute.xlu0 %407
    %409 = vrot.lane.b32.xlu0 %v103, 112
    %v410 = vpop.permute.xlu0 %409
    %411 = vrot.lane.b32.xlu0 %v89, 96
    %v412 = vpop.permute.xlu0 %411
    %413 = vrot.lane.b32.xlu0 %v103, 96
    %v414 = vpop.permute.xlu0 %413
    %415 = vrot.lane.b32.xlu0 %v89, 80
    %v416 = vpop.permute.xlu0 %415
    %417 = vrot.lane.b32.xlu0 %v103, 80
    %v418 = vpop.permute.xlu0 %417
    %419 = vrot.lane.b32.xlu0 %v89, 64
    %v420 = vpop.permute.xlu0 %419
    %421 = vrot.lane.b32.xlu0 %v103, 64
    %v422 = vpop.permute.xlu0 %421
    %423 = vrot.lane.b32.xlu0 %v89, 48
    %v424 = vpop.permute.xlu0 %423
    %425 = vrot.lane.b32.xlu0 %v103, 48
    %v426 = vpop.permute.xlu0 %425
    %427 = vrot.lane.b32.xlu0 %v89, 32
    %v428 = vpop.permute.xlu0 %427
    %429 = vrot.lane.b32.xlu0 %v103, 32
    %v430 = vpop.permute.xlu0 %429
    %431 = vrot.lane.b32.xlu0 %v89, 16
    %v432 = vpop.permute.xlu0 %431
    %433 = vrot.lane.b32.xlu0 %v103, 16
    %v434 = vpop.permute.xlu0 %433
    %v435 = vrot.slane %v96, 7
    %v436 = vsel %vm206, %v435, %v82
    %v437 = vrot.slane %v380, 7
    %v438 = vsel %vm206, %v437, %v378
    %v439 = vrot.slane %v384, 7
    %v440 = vsel %vm206, %v439, %v382
    %v441 = vrot.slane %v388, 7
    %v442 = vsel %vm206, %v441, %v386
    %v443 = vrot.slane %v392, 7
    %v444 = vsel %vm206, %v443, %v390
    %v445 = vrot.slane %v396, 7
    %v446 = vsel %vm206, %v445, %v394
    %v447 = vrot.slane %v400, 7
    %v448 = vsel %vm206, %v447, %v398
    %v449 = vrot.slane %v404, 7
    %v450 = vsel %vm206, %v449, %v402
    %v451 = vrot.slane %v103, 7
    %v452 = vsel %vm206, %v451, %v89
    %v453 = vrot.slane %v410, 7
    %v454 = vsel %vm206, %v453, %v408
    %v455 = vrot.slane %v414, 7
    %v456 = vsel %vm206, %v455, %v412
    %v457 = vrot.slane %v418, 7
    %v458 = vsel %vm206, %v457, %v416
    %v459 = vrot.slane %v422, 7
    %v460 = vsel %vm206, %v459, %v420
    %v461 = vrot.slane %v426, 7
    %v462 = vsel %vm206, %v461, %v424
    %v463 = vrot.slane %v430, 7
    %v464 = vsel %vm206, %v463, %v428
    %v465 = vrot.slane %v434, 7
    %v466 = vsel %vm206, %v465, %v432
    %v483 = vcombine.low %v436, %v440
    %v485 = vunpack.c.l.s4 1983009808
    %v486 = vunpack.c.0.s8 %v485
    %v487 = vlaneseq
    %v488 = vshrl.u32 %v487, 7
    %v489 = vsub.s32 %v486, %v488
    %v490 = vrot.slane %v483, %v489
    %v491 = vcombine.low %v438, %v442
    %v493 = vunpack.c.l.s4 1983009808
    %v494 = vunpack.c.0.s8 %v493
    %v495 = vlaneseq
    %v496 = vshrl.u32 %v495, 7
    %v497 = vsub.s32 %v494, %v496
    %v498 = vrot.slane %v491, %v497
    %v499 = vcombine.low %v444, %v448
    %v501 = vunpack.c.l.s4 1983009808
    %v502 = vunpack.c.0.s8 %v501
    %v503 = vlaneseq
    %v504 = vshrl.u32 %v503, 7
    %v505 = vsub.s32 %v502, %v504
    %v506 = vrot.slane %v499, %v505
    %v507 = vcombine.low %v446, %v450
    %v509 = vunpack.c.l.s4 1983009808
    %v510 = vunpack.c.0.s8 %v509
    %v511 = vlaneseq
    %v512 = vshrl.u32 %v511, 7
    %v513 = vsub.s32 %v510, %v512
    %v514 = vrot.slane %v507, %v513
    %v515 = vcombine.low %v490, %v498
    %v517 = vunpack.c.l.s4 1934713408
    %v518 = vunpack.c.0.s8 %v517
    %v519 = vlaneseq
    %v520 = vshrl.u32 %v519, 7
    %v521 = vsub.s32 %v518, %v520
    %v522 = vrot.slane %v515, %v521
    %v523 = vcombine.low %v506, %v514
    %v525 = vunpack.c.l.s4 1934713408
    %v526 = vunpack.c.0.s8 %v525
    %v527 = vlaneseq
    %v528 = vshrl.u32 %v527, 7
    %v529 = vsub.s32 %v526, %v528
    %v530 = vrot.slane %v523, %v529
    %v531 = vcombine.low %v522, %v530
    %v532 = vcombine.high %v522, %v530
    %v533 = vcombine.low %v452, %v456
    %v535 = vunpack.c.l.s4 1983009808
    %v536 = vunpack.c.0.s8 %v535
    %v537 = vlaneseq
    %v538 = vshrl.u32 %v537, 7
    %v539 = vsub.s32 %v536, %v538
    %v540 = vrot.slane %v533, %v539
    %v541 = vcombine.low %v454, %v458
    %v543 = vunpack.c.l.s4 1983009808
    %v544 = vunpack.c.0.s8 %v543
    %v545 = vlaneseq
    %v546 = vshrl.u32 %v545, 7
    %v547 = vsub.s32 %v544, %v546
    %v548 = vrot.slane %v541, %v547
    %v549 = vcombine.low %v460, %v464
    %v551 = vunpack.c.l.s4 1983009808
    %v552 = vunpack.c.0.s8 %v551
    %v553 = vlaneseq
    %v554 = vshrl.u32 %v553, 7
    %v555 = vsub.s32 %v552, %v554
    %v556 = vrot.slane %v549, %v555
    %v557 = vcombine.low %v462, %v466
    %v559 = vunpack.c.l.s4 1983009808
    %v560 = vunpack.c.0.s8 %v559
    %v561 = vlaneseq
    %v562 = vshrl.u32 %v561, 7
    %v563 = vsub.s32 %v560, %v562
    %v564 = vrot.slane %v557, %v563
    %v565 = vcombine.low %v540, %v548
    %v567 = vunpack.c.l.s4 1934713408
    %v568 = vunpack.c.0.s8 %v567
    %v569 = vlaneseq
    %v570 = vshrl.u32 %v569, 7
    %v571 = vsub.s32 %v568, %v570
    %v572 = vrot.slane %v565, %v571
    %v573 = vcombine.low %v556, %v564
    %v575 = vunpack.c.l.s4 1934713408
    %v576 = vunpack.c.0.s8 %v575
    %v577 = vlaneseq
    %v578 = vshrl.u32 %v577, 7
    %v579 = vsub.s32 %v576, %v578
    %v580 = vrot.slane %v573, %v579
    %v581 = vcombine.low %v572, %v580
    %v582 = vcombine.high %v572, %v580
    %587 = vrot.lane.b32.xlu0 %v531, 3
    %v588 = vpop.permute.xlu0 %587
    %589 = vrot.lane.b32.xlu0 %v581, 3
    %v590 = vpop.permute.xlu0 %589
    %591 = vrot.lane.b32.xlu0 %v532, 3
    %v592 = vpop.permute.xlu0 %591
    %593 = vrot.lane.b32.xlu0 %v582, 3
    %v594 = vpop.permute.xlu0 %593
    %s599 = scalar_lea.vmem [#allocation2], 48
    %600 = vst.msk [vmem:[%s599 + $0x3] sm:$0xff] %vm370, %v588
    %601 = vst.msk [vmem:[%s599 + $0xb] sm:$0xff] %vm370, %v590
    %602 = vst.msk [vmem:[%s599 + $0x1b] sm:$0xff] %vm370, %v592
    %603 = vst.msk [vmem:[%s599 + $0x23] sm:$0xff] %vm370, %v594
    %v604 = vld [vmem:[#allocation2] sm:$0xff]
    %v605 = vld [vmem:[#allocation2 + $0x8] sm:$0xff]
    %v606 = vld [vmem:[#allocation2 + $0x10] sm:$0x3f]
    %v607 = vld [vmem:[#allocation2 + $0x18] sm:$0xff]
    %v608 = vld [vmem:[#allocation2 + $0x20] sm:$0xff]
    %v609 = vld [vmem:[#allocation2 + $0x28] sm:$0x3f]
    %v610 = vld [vmem:[%s599] sm:$0xff]
    %v611 = vld [vmem:[%s599 + $0x8] sm:$0xff]
    %v612 = vld [vmem:[%s599 + $0x10] sm:$0x3f]
    %v613 = vld [vmem:[%s599 + $0x18] sm:$0xff]
    %v614 = vld [vmem:[%s599 + $0x20] sm:$0xff]
    %v615 = vld [vmem:[%s599 + $0x28] sm:$0x3f]
    %s616 = sld [smem:[#allocation7]]
    %s617 = sld [smem:[#allocation7 + $0x31]]
    %v618 = vstv %s616
    %v619 = vmul.f32 %v618, %v604
    %v620 = vmul.f32 %v618, %v605
    %v621 = vmul.f32 %v618, %v607
    %v622 = vmul.f32 %v618, %v608
    %v623 = vadd.f32 %v619, 0.0
    %v624 = vadd.f32 %v620, 0.0
    %v625 = vadd.f32 %v621, 0.0
    %v626 = vadd.f32 %v622, 0.0
    %v627 = vstv %s617
    %v628 = vmul.f32 %v627, %v610
    %v629 = vmul.f32 %v627, %v611
    %v630 = vmul.f32 %v627, %v613
    %v631 = vmul.f32 %v627, %v614
    %v632 = vadd.f32 %v628, 0.0
    %v633 = vadd.f32 %v629, 0.0
    %v634 = vadd.f32 %v630, 0.0
    %v635 = vadd.f32 %v631, 0.0
    %s636 = sld [smem:[#allocation7 + $0x1]]
    %s637 = sld [smem:[#allocation7 + $0x32]]
    %v638 = vstv %s636
    %v639 = vmul.f32 %v638, %v604
    %v640 = vmul.f32 %v638, %v605
    %v641 = vmul.f32 %v638, %v607
    %v642 = vmul.f32 %v638, %v608
    %647 = vrot.lane.b32.xlu0 %v639, 127
    %v648 = vpop.permute.xlu0 %647
    %649 = vrot.lane.b32.xlu0 %v640, 127
    %v650 = vpop.permute.xlu0 %649
    %651 = vrot.lane.b32.xlu0 %v641, 127
    %v652 = vpop.permute.xlu0 %651
    %653 = vrot.lane.b32.xlu0 %v642, 127
    %v654 = vpop.permute.xlu0 %653
    %v659 = vadd.f32 %v623, %v648
    %v660 = vadd.f32 %v624, %v650
    %v661 = vadd.f32 %v625, %v652
    %v662 = vadd.f32 %v626, %v654
    %v663 = vstv %s637
    %v664 = vmul.f32 %v663, %v610
    %v665 = vmul.f32 %v663, %v611
    %v666 = vmul.f32 %v663, %v613
    %v667 = vmul.f32 %v663, %v614
    %672 = vrot.lane.b32.xlu0 %v664, 127
    %v673 = vpop.permute.xlu0 %672
    %674 = vrot.lane.b32.xlu0 %v665, 127
    %v675 = vpop.permute.xlu0 %674
    %676 = vrot.lane.b32.xlu0 %v666, 127
    %v677 = vpop.permute.xlu0 %676
    %678 = vrot.lane.b32.xlu0 %v667, 127
    %v679 = vpop.permute.xlu0 %678
    %v684 = vadd.f32 %v632, %v673
    %v685 = vadd.f32 %v633, %v675
    %v686 = vadd.f32 %v634, %v677
    %v687 = vadd.f32 %v635, %v679
    %s688 = sld [smem:[#allocation7 + $0x2]]
    %s689 = sld [smem:[#allocation7 + $0x33]]
    %v690 = vstv %s688
    %v691 = vmul.f32 %v690, %v604
    %v692 = vmul.f32 %v690, %v605
    %v693 = vmul.f32 %v690, %v607
    %v694 = vmul.f32 %v690, %v608
    %699 = vrot.lane.b32.xlu0 %v691, 126
    %v700 = vpop.permute.xlu0 %699
    %701 = vrot.lane.b32.xlu0 %v692, 126
    %v702 = vpop.permute.xlu0 %701
    %703 = vrot.lane.b32.xlu0 %v693, 126
    %v704 = vpop.permute.xlu0 %703
    %705 = vrot.lane.b32.xlu0 %v694, 126
    %v706 = vpop.permute.xlu0 %705
    %v711 = vadd.f32 %v659, %v700
    %v712 = vadd.f32 %v660, %v702
    %v713 = vadd.f32 %v661, %v704
    %v714 = vadd.f32 %v662, %v706
    %v715 = vstv %s689
    %v716 = vmul.f32 %v715, %v610
    %v717 = vmul.f32 %v715, %v611
    %v718 = vmul.f32 %v715, %v613
    %v719 = vmul.f32 %v715, %v614
    %724 = vrot.lane.b32.xlu0 %v716, 126
    %v725 = vpop.permute.xlu0 %724
    %726 = vrot.lane.b32.xlu0 %v717, 126
    %v727 = vpop.permute.xlu0 %726
    %728 = vrot.lane.b32.xlu0 %v718, 126
    %v729 = vpop.permute.xlu0 %728
    %730 = vrot.lane.b32.xlu0 %v719, 126
    %v731 = vpop.permute.xlu0 %730
    %v736 = vadd.f32 %v684, %v725
    %v737 = vadd.f32 %v685, %v727
    %v738 = vadd.f32 %v686, %v729
    %v739 = vadd.f32 %v687, %v731
    %s740 = sld [smem:[#allocation7 + $0x3]]
    %s741 = sld [smem:[#allocation7 + $0x34]]
    %v742 = vstv %s740
    %v743 = vmul.f32 %v742, %v604
    %v744 = vmul.f32 %v742, %v605
    %v745 = vmul.f32 %v742, %v607
    %v746 = vmul.f32 %v742, %v608
    %751 = vrot.lane.b32.xlu0 %v743, 125
    %v752 = vpop.permute.xlu0 %751
    %753 = vrot.lane.b32.xlu0 %v744, 125
    %v754 = vpop.permute.xlu0 %753
    %755 = vrot.lane.b32.xlu0 %v745, 125
    %v756 = vpop.permute.xlu0 %755
    %757 = vrot.lane.b32.xlu0 %v746, 125
    %v758 = vpop.permute.xlu0 %757
    %v763 = vadd.f32 %v711, %v752
    %v764 = vadd.f32 %v712, %v754
    %v765 = vadd.f32 %v713, %v756
    %v766 = vadd.f32 %v714, %v758
    %v767 = vstv %s741
    %v768 = vmul.f32 %v767, %v610
    %v769 = vmul.f32 %v767, %v611
    %v770 = vmul.f32 %v767, %v613
    %v771 = vmul.f32 %v767, %v614
    %776 = vrot.lane.b32.xlu0 %v768, 125
    %v777 = vpop.permute.xlu0 %776
    %778 = vrot.lane.b32.xlu0 %v769, 125
    %v779 = vpop.permute.xlu0 %778
    %780 = vrot.lane.b32.xlu0 %v770, 125
    %v781 = vpop.permute.xlu0 %780
    %782 = vrot.lane.b32.xlu0 %v771, 125
    %v783 = vpop.permute.xlu0 %782
    %v788 = vadd.f32 %v736, %v777
    %v789 = vadd.f32 %v737, %v779
    %v790 = vadd.f32 %v738, %v781
    %v791 = vadd.f32 %v739, %v783
    %s792 = sld [smem:[#allocation7 + $0x4]]
    %s793 = sld [smem:[#allocation7 + $0x35]]
    %v794 = vstv %s792
    %v795 = vmul.f32 %v794, %v604
    %v796 = vmul.f32 %v794, %v605
    %v797 = vmul.f32 %v794, %v607
    %v798 = vmul.f32 %v794, %v608
    %803 = vrot.lane.b32.xlu0 %v795, 124
    %v804 = vpop.permute.xlu0 %803
    %805 = vrot.lane.b32.xlu0 %v796, 124
    %v806 = vpop.permute.xlu0 %805
    %807 = vrot.lane.b32.xlu0 %v797, 124
    %v808 = vpop.permute.xlu0 %807
    %809 = vrot.lane.b32.xlu0 %v798, 124
    %v810 = vpop.permute.xlu0 %809
    %v815 = vadd.f32 %v763, %v804
    %v816 = vadd.f32 %v764, %v806
    %v817 = vadd.f32 %v765, %v808
    %v818 = vadd.f32 %v766, %v810
    %v819 = vstv %s793
    %v820 = vmul.f32 %v819, %v610
    %v821 = vmul.f32 %v819, %v611
    %v822 = vmul.f32 %v819, %v613
    %v823 = vmul.f32 %v819, %v614
    %828 = vrot.lane.b32.xlu0 %v820, 124
    %v829 = vpop.permute.xlu0 %828
    %830 = vrot.lane.b32.xlu0 %v821, 124
    %v831 = vpop.permute.xlu0 %830
    %832 = vrot.lane.b32.xlu0 %v822, 124
    %v833 = vpop.permute.xlu0 %832
    %834 = vrot.lane.b32.xlu0 %v823, 124
    %v835 = vpop.permute.xlu0 %834
    %v840 = vadd.f32 %v788, %v829
    %v841 = vadd.f32 %v789, %v831
    %v842 = vadd.f32 %v790, %v833
    %v843 = vadd.f32 %v791, %v835
    %s844 = sld [smem:[#allocation7 + $0x5]]
    %s845 = sld [smem:[#allocation7 + $0x36]]
    %v846 = vstv %s844
    %v847 = vmul.f32 %v846, %v604
    %v848 = vmul.f32 %v846, %v605
    %v849 = vmul.f32 %v846, %v607
    %v850 = vmul.f32 %v846, %v608
    %855 = vrot.lane.b32.xlu0 %v847, 123
    %v856 = vpop.permute.xlu0 %855
    %857 = vrot.lane.b32.xlu0 %v848, 123
    %v858 = vpop.permute.xlu0 %857
    %859 = vrot.lane.b32.xlu0 %v849, 123
    %v860 = vpop.permute.xlu0 %859
    %861 = vrot.lane.b32.xlu0 %v850, 123
    %v862 = vpop.permute.xlu0 %861
    %v867 = vadd.f32 %v815, %v856
    %v868 = vadd.f32 %v816, %v858
    %v869 = vadd.f32 %v817, %v860
    %v870 = vadd.f32 %v818, %v862
    %v871 = vstv %s845
    %v872 = vmul.f32 %v871, %v610
    %v873 = vmul.f32 %v871, %v611
    %v874 = vmul.f32 %v871, %v613
    %v875 = vmul.f32 %v871, %v614
    %880 = vrot.lane.b32.xlu0 %v872, 123
    %v881 = vpop.permute.xlu0 %880
    %882 = vrot.lane.b32.xlu0 %v873, 123
    %v883 = vpop.permute.xlu0 %882
    %884 = vrot.lane.b32.xlu0 %v874, 123
    %v885 = vpop.permute.xlu0 %884
    %886 = vrot.lane.b32.xlu0 %v875, 123
    %v887 = vpop.permute.xlu0 %886
    %v892 = vadd.f32 %v840, %v881
    %v893 = vadd.f32 %v841, %v883
    %v894 = vadd.f32 %v842, %v885
    %v895 = vadd.f32 %v843, %v887
    %s896 = sld [smem:[#allocation7 + $0x6]]
    %s897 = sld [smem:[#allocation7 + $0x37]]
    %v898 = vstv %s896
    %v899 = vmul.f32 %v898, %v604
    %v900 = vmul.f32 %v898, %v605
    %v901 = vmul.f32 %v898, %v607
    %v902 = vmul.f32 %v898, %v608
    %907 = vrot.lane.b32.xlu0 %v899, 122
    %v908 = vpop.permute.xlu0 %907
    %909 = vrot.lane.b32.xlu0 %v900, 122
    %v910 = vpop.permute.xlu0 %909
    %911 = vrot.lane.b32.xlu0 %v901, 122
    %v912 = vpop.permute.xlu0 %911
    %913 = vrot.lane.b32.xlu0 %v902, 122
    %v914 = vpop.permute.xlu0 %913
    %v919 = vadd.f32 %v867, %v908
    %v920 = vadd.f32 %v868, %v910
    %v921 = vadd.f32 %v869, %v912
    %v922 = vadd.f32 %v870, %v914
    %v923 = vstv %s897
    %v924 = vmul.f32 %v923, %v610
    %v925 = vmul.f32 %v923, %v611
    %v926 = vmul.f32 %v923, %v613
    %v927 = vmul.f32 %v923, %v614
    %932 = vrot.lane.b32.xlu0 %v924, 122
    %v933 = vpop.permute.xlu0 %932
    %934 = vrot.lane.b32.xlu0 %v925, 122
    %v935 = vpop.permute.xlu0 %934
    %936 = vrot.lane.b32.xlu0 %v926, 122
    %v937 = vpop.permute.xlu0 %936
    %938 = vrot.lane.b32.xlu0 %v927, 122
    %v939 = vpop.permute.xlu0 %938
    %v944 = vadd.f32 %v892, %v933
    %v945 = vadd.f32 %v893, %v935
    %v946 = vadd.f32 %v894, %v937
    %v947 = vadd.f32 %v895, %v939
    %s948 = sld [smem:[#allocation7 + $0x7]]
    %s949 = sld [smem:[#allocation7 + $0x38]]
    %v950 = vstv %s948
    %v951 = vmul.f32 %v950, %v604
    %v952 = vmul.f32 %v950, %v605
    %v953 = vmul.f32 %v950, %v606
    %v954 = vmul.f32 %v950, %v607
    %v955 = vmul.f32 %v950, %v608
    %v956 = vmul.f32 %v950, %v609
    %vm963 = vcmask 1046528
    %v964 = vrot.slane %v951, 1
    %v965 = vrot.slane %v952, 1
    %v966 = vsel %vm963, %v964, %v965
    %v967 = vrot.slane %v953, 1
    %v968 = vsel %vm963, %v965, %v967
    %v969 = vrot.slane %v954, 1
    %v970 = vrot.slane %v955, 1
    %v971 = vsel %vm963, %v969, %v970
    %v972 = vrot.slane %v956, 1
    %v973 = vsel %vm963, %v970, %v972
    %v978 = vadd.f32 %v919, %v966
    %v979 = vadd.f32 %v920, %v968
    %v980 = vadd.f32 %v921, %v971
    %v981 = vadd.f32 %v922, %v973
    %v982 = vstv %s949
    %v983 = vmul.f32 %v982, %v610
    %v984 = vmul.f32 %v982, %v611
    %v985 = vmul.f32 %v982, %v612
    %v986 = vmul.f32 %v982, %v613
    %v987 = vmul.f32 %v982, %v614
    %v988 = vmul.f32 %v982, %v615
    %v995 = vrot.slane %v983, 1
    %v996 = vrot.slane %v984, 1
    %v997 = vsel %vm963, %v995, %v996
    %v998 = vrot.slane %v985, 1
    %v999 = vsel %vm963, %v996, %v998
    %v1000 = vrot.slane %v986, 1
    %v1001 = vrot.slane %v987, 1
    %v1002 = vsel %vm963, %v1000, %v1001
    %v1003 = vrot.slane %v988, 1
    %v1004 = vsel %vm963, %v1001, %v1003
    %v1009 = vadd.f32 %v944, %v997
    %v1010 = vadd.f32 %v945, %v999
    %v1011 = vadd.f32 %v946, %v1002
    %v1012 = vadd.f32 %v947, %v1004
    %s1013 = sld [smem:[#allocation7 + $0x8]]
    %s1014 = sld [smem:[#allocation7 + $0x39]]
    %v1015 = vstv %s1013
    %v1016 = vmul.f32 %v1015, %v604
    %v1017 = vmul.f32 %v1015, %v605
    %v1018 = vmul.f32 %v1015, %v606
    %v1019 = vmul.f32 %v1015, %v607
    %v1020 = vmul.f32 %v1015, %v608
    %v1021 = vmul.f32 %v1015, %v609
    %v1028 = vrot.slane %v1016, 1
    %v1029 = vrot.slane %v1017, 1
    %v1030 = vsel %vm963, %v1028, %v1029
    %v1031 = vrot.slane %v1018, 1
    %v1032 = vsel %vm963, %v1029, %v1031
    %v1033 = vrot.slane %v1019, 1
    %v1034 = vrot.slane %v1020, 1
    %v1035 = vsel %vm963, %v1033, %v1034
    %v1036 = vrot.slane %v1021, 1
    %v1037 = vsel %vm963, %v1034, %v1036
    %1038 = vrot.lane.b32.xlu0 %v1030, 127
    %v1039 = vpop.permute.xlu0 %1038
    %1040 = vrot.lane.b32.xlu0 %v1032, 127
    %v1041 = vpop.permute.xlu0 %1040
    %1042 = vrot.lane.b32.xlu0 %v1035, 127
    %v1043 = vpop.permute.xlu0 %1042
    %1044 = vrot.lane.b32.xlu0 %v1037, 127
    %v1045 = vpop.permute.xlu0 %1044
    %v1050 = vadd.f32 %v978, %v1039
    %v1051 = vadd.f32 %v979, %v1041
    %v1052 = vadd.f32 %v980, %v1043
    %v1053 = vadd.f32 %v981, %v1045
    %v1054 = vstv %s1014
    %v1055 = vmul.f32 %v1054, %v610
    %v1056 = vmul.f32 %v1054, %v611
    %v1057 = vmul.f32 %v1054, %v612
    %v1058 = vmul.f32 %v1054, %v613
    %v1059 = vmul.f32 %v1054, %v614
    %v1060 = vmul.f32 %v1054, %v615
    %v1067 = vrot.slane %v1055, 1
    %v1068 = vrot.slane %v1056, 1
    %v1069 = vsel %vm963, %v1067, %v1068
    %v1070 = vrot.slane %v1057, 1
    %v1071 = vsel %vm963, %v1068, %v1070
    %v1072 = vrot.slane %v1058, 1
    %v1073 = vrot.slane %v1059, 1
    %v1074 = vsel %vm963, %v1072, %v1073
    %v1075 = vrot.slane %v1060, 1
    %v1076 = vsel %vm963, %v1073, %v1075
    %1077 = vrot.lane.b32.xlu0 %v1069, 127
    %v1078 = vpop.permute.xlu0 %1077
    %1079 = vrot.lane.b32.xlu0 %v1071, 127
    %v1080 = vpop.permute.xlu0 %1079
    %1081 = vrot.lane.b32.xlu0 %v1074, 127
    %v1082 = vpop.permute.xlu0 %1081
    %1083 = vrot.lane.b32.xlu0 %v1076, 127
    %v1084 = vpop.permute.xlu0 %1083
    %v1089 = vadd.f32 %v1009, %v1078
    %v1090 = vadd.f32 %v1010, %v1080
    %v1091 = vadd.f32 %v1011, %v1082
    %v1092 = vadd.f32 %v1012, %v1084
    %s1093 = sld [smem:[#allocation7 + $0x9]]
    %s1094 = sld [smem:[#allocation7 + $0x3a]]
    %v1095 = vstv %s1093
    %v1096 = vmul.f32 %v1095, %v604
    %v1097 = vmul.f32 %v1095, %v605
    %v1098 = vmul.f32 %v1095, %v606
    %v1099 = vmul.f32 %v1095, %v607
    %v1100 = vmul.f32 %v1095, %v608
    %v1101 = vmul.f32 %v1095, %v609
    %v1108 = vrot.slane %v1096, 1
    %v1109 = vrot.slane %v1097, 1
    %v1110 = vsel %vm963, %v1108, %v1109
    %v1111 = vrot.slane %v1098, 1
    %v1112 = vsel %vm963, %v1109, %v1111
    %v1113 = vrot.slane %v1099, 1
    %v1114 = vrot.slane %v1100, 1
    %v1115 = vsel %vm963, %v1113, %v1114
    %v1116 = vrot.slane %v1101, 1
    %v1117 = vsel %vm963, %v1114, %v1116
    %1118 = vrot.lane.b32.xlu0 %v1110, 126
    %v1119 = vpop.permute.xlu0 %1118
    %1120 = vrot.lane.b32.xlu0 %v1112, 126
    %v1121 = vpop.permute.xlu0 %1120
    %1122 = vrot.lane.b32.xlu0 %v1115, 126
    %v1123 = vpop.permute.xlu0 %1122
    %1124 = vrot.lane.b32.xlu0 %v1117, 126
    %v1125 = vpop.permute.xlu0 %1124
    %v1130 = vadd.f32 %v1050, %v1119
    %v1131 = vadd.f32 %v1051, %v1121
    %v1132 = vadd.f32 %v1052, %v1123
    %v1133 = vadd.f32 %v1053, %v1125
    %v1134 = vstv %s1094
    %v1135 = vmul.f32 %v1134, %v610
    %v1136 = vmul.f32 %v1134, %v611
    %v1137 = vmul.f32 %v1134, %v612
    %v1138 = vmul.f32 %v1134, %v613
    %v1139 = vmul.f32 %v1134, %v614
    %v1140 = vmul.f32 %v1134, %v615
    %v1147 = vrot.slane %v1135, 1
    %v1148 = vrot.slane %v1136, 1
    %v1149 = vsel %vm963, %v1147, %v1148
    %v1150 = vrot.slane %v1137, 1
    %v1151 = vsel %vm963, %v1148, %v1150
    %v1152 = vrot.slane %v1138, 1
    %v1153 = vrot.slane %v1139, 1
    %v1154 = vsel %vm963, %v1152, %v1153
    %v1155 = vrot.slane %v1140, 1
    %v1156 = vsel %vm963, %v1153, %v1155
    %1157 = vrot.lane.b32.xlu0 %v1149, 126
    %v1158 = vpop.permute.xlu0 %1157
    %1159 = vrot.lane.b32.xlu0 %v1151, 126
    %v1160 = vpop.permute.xlu0 %1159
    %1161 = vrot.lane.b32.xlu0 %v1154, 126
    %v1162 = vpop.permute.xlu0 %1161
    %1163 = vrot.lane.b32.xlu0 %v1156, 126
    %v1164 = vpop.permute.xlu0 %1163
    %v1169 = vadd.f32 %v1089, %v1158
    %v1170 = vadd.f32 %v1090, %v1160
    %v1171 = vadd.f32 %v1091, %v1162
    %v1172 = vadd.f32 %v1092, %v1164
    %s1173 = sld [smem:[#allocation7 + $0xa]]
    %s1174 = sld [smem:[#allocation7 + $0x3b]]
    %v1175 = vstv %s1173
    %v1176 = vmul.f32 %v1175, %v604
    %v1177 = vmul.f32 %v1175, %v605
    %v1178 = vmul.f32 %v1175, %v606
    %v1179 = vmul.f32 %v1175, %v607
    %v1180 = vmul.f32 %v1175, %v608
    %v1181 = vmul.f32 %v1175, %v609
    %v1188 = vrot.slane %v1176, 1
    %v1189 = vrot.slane %v1177, 1
    %v1190 = vsel %vm963, %v1188, %v1189
    %v1191 = vrot.slane %v1178, 1
    %v1192 = vsel %vm963, %v1189, %v1191
    %v1193 = vrot.slane %v1179, 1
    %v1194 = vrot.slane %v1180, 1
    %v1195 = vsel %vm963, %v1193, %v1194
    %v1196 = vrot.slane %v1181, 1
    %v1197 = vsel %vm963, %v1194, %v1196
    %1198 = vrot.lane.b32.xlu0 %v1190, 125
    %v1199 = vpop.permute.xlu0 %1198
    %1200 = vrot.lane.b32.xlu0 %v1192, 125
    %v1201 = vpop.permute.xlu0 %1200
    %1202 = vrot.lane.b32.xlu0 %v1195, 125
    %v1203 = vpop.permute.xlu0 %1202
    %1204 = vrot.lane.b32.xlu0 %v1197, 125
    %v1205 = vpop.permute.xlu0 %1204
    %v1210 = vadd.f32 %v1130, %v1199
    %v1211 = vadd.f32 %v1131, %v1201
    %v1212 = vadd.f32 %v1132, %v1203
    %v1213 = vadd.f32 %v1133, %v1205
    %v1214 = vstv %s1174
    %v1215 = vmul.f32 %v1214, %v610
    %v1216 = vmul.f32 %v1214, %v611
    %v1217 = vmul.f32 %v1214, %v612
    %v1218 = vmul.f32 %v1214, %v613
    %v1219 = vmul.f32 %v1214, %v614
    %v1220 = vmul.f32 %v1214, %v615
    %v1227 = vrot.slane %v1215, 1
    %v1228 = vrot.slane %v1216, 1
    %v1229 = vsel %vm963, %v1227, %v1228
    %v1230 = vrot.slane %v1217, 1
    %v1231 = vsel %vm963, %v1228, %v1230
    %v1232 = vrot.slane %v1218, 1
    %v1233 = vrot.slane %v1219, 1
    %v1234 = vsel %vm963, %v1232, %v1233
    %v1235 = vrot.slane %v1220, 1
    %v1236 = vsel %vm963, %v1233, %v1235
    %1237 = vrot.lane.b32.xlu0 %v1229, 125
    %v1238 = vpop.permute.xlu0 %1237
    %1239 = vrot.lane.b32.xlu0 %v1231, 125
    %v1240 = vpop.permute.xlu0 %1239
    %1241 = vrot.lane.b32.xlu0 %v1234, 125
    %v1242 = vpop.permute.xlu0 %1241
    %1243 = vrot.lane.b32.xlu0 %v1236, 125
    %v1244 = vpop.permute.xlu0 %1243
    %v1249 = vadd.f32 %v1169, %v1238
    %v1250 = vadd.f32 %v1170, %v1240
    %v1251 = vadd.f32 %v1171, %v1242
    %v1252 = vadd.f32 %v1172, %v1244
    %s1253 = sld [smem:[#allocation7 + $0xb]]
    %s1254 = sld [smem:[#allocation7 + $0x3c]]
    %v1255 = vstv %s1253
    %v1256 = vmul.f32 %v1255, %v604
    %v1257 = vmul.f32 %v1255, %v605
    %v1258 = vmul.f32 %v1255, %v606
    %v1259 = vmul.f32 %v1255, %v607
    %v1260 = vmul.f32 %v1255, %v608
    %v1261 = vmul.f32 %v1255, %v609
    %v1268 = vrot.slane %v1256, 1
    %v1269 = vrot.slane %v1257, 1
    %v1270 = vsel %vm963, %v1268, %v1269
    %v1271 = vrot.slane %v1258, 1
    %v1272 = vsel %vm963, %v1269, %v1271
    %v1273 = vrot.slane %v1259, 1
    %v1274 = vrot.slane %v1260, 1
    %v1275 = vsel %vm963, %v1273, %v1274
    %v1276 = vrot.slane %v1261, 1
    %v1277 = vsel %vm963, %v1274, %v1276
    %1278 = vrot.lane.b32.xlu0 %v1270, 124
    %v1279 = vpop.permute.xlu0 %1278
    %1280 = vrot.lane.b32.xlu0 %v1272, 124
    %v1281 = vpop.permute.xlu0 %1280
    %1282 = vrot.lane.b32.xlu0 %v1275, 124
    %v1283 = vpop.permute.xlu0 %1282
    %1284 = vrot.lane.b32.xlu0 %v1277, 124
    %v1285 = vpop.permute.xlu0 %1284
    %v1290 = vadd.f32 %v1210, %v1279
    %v1291 = vadd.f32 %v1211, %v1281
    %v1292 = vadd.f32 %v1212, %v1283
    %v1293 = vadd.f32 %v1213, %v1285
    %v1294 = vstv %s1254
    %v1295 = vmul.f32 %v1294, %v610
    %v1296 = vmul.f32 %v1294, %v611
    %v1297 = vmul.f32 %v1294, %v612
    %v1298 = vmul.f32 %v1294, %v613
    %v1299 = vmul.f32 %v1294, %v614
    %v1300 = vmul.f32 %v1294, %v615
    %v1307 = vrot.slane %v1295, 1
    %v1308 = vrot.slane %v1296, 1
    %v1309 = vsel %vm963, %v1307, %v1308
    %v1310 = vrot.slane %v1297, 1
    %v1311 = vsel %vm963, %v1308, %v1310
    %v1312 = vrot.slane %v1298, 1
    %v1313 = vrot.slane %v1299, 1
    %v1314 = vsel %vm963, %v1312, %v1313
    %v1315 = vrot.slane %v1300, 1
    %v1316 = vsel %vm963, %v1313, %v1315
    %1317 = vrot.lane.b32.xlu0 %v1309, 124
    %v1318 = vpop.permute.xlu0 %1317
    %1319 = vrot.lane.b32.xlu0 %v1311, 124
    %v1320 = vpop.permute.xlu0 %1319
    %1321 = vrot.lane.b32.xlu0 %v1314, 124
    %v1322 = vpop.permute.xlu0 %1321
    %1323 = vrot.lane.b32.xlu0 %v1316, 124
    %v1324 = vpop.permute.xlu0 %1323
    %v1329 = vadd.f32 %v1249, %v1318
    %v1330 = vadd.f32 %v1250, %v1320
    %v1331 = vadd.f32 %v1251, %v1322
    %v1332 = vadd.f32 %v1252, %v1324
    %s1333 = sld [smem:[#allocation7 + $0xc]]
    %s1334 = sld [smem:[#allocation7 + $0x3d]]
    %v1335 = vstv %s1333
    %v1336 = vmul.f32 %v1335, %v604
    %v1337 = vmul.f32 %v1335, %v605
    %v1338 = vmul.f32 %v1335, %v606
    %v1339 = vmul.f32 %v1335, %v607
    %v1340 = vmul.f32 %v1335, %v608
    %v1341 = vmul.f32 %v1335, %v609
    %v1348 = vrot.slane %v1336, 1
    %v1349 = vrot.slane %v1337, 1
    %v1350 = vsel %vm963, %v1348, %v1349
    %v1351 = vrot.slane %v1338, 1
    %v1352 = vsel %vm963, %v1349, %v1351
    %v1353 = vrot.slane %v1339, 1
    %v1354 = vrot.slane %v1340, 1
    %v1355 = vsel %vm963, %v1353, %v1354
    %v1356 = vrot.slane %v1341, 1
    %v1357 = vsel %vm963, %v1354, %v1356
    %1358 = vrot.lane.b32.xlu0 %v1350, 123
    %v1359 = vpop.permute.xlu0 %1358
    %1360 = vrot.lane.b32.xlu0 %v1352, 123
    %v1361 = vpop.permute.xlu0 %1360
    %1362 = vrot.lane.b32.xlu0 %v1355, 123
    %v1363 = vpop.permute.xlu0 %1362
    %1364 = vrot.lane.b32.xlu0 %v1357, 123
    %v1365 = vpop.permute.xlu0 %1364
    %v1370 = vadd.f32 %v1290, %v1359
    %v1371 = vadd.f32 %v1291, %v1361
    %v1372 = vadd.f32 %v1292, %v1363
    %v1373 = vadd.f32 %v1293, %v1365
    %v1374 = vstv %s1334
    %v1375 = vmul.f32 %v1374, %v610
    %v1376 = vmul.f32 %v1374, %v611
    %v1377 = vmul.f32 %v1374, %v612
    %v1378 = vmul.f32 %v1374, %v613
    %v1379 = vmul.f32 %v1374, %v614
    %v1380 = vmul.f32 %v1374, %v615
    %v1387 = vrot.slane %v1375, 1
    %v1388 = vrot.slane %v1376, 1
    %v1389 = vsel %vm963, %v1387, %v1388
    %v1390 = vrot.slane %v1377, 1
    %v1391 = vsel %vm963, %v1388, %v1390
    %v1392 = vrot.slane %v1378, 1
    %v1393 = vrot.slane %v1379, 1
    %v1394 = vsel %vm963, %v1392, %v1393
    %v1395 = vrot.slane %v1380, 1
    %v1396 = vsel %vm963, %v1393, %v1395
    %1397 = vrot.lane.b32.xlu0 %v1389, 123
    %v1398 = vpop.permute.xlu0 %1397
    %1399 = vrot.lane.b32.xlu0 %v1391, 123
    %v1400 = vpop.permute.xlu0 %1399
    %1401 = vrot.lane.b32.xlu0 %v1394, 123
    %v1402 = vpop.permute.xlu0 %1401
    %1403 = vrot.lane.b32.xlu0 %v1396, 123
    %v1404 = vpop.permute.xlu0 %1403
    %v1409 = vadd.f32 %v1329, %v1398
    %v1410 = vadd.f32 %v1330, %v1400
    %v1411 = vadd.f32 %v1331, %v1402
    %v1412 = vadd.f32 %v1332, %v1404
    %s1413 = sld [smem:[#allocation7 + $0xd]]
    %s1414 = sld [smem:[#allocation7 + $0x3e]]
    %v1415 = vstv %s1413
    %v1416 = vmul.f32 %v1415, %v604
    %v1417 = vmul.f32 %v1415, %v605
    %v1418 = vmul.f32 %v1415, %v606
    %v1419 = vmul.f32 %v1415, %v607
    %v1420 = vmul.f32 %v1415, %v608
    %v1421 = vmul.f32 %v1415, %v609
    %v1428 = vrot.slane %v1416, 1
    %v1429 = vrot.slane %v1417, 1
    %v1430 = vsel %vm963, %v1428, %v1429
    %v1431 = vrot.slane %v1418, 1
    %v1432 = vsel %vm963, %v1429, %v1431
    %v1433 = vrot.slane %v1419, 1
    %v1434 = vrot.slane %v1420, 1
    %v1435 = vsel %vm963, %v1433, %v1434
    %v1436 = vrot.slane %v1421, 1
    %v1437 = vsel %vm963, %v1434, %v1436
    %1438 = vrot.lane.b32.xlu0 %v1430, 122
    %v1439 = vpop.permute.xlu0 %1438
    %1440 = vrot.lane.b32.xlu0 %v1432, 122
    %v1441 = vpop.permute.xlu0 %1440
    %1442 = vrot.lane.b32.xlu0 %v1435, 122
    %v1443 = vpop.permute.xlu0 %1442
    %1444 = vrot.lane.b32.xlu0 %v1437, 122
    %v1445 = vpop.permute.xlu0 %1444
    %v1450 = vadd.f32 %v1370, %v1439
    %v1451 = vadd.f32 %v1371, %v1441
    %v1452 = vadd.f32 %v1372, %v1443
    %v1453 = vadd.f32 %v1373, %v1445
    %v1454 = vstv %s1414
    %v1455 = vmul.f32 %v1454, %v610
    %v1456 = vmul.f32 %v1454, %v611
    %v1457 = vmul.f32 %v1454, %v612
    %v1458 = vmul.f32 %v1454, %v613
    %v1459 = vmul.f32 %v1454, %v614
    %v1460 = vmul.f32 %v1454, %v615
    %v1467 = vrot.slane %v1455, 1
    %v1468 = vrot.slane %v1456, 1
    %v1469 = vsel %vm963, %v1467, %v1468
    %v1470 = vrot.slane %v1457, 1
    %v1471 = vsel %vm963, %v1468, %v1470
    %v1472 = vrot.slane %v1458, 1
    %v1473 = vrot.slane %v1459, 1
    %v1474 = vsel %vm963, %v1472, %v1473
    %v1475 = vrot.slane %v1460, 1
    %v1476 = vsel %vm963, %v1473, %v1475
    %1477 = vrot.lane.b32.xlu0 %v1469, 122
    %v1478 = vpop.permute.xlu0 %1477
    %1479 = vrot.lane.b32.xlu0 %v1471, 122
    %v1480 = vpop.permute.xlu0 %1479
    %1481 = vrot.lane.b32.xlu0 %v1474, 122
    %v1482 = vpop.permute.xlu0 %1481
    %1483 = vrot.lane.b32.xlu0 %v1476, 122
    %v1484 = vpop.permute.xlu0 %1483
    %v1489 = vadd.f32 %v1409, %v1478
    %v1490 = vadd.f32 %v1410, %v1480
    %v1491 = vadd.f32 %v1411, %v1482
    %v1492 = vadd.f32 %v1412, %v1484
    %s1493 = sld [smem:[#allocation7 + $0xe]]
    %s1494 = sld [smem:[#allocation7 + $0x3f]]
    %v1495 = vstv %s1493
    %v1496 = vmul.f32 %v1495, %v604
    %v1497 = vmul.f32 %v1495, %v605
    %v1498 = vmul.f32 %v1495, %v606
    %v1499 = vmul.f32 %v1495, %v607
    %v1500 = vmul.f32 %v1495, %v608
    %v1501 = vmul.f32 %v1495, %v609
    %vm1508 = vcmask 1045504
    %v1509 = vrot.slane %v1496, 2
    %v1510 = vrot.slane %v1497, 2
    %v1511 = vsel %vm1508, %v1509, %v1510
    %v1512 = vrot.slane %v1498, 2
    %v1513 = vsel %vm1508, %v1510, %v1512
    %v1514 = vrot.slane %v1499, 2
    %v1515 = vrot.slane %v1500, 2
    %v1516 = vsel %vm1508, %v1514, %v1515
    %v1517 = vrot.slane %v1501, 2
    %v1518 = vsel %vm1508, %v1515, %v1517
    %v1523 = vadd.f32 %v1450, %v1511
    %v1524 = vadd.f32 %v1451, %v1513
    %v1525 = vadd.f32 %v1452, %v1516
    %v1526 = vadd.f32 %v1453, %v1518
    %v1527 = vstv %s1494
    %v1528 = vmul.f32 %v1527, %v610
    %v1529 = vmul.f32 %v1527, %v611
    %v1530 = vmul.f32 %v1527, %v612
    %v1531 = vmul.f32 %v1527, %v613
    %v1532 = vmul.f32 %v1527, %v614
    %v1533 = vmul.f32 %v1527, %v615
    %v1540 = vrot.slane %v1528, 2
    %v1541 = vrot.slane %v1529, 2
    %v1542 = vsel %vm1508, %v1540, %v1541
    %v1543 = vrot.slane %v1530, 2
    %v1544 = vsel %vm1508, %v1541, %v1543
    %v1545 = vrot.slane %v1531, 2
    %v1546 = vrot.slane %v1532, 2
    %v1547 = vsel %vm1508, %v1545, %v1546
    %v1548 = vrot.slane %v1533, 2
    %v1549 = vsel %vm1508, %v1546, %v1548
    %v1554 = vadd.f32 %v1489, %v1542
    %v1555 = vadd.f32 %v1490, %v1544
    %v1556 = vadd.f32 %v1491, %v1547
    %v1557 = vadd.f32 %v1492, %v1549
    %s1558 = sld [smem:[#allocation7 + $0xf]]
    %s1559 = sld [smem:[#allocation7 + $0x40]]
    %v1560 = vstv %s1558
    %v1561 = vmul.f32 %v1560, %v604
    %v1562 = vmul.f32 %v1560, %v605
    %v1563 = vmul.f32 %v1560, %v606
    %v1564 = vmul.f32 %v1560, %v607
    %v1565 = vmul.f32 %v1560, %v608
    %v1566 = vmul.f32 %v1560, %v609
    %v1573 = vrot.slane %v1561, 2
    %v1574 = vrot.slane %v1562, 2
    %v1575 = vsel %vm1508, %v1573, %v1574
    %v1576 = vrot.slane %v1563, 2
    %v1577 = vsel %vm1508, %v1574, %v1576
    %v1578 = vrot.slane %v1564, 2
    %v1579 = vrot.slane %v1565, 2
    %v1580 = vsel %vm1508, %v1578, %v1579
    %v1581 = vrot.slane %v1566, 2
    %v1582 = vsel %vm1508, %v1579, %v1581
    %1583 = vrot.lane.b32.xlu0 %v1575, 127
    %v1584 = vpop.permute.xlu0 %1583
    %1585 = vrot.lane.b32.xlu0 %v1577, 127
    %v1586 = vpop.permute.xlu0 %1585
    %1587 = vrot.lane.b32.xlu0 %v1580, 127
    %v1588 = vpop.permute.xlu0 %1587
    %1589 = vrot.lane.b32.xlu0 %v1582, 127
    %v1590 = vpop.permute.xlu0 %1589
    %v1595 = vadd.f32 %v1523, %v1584
    %v1596 = vadd.f32 %v1524, %v1586
    %v1597 = vadd.f32 %v1525, %v1588
    %v1598 = vadd.f32 %v1526, %v1590
    %v1599 = vstv %s1559
    %v1600 = vmul.f32 %v1599, %v610
    %v1601 = vmul.f32 %v1599, %v611
    %v1602 = vmul.f32 %v1599, %v612
    %v1603 = vmul.f32 %v1599, %v613
    %v1604 = vmul.f32 %v1599, %v614
    %v1605 = vmul.f32 %v1599, %v615
    %v1612 = vrot.slane %v1600, 2
    %v1613 = vrot.slane %v1601, 2
    %v1614 = vsel %vm1508, %v1612, %v1613
    %v1615 = vrot.slane %v1602, 2
    %v1616 = vsel %vm1508, %v1613, %v1615
    %v1617 = vrot.slane %v1603, 2
    %v1618 = vrot.slane %v1604, 2
    %v1619 = vsel %vm1508, %v1617, %v1618
    %v1620 = vrot.slane %v1605, 2
    %v1621 = vsel %vm1508, %v1618, %v1620
    %1622 = vrot.lane.b32.xlu0 %v1614, 127
    %v1623 = vpop.permute.xlu0 %1622
    %1624 = vrot.lane.b32.xlu0 %v1616, 127
    %v1625 = vpop.permute.xlu0 %1624
    %1626 = vrot.lane.b32.xlu0 %v1619, 127
    %v1627 = vpop.permute.xlu0 %1626
    %1628 = vrot.lane.b32.xlu0 %v1621, 127
    %v1629 = vpop.permute.xlu0 %1628
    %v1634 = vadd.f32 %v1554, %v1623
    %v1635 = vadd.f32 %v1555, %v1625
    %v1636 = vadd.f32 %v1556, %v1627
    %v1637 = vadd.f32 %v1557, %v1629
    %s1638 = sld [smem:[#allocation7 + $0x10]]
    %s1639 = sld [smem:[#allocation7 + $0x41]]
    %v1640 = vstv %s1638
    %v1641 = vmul.f32 %v1640, %v604
    %v1642 = vmul.f32 %v1640, %v605
    %v1643 = vmul.f32 %v1640, %v606
    %v1644 = vmul.f32 %v1640, %v607
    %v1645 = vmul.f32 %v1640, %v608
    %v1646 = vmul.f32 %v1640, %v609
    %v1653 = vrot.slane %v1641, 2
    %v1654 = vrot.slane %v1642, 2
    %v1655 = vsel %vm1508, %v1653, %v1654
    %v1656 = vrot.slane %v1643, 2
    %v1657 = vsel %vm1508, %v1654, %v1656
    %v1658 = vrot.slane %v1644, 2
    %v1659 = vrot.slane %v1645, 2
    %v1660 = vsel %vm1508, %v1658, %v1659
    %v1661 = vrot.slane %v1646, 2
    %v1662 = vsel %vm1508, %v1659, %v1661
    %1663 = vrot.lane.b32.xlu0 %v1655, 126
    %v1664 = vpop.permute.xlu0 %1663
    %1665 = vrot.lane.b32.xlu0 %v1657, 126
    %v1666 = vpop.permute.xlu0 %1665
    %1667 = vrot.lane.b32.xlu0 %v1660, 126
    %v1668 = vpop.permute.xlu0 %1667
    %1669 = vrot.lane.b32.xlu0 %v1662, 126
    %v1670 = vpop.permute.xlu0 %1669
    %v1675 = vadd.f32 %v1595, %v1664
    %v1676 = vadd.f32 %v1596, %v1666
    %v1677 = vadd.f32 %v1597, %v1668
    %v1678 = vadd.f32 %v1598, %v1670
    %v1679 = vstv %s1639
    %v1680 = vmul.f32 %v1679, %v610
    %v1681 = vmul.f32 %v1679, %v611
    %v1682 = vmul.f32 %v1679, %v612
    %v1683 = vmul.f32 %v1679, %v613
    %v1684 = vmul.f32 %v1679, %v614
    %v1685 = vmul.f32 %v1679, %v615
    %v1692 = vrot.slane %v1680, 2
    %v1693 = vrot.slane %v1681, 2
    %v1694 = vsel %vm1508, %v1692, %v1693
    %v1695 = vrot.slane %v1682, 2
    %v1696 = vsel %vm1508, %v1693, %v1695
    %v1697 = vrot.slane %v1683, 2
    %v1698 = vrot.slane %v1684, 2
    %v1699 = vsel %vm1508, %v1697, %v1698
    %v1700 = vrot.slane %v1685, 2
    %v1701 = vsel %vm1508, %v1698, %v1700
    %1702 = vrot.lane.b32.xlu0 %v1694, 126
    %v1703 = vpop.permute.xlu0 %1702
    %1704 = vrot.lane.b32.xlu0 %v1696, 126
    %v1705 = vpop.permute.xlu0 %1704
    %1706 = vrot.lane.b32.xlu0 %v1699, 126
    %v1707 = vpop.permute.xlu0 %1706
    %1708 = vrot.lane.b32.xlu0 %v1701, 126
    %v1709 = vpop.permute.xlu0 %1708
    %v1714 = vadd.f32 %v1634, %v1703
    %v1715 = vadd.f32 %v1635, %v1705
    %v1716 = vadd.f32 %v1636, %v1707
    %v1717 = vadd.f32 %v1637, %v1709
    %s1718 = sld [smem:[#allocation7 + $0x11]]
    %s1719 = sld [smem:[#allocation7 + $0x42]]
    %v1720 = vstv %s1718
    %v1721 = vmul.f32 %v1720, %v604
    %v1722 = vmul.f32 %v1720, %v605
    %v1723 = vmul.f32 %v1720, %v606
    %v1724 = vmul.f32 %v1720, %v607
    %v1725 = vmul.f32 %v1720, %v608
    %v1726 = vmul.f32 %v1720, %v609
    %v1733 = vrot.slane %v1721, 2
    %v1734 = vrot.slane %v1722, 2
    %v1735 = vsel %vm1508, %v1733, %v1734
    %v1736 = vrot.slane %v1723, 2
    %v1737 = vsel %vm1508, %v1734, %v1736
    %v1738 = vrot.slane %v1724, 2
    %v1739 = vrot.slane %v1725, 2
    %v1740 = vsel %vm1508, %v1738, %v1739
    %v1741 = vrot.slane %v1726, 2
    %v1742 = vsel %vm1508, %v1739, %v1741
    %1743 = vrot.lane.b32.xlu0 %v1735, 125
    %v1744 = vpop.permute.xlu0 %1743
    %1745 = vrot.lane.b32.xlu0 %v1737, 125
    %v1746 = vpop.permute.xlu0 %1745
    %1747 = vrot.lane.b32.xlu0 %v1740, 125
    %v1748 = vpop.permute.xlu0 %1747
    %1749 = vrot.lane.b32.xlu0 %v1742, 125
    %v1750 = vpop.permute.xlu0 %1749
    %v1755 = vadd.f32 %v1675, %v1744
    %v1756 = vadd.f32 %v1676, %v1746
    %v1757 = vadd.f32 %v1677, %v1748
    %v1758 = vadd.f32 %v1678, %v1750
    %v1759 = vstv %s1719
    %v1760 = vmul.f32 %v1759, %v610
    %v1761 = vmul.f32 %v1759, %v611
    %v1762 = vmul.f32 %v1759, %v612
    %v1763 = vmul.f32 %v1759, %v613
    %v1764 = vmul.f32 %v1759, %v614
    %v1765 = vmul.f32 %v1759, %v615
    %v1772 = vrot.slane %v1760, 2
    %v1773 = vrot.slane %v1761, 2
    %v1774 = vsel %vm1508, %v1772, %v1773
    %v1775 = vrot.slane %v1762, 2
    %v1776 = vsel %vm1508, %v1773, %v1775
    %v1777 = vrot.slane %v1763, 2
    %v1778 = vrot.slane %v1764, 2
    %v1779 = vsel %vm1508, %v1777, %v1778
    %v1780 = vrot.slane %v1765, 2
    %v1781 = vsel %vm1508, %v1778, %v1780
    %1782 = vrot.lane.b32.xlu0 %v1774, 125
    %v1783 = vpop.permute.xlu0 %1782
    %1784 = vrot.lane.b32.xlu0 %v1776, 125
    %v1785 = vpop.permute.xlu0 %1784
    %1786 = vrot.lane.b32.xlu0 %v1779, 125
    %v1787 = vpop.permute.xlu0 %1786
    %1788 = vrot.lane.b32.xlu0 %v1781, 125
    %v1789 = vpop.permute.xlu0 %1788
    %v1794 = vadd.f32 %v1714, %v1783
    %v1795 = vadd.f32 %v1715, %v1785
    %v1796 = vadd.f32 %v1716, %v1787
    %v1797 = vadd.f32 %v1717, %v1789
    %s1798 = sld [smem:[#allocation7 + $0x12]]
    %s1799 = sld [smem:[#allocation7 + $0x43]]
    %v1800 = vstv %s1798
    %v1801 = vmul.f32 %v1800, %v604
    %v1802 = vmul.f32 %v1800, %v605
    %v1803 = vmul.f32 %v1800, %v606
    %v1804 = vmul.f32 %v1800, %v607
    %v1805 = vmul.f32 %v1800, %v608
    %v1806 = vmul.f32 %v1800, %v609
    %v1813 = vrot.slane %v1801, 2
    %v1814 = vrot.slane %v1802, 2
    %v1815 = vsel %vm1508, %v1813, %v1814
    %v1816 = vrot.slane %v1803, 2
    %v1817 = vsel %vm1508, %v1814, %v1816
    %v1818 = vrot.slane %v1804, 2
    %v1819 = vrot.slane %v1805, 2
    %v1820 = vsel %vm1508, %v1818, %v1819
    %v1821 = vrot.slane %v1806, 2
    %v1822 = vsel %vm1508, %v1819, %v1821
    %1823 = vrot.lane.b32.xlu0 %v1815, 124
    %v1824 = vpop.permute.xlu0 %1823
    %1825 = vrot.lane.b32.xlu0 %v1817, 124
    %v1826 = vpop.permute.xlu0 %1825
    %1827 = vrot.lane.b32.xlu0 %v1820, 124
    %v1828 = vpop.permute.xlu0 %1827
    %1829 = vrot.lane.b32.xlu0 %v1822, 124
    %v1830 = vpop.permute.xlu0 %1829
    %v1835 = vadd.f32 %v1755, %v1824
    %v1836 = vadd.f32 %v1756, %v1826
    %v1837 = vadd.f32 %v1757, %v1828
    %v1838 = vadd.f32 %v1758, %v1830
    %v1839 = vstv %s1799
    %v1840 = vmul.f32 %v1839, %v610
    %v1841 = vmul.f32 %v1839, %v611
    %v1842 = vmul.f32 %v1839, %v612
    %v1843 = vmul.f32 %v1839, %v613
    %v1844 = vmul.f32 %v1839, %v614
    %v1845 = vmul.f32 %v1839, %v615
    %v1852 = vrot.slane %v1840, 2
    %v1853 = vrot.slane %v1841, 2
    %v1854 = vsel %vm1508, %v1852, %v1853
    %v1855 = vrot.slane %v1842, 2
    %v1856 = vsel %vm1508, %v1853, %v1855
    %v1857 = vrot.slane %v1843, 2
    %v1858 = vrot.slane %v1844, 2
    %v1859 = vsel %vm1508, %v1857, %v1858
    %v1860 = vrot.slane %v1845, 2
    %v1861 = vsel %vm1508, %v1858, %v1860
    %1862 = vrot.lane.b32.xlu0 %v1854, 124
    %v1863 = vpop.permute.xlu0 %1862
    %1864 = vrot.lane.b32.xlu0 %v1856, 124
    %v1865 = vpop.permute.xlu0 %1864
    %1866 = vrot.lane.b32.xlu0 %v1859, 124
    %v1867 = vpop.permute.xlu0 %1866
    %1868 = vrot.lane.b32.xlu0 %v1861, 124
    %v1869 = vpop.permute.xlu0 %1868
    %v1874 = vadd.f32 %v1794, %v1863
    %v1875 = vadd.f32 %v1795, %v1865
    %v1876 = vadd.f32 %v1796, %v1867
    %v1877 = vadd.f32 %v1797, %v1869
    %s1878 = sld [smem:[#allocation7 + $0x13]]
    %s1879 = sld [smem:[#allocation7 + $0x44]]
    %v1880 = vstv %s1878
    %v1881 = vmul.f32 %v1880, %v604
    %v1882 = vmul.f32 %v1880, %v605
    %v1883 = vmul.f32 %v1880, %v606
    %v1884 = vmul.f32 %v1880, %v607
    %v1885 = vmul.f32 %v1880, %v608
    %v1886 = vmul.f32 %v1880, %v609
    %v1893 = vrot.slane %v1881, 2
    %v1894 = vrot.slane %v1882, 2
    %v1895 = vsel %vm1508, %v1893, %v1894
    %v1896 = vrot.slane %v1883, 2
    %v1897 = vsel %vm1508, %v1894, %v1896
    %v1898 = vrot.slane %v1884, 2
    %v1899 = vrot.slane %v1885, 2
    %v1900 = vsel %vm1508, %v1898, %v1899
    %v1901 = vrot.slane %v1886, 2
    %v1902 = vsel %vm1508, %v1899, %v1901
    %1903 = vrot.lane.b32.xlu0 %v1895, 123
    %v1904 = vpop.permute.xlu0 %1903
    %1905 = vrot.lane.b32.xlu0 %v1897, 123
    %v1906 = vpop.permute.xlu0 %1905
    %1907 = vrot.lane.b32.xlu0 %v1900, 123
    %v1908 = vpop.permute.xlu0 %1907
    %1909 = vrot.lane.b32.xlu0 %v1902, 123
    %v1910 = vpop.permute.xlu0 %1909
    %v1915 = vadd.f32 %v1835, %v1904
    %v1916 = vadd.f32 %v1836, %v1906
    %v1917 = vadd.f32 %v1837, %v1908
    %v1918 = vadd.f32 %v1838, %v1910
    %v1919 = vstv %s1879
    %v1920 = vmul.f32 %v1919, %v610
    %v1921 = vmul.f32 %v1919, %v611
    %v1922 = vmul.f32 %v1919, %v612
    %v1923 = vmul.f32 %v1919, %v613
    %v1924 = vmul.f32 %v1919, %v614
    %v1925 = vmul.f32 %v1919, %v615
    %v1932 = vrot.slane %v1920, 2
    %v1933 = vrot.slane %v1921, 2
    %v1934 = vsel %vm1508, %v1932, %v1933
    %v1935 = vrot.slane %v1922, 2
    %v1936 = vsel %vm1508, %v1933, %v1935
    %v1937 = vrot.slane %v1923, 2
    %v1938 = vrot.slane %v1924, 2
    %v1939 = vsel %vm1508, %v1937, %v1938
    %v1940 = vrot.slane %v1925, 2
    %v1941 = vsel %vm1508, %v1938, %v1940
    %1942 = vrot.lane.b32.xlu0 %v1934, 123
    %v1943 = vpop.permute.xlu0 %1942
    %1944 = vrot.lane.b32.xlu0 %v1936, 123
    %v1945 = vpop.permute.xlu0 %1944
    %1946 = vrot.lane.b32.xlu0 %v1939, 123
    %v1947 = vpop.permute.xlu0 %1946
    %1948 = vrot.lane.b32.xlu0 %v1941, 123
    %v1949 = vpop.permute.xlu0 %1948
    %v1954 = vadd.f32 %v1874, %v1943
    %v1955 = vadd.f32 %v1875, %v1945
    %v1956 = vadd.f32 %v1876, %v1947
    %v1957 = vadd.f32 %v1877, %v1949
    %s1958 = sld [smem:[#allocation7 + $0x14]]
    %s1959 = sld [smem:[#allocation7 + $0x45]]
    %v1960 = vstv %s1958
    %v1961 = vmul.f32 %v1960, %v604
    %v1962 = vmul.f32 %v1960, %v605
    %v1963 = vmul.f32 %v1960, %v606
    %v1964 = vmul.f32 %v1960, %v607
    %v1965 = vmul.f32 %v1960, %v608
    %v1966 = vmul.f32 %v1960, %v609
    %v1973 = vrot.slane %v1961, 2
    %v1974 = vrot.slane %v1962, 2
    %v1975 = vsel %vm1508, %v1973, %v1974
    %v1976 = vrot.slane %v1963, 2
    %v1977 = vsel %vm1508, %v1974, %v1976
    %v1978 = vrot.slane %v1964, 2
    %v1979 = vrot.slane %v1965, 2
    %v1980 = vsel %vm1508, %v1978, %v1979
    %v1981 = vrot.slane %v1966, 2
    %v1982 = vsel %vm1508, %v1979, %v1981
    %1983 = vrot.lane.b32.xlu0 %v1975, 122
    %v1984 = vpop.permute.xlu0 %1983
    %1985 = vrot.lane.b32.xlu0 %v1977, 122
    %v1986 = vpop.permute.xlu0 %1985
    %1987 = vrot.lane.b32.xlu0 %v1980, 122
    %v1988 = vpop.permute.xlu0 %1987
    %1989 = vrot.lane.b32.xlu0 %v1982, 122
    %v1990 = vpop.permute.xlu0 %1989
    %v1995 = vadd.f32 %v1915, %v1984
    %v1996 = vadd.f32 %v1916, %v1986
    %v1997 = vadd.f32 %v1917, %v1988
    %v1998 = vadd.f32 %v1918, %v1990
    %v1999 = vstv %s1959
    %v2000 = vmul.f32 %v1999, %v610
    %v2001 = vmul.f32 %v1999, %v611
    %v2002 = vmul.f32 %v1999, %v612
    %v2003 = vmul.f32 %v1999, %v613
    %v2004 = vmul.f32 %v1999, %v614
    %v2005 = vmul.f32 %v1999, %v615
    %v2012 = vrot.slane %v2000, 2
    %v2013 = vrot.slane %v2001, 2
    %v2014 = vsel %vm1508, %v2012, %v2013
    %v2015 = vrot.slane %v2002, 2
    %v2016 = vsel %vm1508, %v2013, %v2015
    %v2017 = vrot.slane %v2003, 2
    %v2018 = vrot.slane %v2004, 2
    %v2019 = vsel %vm1508, %v2017, %v2018
    %v2020 = vrot.slane %v2005, 2
    %v2021 = vsel %vm1508, %v2018, %v2020
    %2022 = vrot.lane.b32.xlu0 %v2014, 122
    %v2023 = vpop.permute.xlu0 %2022
    %2024 = vrot.lane.b32.xlu0 %v2016, 122
    %v2025 = vpop.permute.xlu0 %2024
    %2026 = vrot.lane.b32.xlu0 %v2019, 122
    %v2027 = vpop.permute.xlu0 %2026
    %2028 = vrot.lane.b32.xlu0 %v2021, 122
    %v2029 = vpop.permute.xlu0 %2028
    %v2034 = vadd.f32 %v1954, %v2023
    %v2035 = vadd.f32 %v1955, %v2025
    %v2036 = vadd.f32 %v1956, %v2027
    %v2037 = vadd.f32 %v1957, %v2029
    %s2038 = sld [smem:[#allocation7 + $0x15]]
    %s2039 = sld [smem:[#allocation7 + $0x46]]
    %v2040 = vstv %s2038
    %v2041 = vmul.f32 %v2040, %v604
    %v2042 = vmul.f32 %v2040, %v605
    %v2043 = vmul.f32 %v2040, %v606
    %v2044 = vmul.f32 %v2040, %v607
    %v2045 = vmul.f32 %v2040, %v608
    %v2046 = vmul.f32 %v2040, %v609
    %vm2053 = vcmask 1044480
    %v2054 = vrot.slane %v2041, 3
    %v2055 = vrot.slane %v2042, 3
    %v2056 = vsel %vm2053, %v2054, %v2055
    %v2057 = vrot.slane %v2043, 3
    %v2058 = vsel %vm2053, %v2055, %v2057
    %v2059 = vrot.slane %v2044, 3
    %v2060 = vrot.slane %v2045, 3
    %v2061 = vsel %vm2053, %v2059, %v2060
    %v2062 = vrot.slane %v2046, 3
    %v2063 = vsel %vm2053, %v2060, %v2062
    %v2068 = vadd.f32 %v1995, %v2056
    %v2069 = vadd.f32 %v1996, %v2058
    %v2070 = vadd.f32 %v1997, %v2061
    %v2071 = vadd.f32 %v1998, %v2063
    %v2072 = vstv %s2039
    %v2073 = vmul.f32 %v2072, %v610
    %v2074 = vmul.f32 %v2072, %v611
    %v2075 = vmul.f32 %v2072, %v612
    %v2076 = vmul.f32 %v2072, %v613
    %v2077 = vmul.f32 %v2072, %v614
    %v2078 = vmul.f32 %v2072, %v615
    %v2085 = vrot.slane %v2073, 3
    %v2086 = vrot.slane %v2074, 3
    %v2087 = vsel %vm2053, %v2085, %v2086
    %v2088 = vrot.slane %v2075, 3
    %v2089 = vsel %vm2053, %v2086, %v2088
    %v2090 = vrot.slane %v2076, 3
    %v2091 = vrot.slane %v2077, 3
    %v2092 = vsel %vm2053, %v2090, %v2091
    %v2093 = vrot.slane %v2078, 3
    %v2094 = vsel %vm2053, %v2091, %v2093
    %v2099 = vadd.f32 %v2034, %v2087
    %v2100 = vadd.f32 %v2035, %v2089
    %v2101 = vadd.f32 %v2036, %v2092
    %v2102 = vadd.f32 %v2037, %v2094
    %s2103 = sld [smem:[#allocation7 + $0x16]]
    %s2104 = sld [smem:[#allocation7 + $0x47]]
    %v2105 = vstv %s2103
    %v2106 = vmul.f32 %v2105, %v604
    %v2107 = vmul.f32 %v2105, %v605
    %v2108 = vmul.f32 %v2105, %v606
    %v2109 = vmul.f32 %v2105, %v607
    %v2110 = vmul.f32 %v2105, %v608
    %v2111 = vmul.f32 %v2105, %v609
    %v2118 = vrot.slane %v2106, 3
    %v2119 = vrot.slane %v2107, 3
    %v2120 = vsel %vm2053, %v2118, %v2119
    %v2121 = vrot.slane %v2108, 3
    %v2122 = vsel %vm2053, %v2119, %v2121
    %v2123 = vrot.slane %v2109, 3
    %v2124 = vrot.slane %v2110, 3
    %v2125 = vsel %vm2053, %v2123, %v2124
    %v2126 = vrot.slane %v2111, 3
    %v2127 = vsel %vm2053, %v2124, %v2126
    %2128 = vrot.lane.b32.xlu0 %v2120, 127
    %v2129 = vpop.permute.xlu0 %2128
    %2130 = vrot.lane.b32.xlu0 %v2122, 127
    %v2131 = vpop.permute.xlu0 %2130
    %2132 = vrot.lane.b32.xlu0 %v2125, 127
    %v2133 = vpop.permute.xlu0 %2132
    %2134 = vrot.lane.b32.xlu0 %v2127, 127
    %v2135 = vpop.permute.xlu0 %2134
    %v2140 = vadd.f32 %v2068, %v2129
    %v2141 = vadd.f32 %v2069, %v2131
    %v2142 = vadd.f32 %v2070, %v2133
    %v2143 = vadd.f32 %v2071, %v2135
    %v2144 = vstv %s2104
    %v2145 = vmul.f32 %v2144, %v610
    %v2146 = vmul.f32 %v2144, %v611
    %v2147 = vmul.f32 %v2144, %v612
    %v2148 = vmul.f32 %v2144, %v613
    %v2149 = vmul.f32 %v2144, %v614
    %v2150 = vmul.f32 %v2144, %v615
    %v2157 = vrot.slane %v2145, 3
    %v2158 = vrot.slane %v2146, 3
    %v2159 = vsel %vm2053, %v2157, %v2158
    %v2160 = vrot.slane %v2147, 3
    %v2161 = vsel %vm2053, %v2158, %v2160
    %v2162 = vrot.slane %v2148, 3
    %v2163 = vrot.slane %v2149, 3
    %v2164 = vsel %vm2053, %v2162, %v2163
    %v2165 = vrot.slane %v2150, 3
    %v2166 = vsel %vm2053, %v2163, %v2165
    %2167 = vrot.lane.b32.xlu0 %v2159, 127
    %v2168 = vpop.permute.xlu0 %2167
    %2169 = vrot.lane.b32.xlu0 %v2161, 127
    %v2170 = vpop.permute.xlu0 %2169
    %2171 = vrot.lane.b32.xlu0 %v2164, 127
    %v2172 = vpop.permute.xlu0 %2171
    %2173 = vrot.lane.b32.xlu0 %v2166, 127
    %v2174 = vpop.permute.xlu0 %2173
    %v2179 = vadd.f32 %v2099, %v2168
    %v2180 = vadd.f32 %v2100, %v2170
    %v2181 = vadd.f32 %v2101, %v2172
    %v2182 = vadd.f32 %v2102, %v2174
    %s2183 = sld [smem:[#allocation7 + $0x17]]
    %s2184 = sld [smem:[#allocation7 + $0x48]]
    %v2185 = vstv %s2183
    %v2186 = vmul.f32 %v2185, %v604
    %v2187 = vmul.f32 %v2185, %v605
    %v2188 = vmul.f32 %v2185, %v606
    %v2189 = vmul.f32 %v2185, %v607
    %v2190 = vmul.f32 %v2185, %v608
    %v2191 = vmul.f32 %v2185, %v609
    %v2198 = vrot.slane %v2186, 3
    %v2199 = vrot.slane %v2187, 3
    %v2200 = vsel %vm2053, %v2198, %v2199
    %v2201 = vrot.slane %v2188, 3
    %v2202 = vsel %vm2053, %v2199, %v2201
    %v2203 = vrot.slane %v2189, 3
    %v2204 = vrot.slane %v2190, 3
    %v2205 = vsel %vm2053, %v2203, %v2204
    %v2206 = vrot.slane %v2191, 3
    %v2207 = vsel %vm2053, %v2204, %v2206
    %2208 = vrot.lane.b32.xlu0 %v2200, 126
    %v2209 = vpop.permute.xlu0 %2208
    %2210 = vrot.lane.b32.xlu0 %v2202, 126
    %v2211 = vpop.permute.xlu0 %2210
    %2212 = vrot.lane.b32.xlu0 %v2205, 126
    %v2213 = vpop.permute.xlu0 %2212
    %2214 = vrot.lane.b32.xlu0 %v2207, 126
    %v2215 = vpop.permute.xlu0 %2214
    %v2220 = vadd.f32 %v2140, %v2209
    %v2221 = vadd.f32 %v2141, %v2211
    %v2222 = vadd.f32 %v2142, %v2213
    %v2223 = vadd.f32 %v2143, %v2215
    %v2224 = vstv %s2184
    %v2225 = vmul.f32 %v2224, %v610
    %v2226 = vmul.f32 %v2224, %v611
    %v2227 = vmul.f32 %v2224, %v612
    %v2228 = vmul.f32 %v2224, %v613
    %v2229 = vmul.f32 %v2224, %v614
    %v2230 = vmul.f32 %v2224, %v615
    %v2237 = vrot.slane %v2225, 3
    %v2238 = vrot.slane %v2226, 3
    %v2239 = vsel %vm2053, %v2237, %v2238
    %v2240 = vrot.slane %v2227, 3
    %v2241 = vsel %vm2053, %v2238, %v2240
    %v2242 = vrot.slane %v2228, 3
    %v2243 = vrot.slane %v2229, 3
    %v2244 = vsel %vm2053, %v2242, %v2243
    %v2245 = vrot.slane %v2230, 3
    %v2246 = vsel %vm2053, %v2243, %v2245
    %2247 = vrot.lane.b32.xlu0 %v2239, 126
    %v2248 = vpop.permute.xlu0 %2247
    %2249 = vrot.lane.b32.xlu0 %v2241, 126
    %v2250 = vpop.permute.xlu0 %2249
    %2251 = vrot.lane.b32.xlu0 %v2244, 126
    %v2252 = vpop.permute.xlu0 %2251
    %2253 = vrot.lane.b32.xlu0 %v2246, 126
    %v2254 = vpop.permute.xlu0 %2253
    %v2259 = vadd.f32 %v2179, %v2248
    %v2260 = vadd.f32 %v2180, %v2250
    %v2261 = vadd.f32 %v2181, %v2252
    %v2262 = vadd.f32 %v2182, %v2254
    %s2263 = sld [smem:[#allocation7 + $0x18]]
    %s2264 = sld [smem:[#allocation7 + $0x49]]
    %v2265 = vstv %s2263
    %v2266 = vmul.f32 %v2265, %v604
    %v2267 = vmul.f32 %v2265, %v605
    %v2268 = vmul.f32 %v2265, %v606
    %v2269 = vmul.f32 %v2265, %v607
    %v2270 = vmul.f32 %v2265, %v608
    %v2271 = vmul.f32 %v2265, %v609
    %v2278 = vrot.slane %v2266, 3
    %v2279 = vrot.slane %v2267, 3
    %v2280 = vsel %vm2053, %v2278, %v2279
    %v2281 = vrot.slane %v2268, 3
    %v2282 = vsel %vm2053, %v2279, %v2281
    %v2283 = vrot.slane %v2269, 3
    %v2284 = vrot.slane %v2270, 3
    %v2285 = vsel %vm2053, %v2283, %v2284
    %v2286 = vrot.slane %v2271, 3
    %v2287 = vsel %vm2053, %v2284, %v2286
    %2288 = vrot.lane.b32.xlu0 %v2280, 125
    %v2289 = vpop.permute.xlu0 %2288
    %2290 = vrot.lane.b32.xlu0 %v2282, 125
    %v2291 = vpop.permute.xlu0 %2290
    %2292 = vrot.lane.b32.xlu0 %v2285, 125
    %v2293 = vpop.permute.xlu0 %2292
    %2294 = vrot.lane.b32.xlu0 %v2287, 125
    %v2295 = vpop.permute.xlu0 %2294
    %v2300 = vadd.f32 %v2220, %v2289
    %v2301 = vadd.f32 %v2221, %v2291
    %v2302 = vadd.f32 %v2222, %v2293
    %v2303 = vadd.f32 %v2223, %v2295
    %v2304 = vstv %s2264
    %v2305 = vmul.f32 %v2304, %v610
    %v2306 = vmul.f32 %v2304, %v611
    %v2307 = vmul.f32 %v2304, %v612
    %v2308 = vmul.f32 %v2304, %v613
    %v2309 = vmul.f32 %v2304, %v614
    %v2310 = vmul.f32 %v2304, %v615
    %v2317 = vrot.slane %v2305, 3
    %v2318 = vrot.slane %v2306, 3
    %v2319 = vsel %vm2053, %v2317, %v2318
    %v2320 = vrot.slane %v2307, 3
    %v2321 = vsel %vm2053, %v2318, %v2320
    %v2322 = vrot.slane %v2308, 3
    %v2323 = vrot.slane %v2309, 3
    %v2324 = vsel %vm2053, %v2322, %v2323
    %v2325 = vrot.slane %v2310, 3
    %v2326 = vsel %vm2053, %v2323, %v2325
    %2327 = vrot.lane.b32.xlu0 %v2319, 125
    %v2328 = vpop.permute.xlu0 %2327
    %2329 = vrot.lane.b32.xlu0 %v2321, 125
    %v2330 = vpop.permute.xlu0 %2329
    %2331 = vrot.lane.b32.xlu0 %v2324, 125
    %v2332 = vpop.permute.xlu0 %2331
    %2333 = vrot.lane.b32.xlu0 %v2326, 125
    %v2334 = vpop.permute.xlu0 %2333
    %v2339 = vadd.f32 %v2259, %v2328
    %v2340 = vadd.f32 %v2260, %v2330
    %v2341 = vadd.f32 %v2261, %v2332
    %v2342 = vadd.f32 %v2262, %v2334
    %s2343 = sld [smem:[#allocation7 + $0x19]]
    %s2344 = sld [smem:[#allocation7 + $0x4a]]
    %v2345 = vstv %s2343
    %v2346 = vmul.f32 %v2345, %v604
    %v2347 = vmul.f32 %v2345, %v605
    %v2348 = vmul.f32 %v2345, %v606
    %v2349 = vmul.f32 %v2345, %v607
    %v2350 = vmul.f32 %v2345, %v608
    %v2351 = vmul.f32 %v2345, %v609
    %v2358 = vrot.slane %v2346, 3
    %v2359 = vrot.slane %v2347, 3
    %v2360 = vsel %vm2053, %v2358, %v2359
    %v2361 = vrot.slane %v2348, 3
    %v2362 = vsel %vm2053, %v2359, %v2361
    %v2363 = vrot.slane %v2349, 3
    %v2364 = vrot.slane %v2350, 3
    %v2365 = vsel %vm2053, %v2363, %v2364
    %v2366 = vrot.slane %v2351, 3
    %v2367 = vsel %vm2053, %v2364, %v2366
    %2368 = vrot.lane.b32.xlu0 %v2360, 124
    %v2369 = vpop.permute.xlu0 %2368
    %2370 = vrot.lane.b32.xlu0 %v2362, 124
    %v2371 = vpop.permute.xlu0 %2370
    %2372 = vrot.lane.b32.xlu0 %v2365, 124
    %v2373 = vpop.permute.xlu0 %2372
    %2374 = vrot.lane.b32.xlu0 %v2367, 124
    %v2375 = vpop.permute.xlu0 %2374
    %v2380 = vadd.f32 %v2300, %v2369
    %v2381 = vadd.f32 %v2301, %v2371
    %v2382 = vadd.f32 %v2302, %v2373
    %v2383 = vadd.f32 %v2303, %v2375
    %v2384 = vstv %s2344
    %v2385 = vmul.f32 %v2384, %v610
    %v2386 = vmul.f32 %v2384, %v611
    %v2387 = vmul.f32 %v2384, %v612
    %v2388 = vmul.f32 %v2384, %v613
    %v2389 = vmul.f32 %v2384, %v614
    %v2390 = vmul.f32 %v2384, %v615
    %v2397 = vrot.slane %v2385, 3
    %v2398 = vrot.slane %v2386, 3
    %v2399 = vsel %vm2053, %v2397, %v2398
    %v2400 = vrot.slane %v2387, 3
    %v2401 = vsel %vm2053, %v2398, %v2400
    %v2402 = vrot.slane %v2388, 3
    %v2403 = vrot.slane %v2389, 3
    %v2404 = vsel %vm2053, %v2402, %v2403
    %v2405 = vrot.slane %v2390, 3
    %v2406 = vsel %vm2053, %v2403, %v2405
    %2407 = vrot.lane.b32.xlu0 %v2399, 124
    %v2408 = vpop.permute.xlu0 %2407
    %2409 = vrot.lane.b32.xlu0 %v2401, 124
    %v2410 = vpop.permute.xlu0 %2409
    %2411 = vrot.lane.b32.xlu0 %v2404, 124
    %v2412 = vpop.permute.xlu0 %2411
    %2413 = vrot.lane.b32.xlu0 %v2406, 124
    %v2414 = vpop.permute.xlu0 %2413
    %v2419 = vadd.f32 %v2339, %v2408
    %v2420 = vadd.f32 %v2340, %v2410
    %v2421 = vadd.f32 %v2341, %v2412
    %v2422 = vadd.f32 %v2342, %v2414
    %s2423 = sld [smem:[#allocation7 + $0x1a]]
    %s2424 = sld [smem:[#allocation7 + $0x4b]]
    %v2425 = vstv %s2423
    %v2426 = vmul.f32 %v2425, %v604
    %v2427 = vmul.f32 %v2425, %v605
    %v2428 = vmul.f32 %v2425, %v606
    %v2429 = vmul.f32 %v2425, %v607
    %v2430 = vmul.f32 %v2425, %v608
    %v2431 = vmul.f32 %v2425, %v609
    %v2438 = vrot.slane %v2426, 3
    %v2439 = vrot.slane %v2427, 3
    %v2440 = vsel %vm2053, %v2438, %v2439
    %v2441 = vrot.slane %v2428, 3
    %v2442 = vsel %vm2053, %v2439, %v2441
    %v2443 = vrot.slane %v2429, 3
    %v2444 = vrot.slane %v2430, 3
    %v2445 = vsel %vm2053, %v2443, %v2444
    %v2446 = vrot.slane %v2431, 3
    %v2447 = vsel %vm2053, %v2444, %v2446
    %2448 = vrot.lane.b32.xlu0 %v2440, 123
    %v2449 = vpop.permute.xlu0 %2448
    %2450 = vrot.lane.b32.xlu0 %v2442, 123
    %v2451 = vpop.permute.xlu0 %2450
    %2452 = vrot.lane.b32.xlu0 %v2445, 123
    %v2453 = vpop.permute.xlu0 %2452
    %2454 = vrot.lane.b32.xlu0 %v2447, 123
    %v2455 = vpop.permute.xlu0 %2454
    %v2460 = vadd.f32 %v2380, %v2449
    %v2461 = vadd.f32 %v2381, %v2451
    %v2462 = vadd.f32 %v2382, %v2453
    %v2463 = vadd.f32 %v2383, %v2455
    %v2464 = vstv %s2424
    %v2465 = vmul.f32 %v2464, %v610
    %v2466 = vmul.f32 %v2464, %v611
    %v2467 = vmul.f32 %v2464, %v612
    %v2468 = vmul.f32 %v2464, %v613
    %v2469 = vmul.f32 %v2464, %v614
    %v2470 = vmul.f32 %v2464, %v615
    %v2477 = vrot.slane %v2465, 3
    %v2478 = vrot.slane %v2466, 3
    %v2479 = vsel %vm2053, %v2477, %v2478
    %v2480 = vrot.slane %v2467, 3
    %v2481 = vsel %vm2053, %v2478, %v2480
    %v2482 = vrot.slane %v2468, 3
    %v2483 = vrot.slane %v2469, 3
    %v2484 = vsel %vm2053, %v2482, %v2483
    %v2485 = vrot.slane %v2470, 3
    %v2486 = vsel %vm2053, %v2483, %v2485
    %2487 = vrot.lane.b32.xlu0 %v2479, 123
    %v2488 = vpop.permute.xlu0 %2487
    %2489 = vrot.lane.b32.xlu0 %v2481, 123
    %v2490 = vpop.permute.xlu0 %2489
    %2491 = vrot.lane.b32.xlu0 %v2484, 123
    %v2492 = vpop.permute.xlu0 %2491
    %2493 = vrot.lane.b32.xlu0 %v2486, 123
    %v2494 = vpop.permute.xlu0 %2493
    %v2499 = vadd.f32 %v2419, %v2488
    %v2500 = vadd.f32 %v2420, %v2490
    %v2501 = vadd.f32 %v2421, %v2492
    %v2502 = vadd.f32 %v2422, %v2494
    %s2503 = sld [smem:[#allocation7 + $0x1b]]
    %s2504 = sld [smem:[#allocation7 + $0x4c]]
    %v2505 = vstv %s2503
    %v2506 = vmul.f32 %v2505, %v604
    %v2507 = vmul.f32 %v2505, %v605
    %v2508 = vmul.f32 %v2505, %v606
    %v2509 = vmul.f32 %v2505, %v607
    %v2510 = vmul.f32 %v2505, %v608
    %v2511 = vmul.f32 %v2505, %v609
    %v2518 = vrot.slane %v2506, 3
    %v2519 = vrot.slane %v2507, 3
    %v2520 = vsel %vm2053, %v2518, %v2519
    %v2521 = vrot.slane %v2508, 3
    %v2522 = vsel %vm2053, %v2519, %v2521
    %v2523 = vrot.slane %v2509, 3
    %v2524 = vrot.slane %v2510, 3
    %v2525 = vsel %vm2053, %v2523, %v2524
    %v2526 = vrot.slane %v2511, 3
    %v2527 = vsel %vm2053, %v2524, %v2526
    %2528 = vrot.lane.b32.xlu0 %v2520, 122
    %v2529 = vpop.permute.xlu0 %2528
    %2530 = vrot.lane.b32.xlu0 %v2522, 122
    %v2531 = vpop.permute.xlu0 %2530
    %2532 = vrot.lane.b32.xlu0 %v2525, 122
    %v2533 = vpop.permute.xlu0 %2532
    %2534 = vrot.lane.b32.xlu0 %v2527, 122
    %v2535 = vpop.permute.xlu0 %2534
    %v2540 = vadd.f32 %v2460, %v2529
    %v2541 = vadd.f32 %v2461, %v2531
    %v2542 = vadd.f32 %v2462, %v2533
    %v2543 = vadd.f32 %v2463, %v2535
    %v2544 = vstv %s2504
    %v2545 = vmul.f32 %v2544, %v610
    %v2546 = vmul.f32 %v2544, %v611
    %v2547 = vmul.f32 %v2544, %v612
    %v2548 = vmul.f32 %v2544, %v613
    %v2549 = vmul.f32 %v2544, %v614
    %v2550 = vmul.f32 %v2544, %v615
    %v2557 = vrot.slane %v2545, 3
    %v2558 = vrot.slane %v2546, 3
    %v2559 = vsel %vm2053, %v2557, %v2558
    %v2560 = vrot.slane %v2547, 3
    %v2561 = vsel %vm2053, %v2558, %v2560
    %v2562 = vrot.slane %v2548, 3
    %v2563 = vrot.slane %v2549, 3
    %v2564 = vsel %vm2053, %v2562, %v2563
    %v2565 = vrot.slane %v2550, 3
    %v2566 = vsel %vm2053, %v2563, %v2565
    %2567 = vrot.lane.b32.xlu0 %v2559, 122
    %v2568 = vpop.permute.xlu0 %2567
    %2569 = vrot.lane.b32.xlu0 %v2561, 122
    %v2570 = vpop.permute.xlu0 %2569
    %2571 = vrot.lane.b32.xlu0 %v2564, 122
    %v2572 = vpop.permute.xlu0 %2571
    %2573 = vrot.lane.b32.xlu0 %v2566, 122
    %v2574 = vpop.permute.xlu0 %2573
    %v2579 = vadd.f32 %v2499, %v2568
    %v2580 = vadd.f32 %v2500, %v2570
    %v2581 = vadd.f32 %v2501, %v2572
    %v2582 = vadd.f32 %v2502, %v2574
    %s2583 = sld [smem:[#allocation7 + $0x1c]]
    %s2584 = sld [smem:[#allocation7 + $0x4d]]
    %v2585 = vstv %s2583
    %v2586 = vmul.f32 %v2585, %v604
    %v2587 = vmul.f32 %v2585, %v605
    %v2588 = vmul.f32 %v2585, %v606
    %v2589 = vmul.f32 %v2585, %v607
    %v2590 = vmul.f32 %v2585, %v608
    %v2591 = vmul.f32 %v2585, %v609
    %v2598 = vrot.slane %v2586, 4
    %v2599 = vrot.slane %v2587, 4
    %v2600 = vsel %vm47, %v2598, %v2599
    %v2601 = vrot.slane %v2588, 4
    %v2602 = vsel %vm47, %v2599, %v2601
    %v2603 = vrot.slane %v2589, 4
    %v2604 = vrot.slane %v2590, 4
    %v2605 = vsel %vm47, %v2603, %v2604
    %v2606 = vrot.slane %v2591, 4
    %v2607 = vsel %vm47, %v2604, %v2606
    %v2612 = vadd.f32 %v2540, %v2600
    %v2613 = vadd.f32 %v2541, %v2602
    %v2614 = vadd.f32 %v2542, %v2605
    %v2615 = vadd.f32 %v2543, %v2607
    %v2616 = vstv %s2584
    %v2617 = vmul.f32 %v2616, %v610
    %v2618 = vmul.f32 %v2616, %v611
    %v2619 = vmul.f32 %v2616, %v612
    %v2620 = vmul.f32 %v2616, %v613
    %v2621 = vmul.f32 %v2616, %v614
    %v2622 = vmul.f32 %v2616, %v615
    %v2629 = vrot.slane %v2617, 4
    %v2630 = vrot.slane %v2618, 4
    %v2631 = vsel %vm47, %v2629, %v2630
    %v2632 = vrot.slane %v2619, 4
    %v2633 = vsel %vm47, %v2630, %v2632
    %v2634 = vrot.slane %v2620, 4
    %v2635 = vrot.slane %v2621, 4
    %v2636 = vsel %vm47, %v2634, %v2635
    %v2637 = vrot.slane %v2622, 4
    %v2638 = vsel %vm47, %v2635, %v2637
    %v2643 = vadd.f32 %v2579, %v2631
    %v2644 = vadd.f32 %v2580, %v2633
    %v2645 = vadd.f32 %v2581, %v2636
    %v2646 = vadd.f32 %v2582, %v2638
    %s2647 = sld [smem:[#allocation7 + $0x1d]]
    %s2648 = sld [smem:[#allocation7 + $0x4e]]
    %v2649 = vstv %s2647
    %v2650 = vmul.f32 %v2649, %v604
    %v2651 = vmul.f32 %v2649, %v605
    %v2652 = vmul.f32 %v2649, %v606
    %v2653 = vmul.f32 %v2649, %v607
    %v2654 = vmul.f32 %v2649, %v608
    %v2655 = vmul.f32 %v2649, %v609
    %v2662 = vrot.slane %v2650, 4
    %v2663 = vrot.slane %v2651, 4
    %v2664 = vsel %vm47, %v2662, %v2663
    %v2665 = vrot.slane %v2652, 4
    %v2666 = vsel %vm47, %v2663, %v2665
    %v2667 = vrot.slane %v2653, 4
    %v2668 = vrot.slane %v2654, 4
    %v2669 = vsel %vm47, %v2667, %v2668
    %v2670 = vrot.slane %v2655, 4
    %v2671 = vsel %vm47, %v2668, %v2670
    %2672 = vrot.lane.b32.xlu0 %v2664, 127
    %v2673 = vpop.permute.xlu0 %2672
    %2674 = vrot.lane.b32.xlu0 %v2666, 127
    %v2675 = vpop.permute.xlu0 %2674
    %2676 = vrot.lane.b32.xlu0 %v2669, 127
    %v2677 = vpop.permute.xlu0 %2676
    %2678 = vrot.lane.b32.xlu0 %v2671, 127
    %v2679 = vpop.permute.xlu0 %2678
    %v2684 = vadd.f32 %v2612, %v2673
    %v2685 = vadd.f32 %v2613, %v2675
    %v2686 = vadd.f32 %v2614, %v2677
    %v2687 = vadd.f32 %v2615, %v2679
    %v2688 = vstv %s2648
    %v2689 = vmul.f32 %v2688, %v610
    %v2690 = vmul.f32 %v2688, %v611
    %v2691 = vmul.f32 %v2688, %v612
    %v2692 = vmul.f32 %v2688, %v613
    %v2693 = vmul.f32 %v2688, %v614
    %v2694 = vmul.f32 %v2688, %v615
    %v2701 = vrot.slane %v2689, 4
    %v2702 = vrot.slane %v2690, 4
    %v2703 = vsel %vm47, %v2701, %v2702
    %v2704 = vrot.slane %v2691, 4
    %v2705 = vsel %vm47, %v2702, %v2704
    %v2706 = vrot.slane %v2692, 4
    %v2707 = vrot.slane %v2693, 4
    %v2708 = vsel %vm47, %v2706, %v2707
    %v2709 = vrot.slane %v2694, 4
    %v2710 = vsel %vm47, %v2707, %v2709
    %2711 = vrot.lane.b32.xlu0 %v2703, 127
    %v2712 = vpop.permute.xlu0 %2711
    %2713 = vrot.lane.b32.xlu0 %v2705, 127
    %v2714 = vpop.permute.xlu0 %2713
    %2715 = vrot.lane.b32.xlu0 %v2708, 127
    %v2716 = vpop.permute.xlu0 %2715
    %2717 = vrot.lane.b32.xlu0 %v2710, 127
    %v2718 = vpop.permute.xlu0 %2717
    %v2723 = vadd.f32 %v2643, %v2712
    %v2724 = vadd.f32 %v2644, %v2714
    %v2725 = vadd.f32 %v2645, %v2716
    %v2726 = vadd.f32 %v2646, %v2718
    %s2727 = sld [smem:[#allocation7 + $0x1e]]
    %s2728 = sld [smem:[#allocation7 + $0x4f]]
    %v2729 = vstv %s2727
    %v2730 = vmul.f32 %v2729, %v604
    %v2731 = vmul.f32 %v2729, %v605
    %v2732 = vmul.f32 %v2729, %v606
    %v2733 = vmul.f32 %v2729, %v607
    %v2734 = vmul.f32 %v2729, %v608
    %v2735 = vmul.f32 %v2729, %v609
    %v2742 = vrot.slane %v2730, 4
    %v2743 = vrot.slane %v2731, 4
    %v2744 = vsel %vm47, %v2742, %v2743
    %v2745 = vrot.slane %v2732, 4
    %v2746 = vsel %vm47, %v2743, %v2745
    %v2747 = vrot.slane %v2733, 4
    %v2748 = vrot.slane %v2734, 4
    %v2749 = vsel %vm47, %v2747, %v2748
    %v2750 = vrot.slane %v2735, 4
    %v2751 = vsel %vm47, %v2748, %v2750
    %2752 = vrot.lane.b32.xlu0 %v2744, 126
    %v2753 = vpop.permute.xlu0 %2752
    %2754 = vrot.lane.b32.xlu0 %v2746, 126
    %v2755 = vpop.permute.xlu0 %2754
    %2756 = vrot.lane.b32.xlu0 %v2749, 126
    %v2757 = vpop.permute.xlu0 %2756
    %2758 = vrot.lane.b32.xlu0 %v2751, 126
    %v2759 = vpop.permute.xlu0 %2758
    %v2764 = vadd.f32 %v2684, %v2753
    %v2765 = vadd.f32 %v2685, %v2755
    %v2766 = vadd.f32 %v2686, %v2757
    %v2767 = vadd.f32 %v2687, %v2759
    %v2768 = vstv %s2728
    %v2769 = vmul.f32 %v2768, %v610
    %v2770 = vmul.f32 %v2768, %v611
    %v2771 = vmul.f32 %v2768, %v612
    %v2772 = vmul.f32 %v2768, %v613
    %v2773 = vmul.f32 %v2768, %v614
    %v2774 = vmul.f32 %v2768, %v615
    %v2781 = vrot.slane %v2769, 4
    %v2782 = vrot.slane %v2770, 4
    %v2783 = vsel %vm47, %v2781, %v2782
    %v2784 = vrot.slane %v2771, 4
    %v2785 = vsel %vm47, %v2782, %v2784
    %v2786 = vrot.slane %v2772, 4
    %v2787 = vrot.slane %v2773, 4
    %v2788 = vsel %vm47, %v2786, %v2787
    %v2789 = vrot.slane %v2774, 4
    %v2790 = vsel %vm47, %v2787, %v2789
    %2791 = vrot.lane.b32.xlu0 %v2783, 126
    %v2792 = vpop.permute.xlu0 %2791
    %2793 = vrot.lane.b32.xlu0 %v2785, 126
    %v2794 = vpop.permute.xlu0 %2793
    %2795 = vrot.lane.b32.xlu0 %v2788, 126
    %v2796 = vpop.permute.xlu0 %2795
    %2797 = vrot.lane.b32.xlu0 %v2790, 126
    %v2798 = vpop.permute.xlu0 %2797
    %v2803 = vadd.f32 %v2723, %v2792
    %v2804 = vadd.f32 %v2724, %v2794
    %v2805 = vadd.f32 %v2725, %v2796
    %v2806 = vadd.f32 %v2726, %v2798
    %s2807 = sld [smem:[#allocation7 + $0x1f]]
    %s2808 = sld [smem:[#allocation7 + $0x50]]
    %v2809 = vstv %s2807
    %v2810 = vmul.f32 %v2809, %v604
    %v2811 = vmul.f32 %v2809, %v605
    %v2812 = vmul.f32 %v2809, %v606
    %v2813 = vmul.f32 %v2809, %v607
    %v2814 = vmul.f32 %v2809, %v608
    %v2815 = vmul.f32 %v2809, %v609
    %v2822 = vrot.slane %v2810, 4
    %v2823 = vrot.slane %v2811, 4
    %v2824 = vsel %vm47, %v2822, %v2823
    %v2825 = vrot.slane %v2812, 4
    %v2826 = vsel %vm47, %v2823, %v2825
    %v2827 = vrot.slane %v2813, 4
    %v2828 = vrot.slane %v2814, 4
    %v2829 = vsel %vm47, %v2827, %v2828
    %v2830 = vrot.slane %v2815, 4
    %v2831 = vsel %vm47, %v2828, %v2830
    %2832 = vrot.lane.b32.xlu0 %v2824, 125
    %v2833 = vpop.permute.xlu0 %2832
    %2834 = vrot.lane.b32.xlu0 %v2826, 125
    %v2835 = vpop.permute.xlu0 %2834
    %2836 = vrot.lane.b32.xlu0 %v2829, 125
    %v2837 = vpop.permute.xlu0 %2836
    %2838 = vrot.lane.b32.xlu0 %v2831, 125
    %v2839 = vpop.permute.xlu0 %2838
    %v2844 = vadd.f32 %v2764, %v2833
    %v2845 = vadd.f32 %v2765, %v2835
    %v2846 = vadd.f32 %v2766, %v2837
    %v2847 = vadd.f32 %v2767, %v2839
    %v2848 = vstv %s2808
    %v2849 = vmul.f32 %v2848, %v610
    %v2850 = vmul.f32 %v2848, %v611
    %v2851 = vmul.f32 %v2848, %v612
    %v2852 = vmul.f32 %v2848, %v613
    %v2853 = vmul.f32 %v2848, %v614
    %v2854 = vmul.f32 %v2848, %v615
    %v2861 = vrot.slane %v2849, 4
    %v2862 = vrot.slane %v2850, 4
    %v2863 = vsel %vm47, %v2861, %v2862
    %v2864 = vrot.slane %v2851, 4
    %v2865 = vsel %vm47, %v2862, %v2864
    %v2866 = vrot.slane %v2852, 4
    %v2867 = vrot.slane %v2853, 4
    %v2868 = vsel %vm47, %v2866, %v2867
    %v2869 = vrot.slane %v2854, 4
    %v2870 = vsel %vm47, %v2867, %v2869
    %2871 = vrot.lane.b32.xlu0 %v2863, 125
    %v2872 = vpop.permute.xlu0 %2871
    %2873 = vrot.lane.b32.xlu0 %v2865, 125
    %v2874 = vpop.permute.xlu0 %2873
    %2875 = vrot.lane.b32.xlu0 %v2868, 125
    %v2876 = vpop.permute.xlu0 %2875
    %2877 = vrot.lane.b32.xlu0 %v2870, 125
    %v2878 = vpop.permute.xlu0 %2877
    %v2883 = vadd.f32 %v2803, %v2872
    %v2884 = vadd.f32 %v2804, %v2874
    %v2885 = vadd.f32 %v2805, %v2876
    %v2886 = vadd.f32 %v2806, %v2878
    %s2887 = sld [smem:[#allocation7 + $0x20]]
    %s2888 = sld [smem:[#allocation7 + $0x51]]
    %v2889 = vstv %s2887
    %v2890 = vmul.f32 %v2889, %v604
    %v2891 = vmul.f32 %v2889, %v605
    %v2892 = vmul.f32 %v2889, %v606
    %v2893 = vmul.f32 %v2889, %v607
    %v2894 = vmul.f32 %v2889, %v608
    %v2895 = vmul.f32 %v2889, %v609
    %v2902 = vrot.slane %v2890, 4
    %v2903 = vrot.slane %v2891, 4
    %v2904 = vsel %vm47, %v2902, %v2903
    %v2905 = vrot.slane %v2892, 4
    %v2906 = vsel %vm47, %v2903, %v2905
    %v2907 = vrot.slane %v2893, 4
    %v2908 = vrot.slane %v2894, 4
    %v2909 = vsel %vm47, %v2907, %v2908
    %v2910 = vrot.slane %v2895, 4
    %v2911 = vsel %vm47, %v2908, %v2910
    %2912 = vrot.lane.b32.xlu0 %v2904, 124
    %v2913 = vpop.permute.xlu0 %2912
    %2914 = vrot.lane.b32.xlu0 %v2906, 124
    %v2915 = vpop.permute.xlu0 %2914
    %2916 = vrot.lane.b32.xlu0 %v2909, 124
    %v2917 = vpop.permute.xlu0 %2916
    %2918 = vrot.lane.b32.xlu0 %v2911, 124
    %v2919 = vpop.permute.xlu0 %2918
    %v2924 = vadd.f32 %v2844, %v2913
    %v2925 = vadd.f32 %v2845, %v2915
    %v2926 = vadd.f32 %v2846, %v2917
    %v2927 = vadd.f32 %v2847, %v2919
    %v2928 = vstv %s2888
    %v2929 = vmul.f32 %v2928, %v610
    %v2930 = vmul.f32 %v2928, %v611
    %v2931 = vmul.f32 %v2928, %v612
    %v2932 = vmul.f32 %v2928, %v613
    %v2933 = vmul.f32 %v2928, %v614
    %v2934 = vmul.f32 %v2928, %v615
    %v2941 = vrot.slane %v2929, 4
    %v2942 = vrot.slane %v2930, 4
    %v2943 = vsel %vm47, %v2941, %v2942
    %v2944 = vrot.slane %v2931, 4
    %v2945 = vsel %vm47, %v2942, %v2944
    %v2946 = vrot.slane %v2932, 4
    %v2947 = vrot.slane %v2933, 4
    %v2948 = vsel %vm47, %v2946, %v2947
    %v2949 = vrot.slane %v2934, 4
    %v2950 = vsel %vm47, %v2947, %v2949
    %2951 = vrot.lane.b32.xlu0 %v2943, 124
    %v2952 = vpop.permute.xlu0 %2951
    %2953 = vrot.lane.b32.xlu0 %v2945, 124
    %v2954 = vpop.permute.xlu0 %2953
    %2955 = vrot.lane.b32.xlu0 %v2948, 124
    %v2956 = vpop.permute.xlu0 %2955
    %2957 = vrot.lane.b32.xlu0 %v2950, 124
    %v2958 = vpop.permute.xlu0 %2957
    %v2963 = vadd.f32 %v2883, %v2952
    %v2964 = vadd.f32 %v2884, %v2954
    %v2965 = vadd.f32 %v2885, %v2956
    %v2966 = vadd.f32 %v2886, %v2958
    %s2967 = sld [smem:[#allocation7 + $0x21]]
    %s2968 = sld [smem:[#allocation7 + $0x52]]
    %v2969 = vstv %s2967
    %v2970 = vmul.f32 %v2969, %v604
    %v2971 = vmul.f32 %v2969, %v605
    %v2972 = vmul.f32 %v2969, %v606
    %v2973 = vmul.f32 %v2969, %v607
    %v2974 = vmul.f32 %v2969, %v608
    %v2975 = vmul.f32 %v2969, %v609
    %v2982 = vrot.slane %v2970, 4
    %v2983 = vrot.slane %v2971, 4
    %v2984 = vsel %vm47, %v2982, %v2983
    %v2985 = vrot.slane %v2972, 4
    %v2986 = vsel %vm47, %v2983, %v2985
    %v2987 = vrot.slane %v2973, 4
    %v2988 = vrot.slane %v2974, 4
    %v2989 = vsel %vm47, %v2987, %v2988
    %v2990 = vrot.slane %v2975, 4
    %v2991 = vsel %vm47, %v2988, %v2990
    %2992 = vrot.lane.b32.xlu0 %v2984, 123
    %v2993 = vpop.permute.xlu0 %2992
    %2994 = vrot.lane.b32.xlu0 %v2986, 123
    %v2995 = vpop.permute.xlu0 %2994
    %2996 = vrot.lane.b32.xlu0 %v2989, 123
    %v2997 = vpop.permute.xlu0 %2996
    %2998 = vrot.lane.b32.xlu0 %v2991, 123
    %v2999 = vpop.permute.xlu0 %2998
    %v3004 = vadd.f32 %v2924, %v2993
    %v3005 = vadd.f32 %v2925, %v2995
    %v3006 = vadd.f32 %v2926, %v2997
    %v3007 = vadd.f32 %v2927, %v2999
    %v3008 = vstv %s2968
    %v3009 = vmul.f32 %v3008, %v610
    %v3010 = vmul.f32 %v3008, %v611
    %v3011 = vmul.f32 %v3008, %v612
    %v3012 = vmul.f32 %v3008, %v613
    %v3013 = vmul.f32 %v3008, %v614
    %v3014 = vmul.f32 %v3008, %v615
    %v3021 = vrot.slane %v3009, 4
    %v3022 = vrot.slane %v3010, 4
    %v3023 = vsel %vm47, %v3021, %v3022
    %v3024 = vrot.slane %v3011, 4
    %v3025 = vsel %vm47, %v3022, %v3024
    %v3026 = vrot.slane %v3012, 4
    %v3027 = vrot.slane %v3013, 4
    %v3028 = vsel %vm47, %v3026, %v3027
    %v3029 = vrot.slane %v3014, 4
    %v3030 = vsel %vm47, %v3027, %v3029
    %3031 = vrot.lane.b32.xlu0 %v3023, 123
    %v3032 = vpop.permute.xlu0 %3031
    %3033 = vrot.lane.b32.xlu0 %v3025, 123
    %v3034 = vpop.permute.xlu0 %3033
    %3035 = vrot.lane.b32.xlu0 %v3028, 123
    %v3036 = vpop.permute.xlu0 %3035
    %3037 = vrot.lane.b32.xlu0 %v3030, 123
    %v3038 = vpop.permute.xlu0 %3037
    %v3043 = vadd.f32 %v2963, %v3032
    %v3044 = vadd.f32 %v2964, %v3034
    %v3045 = vadd.f32 %v2965, %v3036
    %v3046 = vadd.f32 %v2966, %v3038
    %s3047 = sld [smem:[#allocation7 + $0x22]]
    %s3048 = sld [smem:[#allocation7 + $0x53]]
    %v3049 = vstv %s3047
    %v3050 = vmul.f32 %v3049, %v604
    %v3051 = vmul.f32 %v3049, %v605
    %v3052 = vmul.f32 %v3049, %v606
    %v3053 = vmul.f32 %v3049, %v607
    %v3054 = vmul.f32 %v3049, %v608
    %v3055 = vmul.f32 %v3049, %v609
    %v3062 = vrot.slane %v3050, 4
    %v3063 = vrot.slane %v3051, 4
    %v3064 = vsel %vm47, %v3062, %v3063
    %v3065 = vrot.slane %v3052, 4
    %v3066 = vsel %vm47, %v3063, %v3065
    %v3067 = vrot.slane %v3053, 4
    %v3068 = vrot.slane %v3054, 4
    %v3069 = vsel %vm47, %v3067, %v3068
    %v3070 = vrot.slane %v3055, 4
    %v3071 = vsel %vm47, %v3068, %v3070
    %3072 = vrot.lane.b32.xlu0 %v3064, 122
    %v3073 = vpop.permute.xlu0 %3072
    %3074 = vrot.lane.b32.xlu0 %v3066, 122
    %v3075 = vpop.permute.xlu0 %3074
    %3076 = vrot.lane.b32.xlu0 %v3069, 122
    %v3077 = vpop.permute.xlu0 %3076
    %3078 = vrot.lane.b32.xlu0 %v3071, 122
    %v3079 = vpop.permute.xlu0 %3078
    %v3084 = vadd.f32 %v3004, %v3073
    %v3085 = vadd.f32 %v3005, %v3075
    %v3086 = vadd.f32 %v3006, %v3077
    %v3087 = vadd.f32 %v3007, %v3079
    %v3088 = vstv %s3048
    %v3089 = vmul.f32 %v3088, %v610
    %v3090 = vmul.f32 %v3088, %v611
    %v3091 = vmul.f32 %v3088, %v612
    %v3092 = vmul.f32 %v3088, %v613
    %v3093 = vmul.f32 %v3088, %v614
    %v3094 = vmul.f32 %v3088, %v615
    %v3101 = vrot.slane %v3089, 4
    %v3102 = vrot.slane %v3090, 4
    %v3103 = vsel %vm47, %v3101, %v3102
    %v3104 = vrot.slane %v3091, 4
    %v3105 = vsel %vm47, %v3102, %v3104
    %v3106 = vrot.slane %v3092, 4
    %v3107 = vrot.slane %v3093, 4
    %v3108 = vsel %vm47, %v3106, %v3107
    %v3109 = vrot.slane %v3094, 4
    %v3110 = vsel %vm47, %v3107, %v3109
    %3111 = vrot.lane.b32.xlu0 %v3103, 122
    %v3112 = vpop.permute.xlu0 %3111
    %3113 = vrot.lane.b32.xlu0 %v3105, 122
    %v3114 = vpop.permute.xlu0 %3113
    %3115 = vrot.lane.b32.xlu0 %v3108, 122
    %v3116 = vpop.permute.xlu0 %3115
    %3117 = vrot.lane.b32.xlu0 %v3110, 122
    %v3118 = vpop.permute.xlu0 %3117
    %v3123 = vadd.f32 %v3043, %v3112
    %v3124 = vadd.f32 %v3044, %v3114
    %v3125 = vadd.f32 %v3045, %v3116
    %v3126 = vadd.f32 %v3046, %v3118
    %s3127 = sld [smem:[#allocation7 + $0x23]]
    %s3128 = sld [smem:[#allocation7 + $0x54]]
    %v3129 = vstv %s3127
    %v3130 = vmul.f32 %v3129, %v604
    %v3131 = vmul.f32 %v3129, %v605
    %v3132 = vmul.f32 %v3129, %v606
    %v3133 = vmul.f32 %v3129, %v607
    %v3134 = vmul.f32 %v3129, %v608
    %v3135 = vmul.f32 %v3129, %v609
    %vm3142 = vcmask 1042432
    %v3143 = vrot.slane %v3130, 5
    %v3144 = vrot.slane %v3131, 5
    %v3145 = vsel %vm3142, %v3143, %v3144
    %v3146 = vrot.slane %v3132, 5
    %v3147 = vsel %vm3142, %v3144, %v3146
    %v3148 = vrot.slane %v3133, 5
    %v3149 = vrot.slane %v3134, 5
    %v3150 = vsel %vm3142, %v3148, %v3149
    %v3151 = vrot.slane %v3135, 5
    %v3152 = vsel %vm3142, %v3149, %v3151
    %v3157 = vadd.f32 %v3084, %v3145
    %v3158 = vadd.f32 %v3085, %v3147
    %v3159 = vadd.f32 %v3086, %v3150
    %v3160 = vadd.f32 %v3087, %v3152
    %v3161 = vstv %s3128
    %v3162 = vmul.f32 %v3161, %v610
    %v3163 = vmul.f32 %v3161, %v611
    %v3164 = vmul.f32 %v3161, %v612
    %v3165 = vmul.f32 %v3161, %v613
    %v3166 = vmul.f32 %v3161, %v614
    %v3167 = vmul.f32 %v3161, %v615
    %v3174 = vrot.slane %v3162, 5
    %v3175 = vrot.slane %v3163, 5
    %v3176 = vsel %vm3142, %v3174, %v3175
    %v3177 = vrot.slane %v3164, 5
    %v3178 = vsel %vm3142, %v3175, %v3177
    %v3179 = vrot.slane %v3165, 5
    %v3180 = vrot.slane %v3166, 5
    %v3181 = vsel %vm3142, %v3179, %v3180
    %v3182 = vrot.slane %v3167, 5
    %v3183 = vsel %vm3142, %v3180, %v3182
    %v3188 = vadd.f32 %v3123, %v3176
    %v3189 = vadd.f32 %v3124, %v3178
    %v3190 = vadd.f32 %v3125, %v3181
    %v3191 = vadd.f32 %v3126, %v3183
    %s3192 = sld [smem:[#allocation7 + $0x24]]
    %s3193 = sld [smem:[#allocation7 + $0x55]]
    %v3194 = vstv %s3192
    %v3195 = vmul.f32 %v3194, %v604
    %v3196 = vmul.f32 %v3194, %v605
    %v3197 = vmul.f32 %v3194, %v606
    %v3198 = vmul.f32 %v3194, %v607
    %v3199 = vmul.f32 %v3194, %v608
    %v3200 = vmul.f32 %v3194, %v609
    %v3207 = vrot.slane %v3195, 5
    %v3208 = vrot.slane %v3196, 5
    %v3209 = vsel %vm3142, %v3207, %v3208
    %v3210 = vrot.slane %v3197, 5
    %v3211 = vsel %vm3142, %v3208, %v3210
    %v3212 = vrot.slane %v3198, 5
    %v3213 = vrot.slane %v3199, 5
    %v3214 = vsel %vm3142, %v3212, %v3213
    %v3215 = vrot.slane %v3200, 5
    %v3216 = vsel %vm3142, %v3213, %v3215
    %3217 = vrot.lane.b32.xlu0 %v3209, 127
    %v3218 = vpop.permute.xlu0 %3217
    %3219 = vrot.lane.b32.xlu0 %v3211, 127
    %v3220 = vpop.permute.xlu0 %3219
    %3221 = vrot.lane.b32.xlu0 %v3214, 127
    %v3222 = vpop.permute.xlu0 %3221
    %3223 = vrot.lane.b32.xlu0 %v3216, 127
    %v3224 = vpop.permute.xlu0 %3223
    %v3229 = vadd.f32 %v3157, %v3218
    %v3230 = vadd.f32 %v3158, %v3220
    %v3231 = vadd.f32 %v3159, %v3222
    %v3232 = vadd.f32 %v3160, %v3224
    %v3233 = vstv %s3193
    %v3234 = vmul.f32 %v3233, %v610
    %v3235 = vmul.f32 %v3233, %v611
    %v3236 = vmul.f32 %v3233, %v612
    %v3237 = vmul.f32 %v3233, %v613
    %v3238 = vmul.f32 %v3233, %v614
    %v3239 = vmul.f32 %v3233, %v615
    %v3246 = vrot.slane %v3234, 5
    %v3247 = vrot.slane %v3235, 5
    %v3248 = vsel %vm3142, %v3246, %v3247
    %v3249 = vrot.slane %v3236, 5
    %v3250 = vsel %vm3142, %v3247, %v3249
    %v3251 = vrot.slane %v3237, 5
    %v3252 = vrot.slane %v3238, 5
    %v3253 = vsel %vm3142, %v3251, %v3252
    %v3254 = vrot.slane %v3239, 5
    %v3255 = vsel %vm3142, %v3252, %v3254
    %3256 = vrot.lane.b32.xlu0 %v3248, 127
    %v3257 = vpop.permute.xlu0 %3256
    %3258 = vrot.lane.b32.xlu0 %v3250, 127
    %v3259 = vpop.permute.xlu0 %3258
    %3260 = vrot.lane.b32.xlu0 %v3253, 127
    %v3261 = vpop.permute.xlu0 %3260
    %3262 = vrot.lane.b32.xlu0 %v3255, 127
    %v3263 = vpop.permute.xlu0 %3262
    %v3268 = vadd.f32 %v3188, %v3257
    %v3269 = vadd.f32 %v3189, %v3259
    %v3270 = vadd.f32 %v3190, %v3261
    %v3271 = vadd.f32 %v3191, %v3263
    %s3272 = sld [smem:[#allocation7 + $0x25]]
    %s3273 = sld [smem:[#allocation7 + $0x56]]
    %v3274 = vstv %s3272
    %v3275 = vmul.f32 %v3274, %v604
    %v3276 = vmul.f32 %v3274, %v605
    %v3277 = vmul.f32 %v3274, %v606
    %v3278 = vmul.f32 %v3274, %v607
    %v3279 = vmul.f32 %v3274, %v608
    %v3280 = vmul.f32 %v3274, %v609
    %v3287 = vrot.slane %v3275, 5
    %v3288 = vrot.slane %v3276, 5
    %v3289 = vsel %vm3142, %v3287, %v3288
    %v3290 = vrot.slane %v3277, 5
    %v3291 = vsel %vm3142, %v3288, %v3290
    %v3292 = vrot.slane %v3278, 5
    %v3293 = vrot.slane %v3279, 5
    %v3294 = vsel %vm3142, %v3292, %v3293
    %v3295 = vrot.slane %v3280, 5
    %v3296 = vsel %vm3142, %v3293, %v3295
    %3297 = vrot.lane.b32.xlu0 %v3289, 126
    %v3298 = vpop.permute.xlu0 %3297
    %3299 = vrot.lane.b32.xlu0 %v3291, 126
    %v3300 = vpop.permute.xlu0 %3299
    %3301 = vrot.lane.b32.xlu0 %v3294, 126
    %v3302 = vpop.permute.xlu0 %3301
    %3303 = vrot.lane.b32.xlu0 %v3296, 126
    %v3304 = vpop.permute.xlu0 %3303
    %v3309 = vadd.f32 %v3229, %v3298
    %v3310 = vadd.f32 %v3230, %v3300
    %v3311 = vadd.f32 %v3231, %v3302
    %v3312 = vadd.f32 %v3232, %v3304
    %v3313 = vstv %s3273
    %v3314 = vmul.f32 %v3313, %v610
    %v3315 = vmul.f32 %v3313, %v611
    %v3316 = vmul.f32 %v3313, %v612
    %v3317 = vmul.f32 %v3313, %v613
    %v3318 = vmul.f32 %v3313, %v614
    %v3319 = vmul.f32 %v3313, %v615
    %v3326 = vrot.slane %v3314, 5
    %v3327 = vrot.slane %v3315, 5
    %v3328 = vsel %vm3142, %v3326, %v3327
    %v3329 = vrot.slane %v3316, 5
    %v3330 = vsel %vm3142, %v3327, %v3329
    %v3331 = vrot.slane %v3317, 5
    %v3332 = vrot.slane %v3318, 5
    %v3333 = vsel %vm3142, %v3331, %v3332
    %v3334 = vrot.slane %v3319, 5
    %v3335 = vsel %vm3142, %v3332, %v3334
    %3336 = vrot.lane.b32.xlu0 %v3328, 126
    %v3337 = vpop.permute.xlu0 %3336
    %3338 = vrot.lane.b32.xlu0 %v3330, 126
    %v3339 = vpop.permute.xlu0 %3338
    %3340 = vrot.lane.b32.xlu0 %v3333, 126
    %v3341 = vpop.permute.xlu0 %3340
    %3342 = vrot.lane.b32.xlu0 %v3335, 126
    %v3343 = vpop.permute.xlu0 %3342
    %v3348 = vadd.f32 %v3268, %v3337
    %v3349 = vadd.f32 %v3269, %v3339
    %v3350 = vadd.f32 %v3270, %v3341
    %v3351 = vadd.f32 %v3271, %v3343
    %s3352 = sld [smem:[#allocation7 + $0x26]]
    %s3353 = sld [smem:[#allocation7 + $0x57]]
    %v3354 = vstv %s3352
    %v3355 = vmul.f32 %v3354, %v604
    %v3356 = vmul.f32 %v3354, %v605
    %v3357 = vmul.f32 %v3354, %v606
    %v3358 = vmul.f32 %v3354, %v607
    %v3359 = vmul.f32 %v3354, %v608
    %v3360 = vmul.f32 %v3354, %v609
    %v3367 = vrot.slane %v3355, 5
    %v3368 = vrot.slane %v3356, 5
    %v3369 = vsel %vm3142, %v3367, %v3368
    %v3370 = vrot.slane %v3357, 5
    %v3371 = vsel %vm3142, %v3368, %v3370
    %v3372 = vrot.slane %v3358, 5
    %v3373 = vrot.slane %v3359, 5
    %v3374 = vsel %vm3142, %v3372, %v3373
    %v3375 = vrot.slane %v3360, 5
    %v3376 = vsel %vm3142, %v3373, %v3375
    %3377 = vrot.lane.b32.xlu0 %v3369, 125
    %v3378 = vpop.permute.xlu0 %3377
    %3379 = vrot.lane.b32.xlu0 %v3371, 125
    %v3380 = vpop.permute.xlu0 %3379
    %3381 = vrot.lane.b32.xlu0 %v3374, 125
    %v3382 = vpop.permute.xlu0 %3381
    %3383 = vrot.lane.b32.xlu0 %v3376, 125
    %v3384 = vpop.permute.xlu0 %3383
    %v3389 = vadd.f32 %v3309, %v3378
    %v3390 = vadd.f32 %v3310, %v3380
    %v3391 = vadd.f32 %v3311, %v3382
    %v3392 = vadd.f32 %v3312, %v3384
    %v3393 = vstv %s3353
    %v3394 = vmul.f32 %v3393, %v610
    %v3395 = vmul.f32 %v3393, %v611
    %v3396 = vmul.f32 %v3393, %v612
    %v3397 = vmul.f32 %v3393, %v613
    %v3398 = vmul.f32 %v3393, %v614
    %v3399 = vmul.f32 %v3393, %v615
    %v3406 = vrot.slane %v3394, 5
    %v3407 = vrot.slane %v3395, 5
    %v3408 = vsel %vm3142, %v3406, %v3407
    %v3409 = vrot.slane %v3396, 5
    %v3410 = vsel %vm3142, %v3407, %v3409
    %v3411 = vrot.slane %v3397, 5
    %v3412 = vrot.slane %v3398, 5
    %v3413 = vsel %vm3142, %v3411, %v3412
    %v3414 = vrot.slane %v3399, 5
    %v3415 = vsel %vm3142, %v3412, %v3414
    %3416 = vrot.lane.b32.xlu0 %v3408, 125
    %v3417 = vpop.permute.xlu0 %3416
    %3418 = vrot.lane.b32.xlu0 %v3410, 125
    %v3419 = vpop.permute.xlu0 %3418
    %3420 = vrot.lane.b32.xlu0 %v3413, 125
    %v3421 = vpop.permute.xlu0 %3420
    %3422 = vrot.lane.b32.xlu0 %v3415, 125
    %v3423 = vpop.permute.xlu0 %3422
    %v3428 = vadd.f32 %v3348, %v3417
    %v3429 = vadd.f32 %v3349, %v3419
    %v3430 = vadd.f32 %v3350, %v3421
    %v3431 = vadd.f32 %v3351, %v3423
    %s3432 = sld [smem:[#allocation7 + $0x27]]
    %s3433 = sld [smem:[#allocation7 + $0x58]]
    %v3434 = vstv %s3432
    %v3435 = vmul.f32 %v3434, %v604
    %v3436 = vmul.f32 %v3434, %v605
    %v3437 = vmul.f32 %v3434, %v606
    %v3438 = vmul.f32 %v3434, %v607
    %v3439 = vmul.f32 %v3434, %v608
    %v3440 = vmul.f32 %v3434, %v609
    %v3447 = vrot.slane %v3435, 5
    %v3448 = vrot.slane %v3436, 5
    %v3449 = vsel %vm3142, %v3447, %v3448
    %v3450 = vrot.slane %v3437, 5
    %v3451 = vsel %vm3142, %v3448, %v3450
    %v3452 = vrot.slane %v3438, 5
    %v3453 = vrot.slane %v3439, 5
    %v3454 = vsel %vm3142, %v3452, %v3453
    %v3455 = vrot.slane %v3440, 5
    %v3456 = vsel %vm3142, %v3453, %v3455
    %3457 = vrot.lane.b32.xlu0 %v3449, 124
    %v3458 = vpop.permute.xlu0 %3457
    %3459 = vrot.lane.b32.xlu0 %v3451, 124
    %v3460 = vpop.permute.xlu0 %3459
    %3461 = vrot.lane.b32.xlu0 %v3454, 124
    %v3462 = vpop.permute.xlu0 %3461
    %3463 = vrot.lane.b32.xlu0 %v3456, 124
    %v3464 = vpop.permute.xlu0 %3463
    %v3469 = vadd.f32 %v3389, %v3458
    %v3470 = vadd.f32 %v3390, %v3460
    %v3471 = vadd.f32 %v3391, %v3462
    %v3472 = vadd.f32 %v3392, %v3464
    %v3473 = vstv %s3433
    %v3474 = vmul.f32 %v3473, %v610
    %v3475 = vmul.f32 %v3473, %v611
    %v3476 = vmul.f32 %v3473, %v612
    %v3477 = vmul.f32 %v3473, %v613
    %v3478 = vmul.f32 %v3473, %v614
    %v3479 = vmul.f32 %v3473, %v615
    %v3486 = vrot.slane %v3474, 5
    %v3487 = vrot.slane %v3475, 5
    %v3488 = vsel %vm3142, %v3486, %v3487
    %v3489 = vrot.slane %v3476, 5
    %v3490 = vsel %vm3142, %v3487, %v3489
    %v3491 = vrot.slane %v3477, 5
    %v3492 = vrot.slane %v3478, 5
    %v3493 = vsel %vm3142, %v3491, %v3492
    %v3494 = vrot.slane %v3479, 5
    %v3495 = vsel %vm3142, %v3492, %v3494
    %3496 = vrot.lane.b32.xlu0 %v3488, 124
    %v3497 = vpop.permute.xlu0 %3496
    %3498 = vrot.lane.b32.xlu0 %v3490, 124
    %v3499 = vpop.permute.xlu0 %3498
    %3500 = vrot.lane.b32.xlu0 %v3493, 124
    %v3501 = vpop.permute.xlu0 %3500
    %3502 = vrot.lane.b32.xlu0 %v3495, 124
    %v3503 = vpop.permute.xlu0 %3502
    %v3508 = vadd.f32 %v3428, %v3497
    %v3509 = vadd.f32 %v3429, %v3499
    %v3510 = vadd.f32 %v3430, %v3501
    %v3511 = vadd.f32 %v3431, %v3503
    %s3512 = sld [smem:[#allocation7 + $0x28]]
    %s3513 = sld [smem:[#allocation7 + $0x59]]
    %v3514 = vstv %s3512
    %v3515 = vmul.f32 %v3514, %v604
    %v3516 = vmul.f32 %v3514, %v605
    %v3517 = vmul.f32 %v3514, %v606
    %v3518 = vmul.f32 %v3514, %v607
    %v3519 = vmul.f32 %v3514, %v608
    %v3520 = vmul.f32 %v3514, %v609
    %v3527 = vrot.slane %v3515, 5
    %v3528 = vrot.slane %v3516, 5
    %v3529 = vsel %vm3142, %v3527, %v3528
    %v3530 = vrot.slane %v3517, 5
    %v3531 = vsel %vm3142, %v3528, %v3530
    %v3532 = vrot.slane %v3518, 5
    %v3533 = vrot.slane %v3519, 5
    %v3534 = vsel %vm3142, %v3532, %v3533
    %v3535 = vrot.slane %v3520, 5
    %v3536 = vsel %vm3142, %v3533, %v3535
    %3537 = vrot.lane.b32.xlu0 %v3529, 123
    %v3538 = vpop.permute.xlu0 %3537
    %3539 = vrot.lane.b32.xlu0 %v3531, 123
    %v3540 = vpop.permute.xlu0 %3539
    %3541 = vrot.lane.b32.xlu0 %v3534, 123
    %v3542 = vpop.permute.xlu0 %3541
    %3543 = vrot.lane.b32.xlu0 %v3536, 123
    %v3544 = vpop.permute.xlu0 %3543
    %v3549 = vadd.f32 %v3469, %v3538
    %v3550 = vadd.f32 %v3470, %v3540
    %v3551 = vadd.f32 %v3471, %v3542
    %v3552 = vadd.f32 %v3472, %v3544
    %v3553 = vstv %s3513
    %v3554 = vmul.f32 %v3553, %v610
    %v3555 = vmul.f32 %v3553, %v611
    %v3556 = vmul.f32 %v3553, %v612
    %v3557 = vmul.f32 %v3553, %v613
    %v3558 = vmul.f32 %v3553, %v614
    %v3559 = vmul.f32 %v3553, %v615
    %v3566 = vrot.slane %v3554, 5
    %v3567 = vrot.slane %v3555, 5
    %v3568 = vsel %vm3142, %v3566, %v3567
    %v3569 = vrot.slane %v3556, 5
    %v3570 = vsel %vm3142, %v3567, %v3569
    %v3571 = vrot.slane %v3557, 5
    %v3572 = vrot.slane %v3558, 5
    %v3573 = vsel %vm3142, %v3571, %v3572
    %v3574 = vrot.slane %v3559, 5
    %v3575 = vsel %vm3142, %v3572, %v3574
    %3576 = vrot.lane.b32.xlu0 %v3568, 123
    %v3577 = vpop.permute.xlu0 %3576
    %3578 = vrot.lane.b32.xlu0 %v3570, 123
    %v3579 = vpop.permute.xlu0 %3578
    %3580 = vrot.lane.b32.xlu0 %v3573, 123
    %v3581 = vpop.permute.xlu0 %3580
    %3582 = vrot.lane.b32.xlu0 %v3575, 123
    %v3583 = vpop.permute.xlu0 %3582
    %v3588 = vadd.f32 %v3508, %v3577
    %v3589 = vadd.f32 %v3509, %v3579
    %v3590 = vadd.f32 %v3510, %v3581
    %v3591 = vadd.f32 %v3511, %v3583
    %s3592 = sld [smem:[#allocation7 + $0x29]]
    %s3593 = sld [smem:[#allocation7 + $0x5a]]
    %v3594 = vstv %s3592
    %v3595 = vmul.f32 %v3594, %v604
    %v3596 = vmul.f32 %v3594, %v605
    %v3597 = vmul.f32 %v3594, %v606
    %v3598 = vmul.f32 %v3594, %v607
    %v3599 = vmul.f32 %v3594, %v608
    %v3600 = vmul.f32 %v3594, %v609
    %v3607 = vrot.slane %v3595, 5
    %v3608 = vrot.slane %v3596, 5
    %v3609 = vsel %vm3142, %v3607, %v3608
    %v3610 = vrot.slane %v3597, 5
    %v3611 = vsel %vm3142, %v3608, %v3610
    %v3612 = vrot.slane %v3598, 5
    %v3613 = vrot.slane %v3599, 5
    %v3614 = vsel %vm3142, %v3612, %v3613
    %v3615 = vrot.slane %v3600, 5
    %v3616 = vsel %vm3142, %v3613, %v3615
    %3617 = vrot.lane.b32.xlu0 %v3609, 122
    %v3618 = vpop.permute.xlu0 %3617
    %3619 = vrot.lane.b32.xlu0 %v3611, 122
    %v3620 = vpop.permute.xlu0 %3619
    %3621 = vrot.lane.b32.xlu0 %v3614, 122
    %v3622 = vpop.permute.xlu0 %3621
    %3623 = vrot.lane.b32.xlu0 %v3616, 122
    %v3624 = vpop.permute.xlu0 %3623
    %v3629 = vadd.f32 %v3549, %v3618
    %v3630 = vadd.f32 %v3550, %v3620
    %v3631 = vadd.f32 %v3551, %v3622
    %v3632 = vadd.f32 %v3552, %v3624
    %v3633 = vstv %s3593
    %v3634 = vmul.f32 %v3633, %v610
    %v3635 = vmul.f32 %v3633, %v611
    %v3636 = vmul.f32 %v3633, %v612
    %v3637 = vmul.f32 %v3633, %v613
    %v3638 = vmul.f32 %v3633, %v614
    %v3639 = vmul.f32 %v3633, %v615
    %v3646 = vrot.slane %v3634, 5
    %v3647 = vrot.slane %v3635, 5
    %v3648 = vsel %vm3142, %v3646, %v3647
    %v3649 = vrot.slane %v3636, 5
    %v3650 = vsel %vm3142, %v3647, %v3649
    %v3651 = vrot.slane %v3637, 5
    %v3652 = vrot.slane %v3638, 5
    %v3653 = vsel %vm3142, %v3651, %v3652
    %v3654 = vrot.slane %v3639, 5
    %v3655 = vsel %vm3142, %v3652, %v3654
    %3656 = vrot.lane.b32.xlu0 %v3648, 122
    %v3657 = vpop.permute.xlu0 %3656
    %3658 = vrot.lane.b32.xlu0 %v3650, 122
    %v3659 = vpop.permute.xlu0 %3658
    %3660 = vrot.lane.b32.xlu0 %v3653, 122
    %v3661 = vpop.permute.xlu0 %3660
    %3662 = vrot.lane.b32.xlu0 %v3655, 122
    %v3663 = vpop.permute.xlu0 %3662
    %v3668 = vadd.f32 %v3588, %v3657
    %v3669 = vadd.f32 %v3589, %v3659
    %v3670 = vadd.f32 %v3590, %v3661
    %v3671 = vadd.f32 %v3591, %v3663
    %s3672 = sld [smem:[#allocation7 + $0x2a]]
    %s3673 = sld [smem:[#allocation7 + $0x5b]]
    %v3674 = vstv %s3672
    %v3675 = vmul.f32 %v3674, %v604
    %v3676 = vmul.f32 %v3674, %v605
    %v3677 = vmul.f32 %v3674, %v606
    %v3678 = vmul.f32 %v3674, %v607
    %v3679 = vmul.f32 %v3674, %v608
    %v3680 = vmul.f32 %v3674, %v609
    %vm3687 = vcmask 1041408
    %v3688 = vrot.slane %v3675, 6
    %v3689 = vrot.slane %v3676, 6
    %v3690 = vsel %vm3687, %v3688, %v3689
    %v3691 = vrot.slane %v3677, 6
    %v3692 = vsel %vm3687, %v3689, %v3691
    %v3693 = vrot.slane %v3678, 6
    %v3694 = vrot.slane %v3679, 6
    %v3695 = vsel %vm3687, %v3693, %v3694
    %v3696 = vrot.slane %v3680, 6
    %v3697 = vsel %vm3687, %v3694, %v3696
    %v3702 = vadd.f32 %v3629, %v3690
    %v3703 = vadd.f32 %v3630, %v3692
    %v3704 = vadd.f32 %v3631, %v3695
    %v3705 = vadd.f32 %v3632, %v3697
    %v3706 = vstv %s3673
    %v3707 = vmul.f32 %v3706, %v610
    %v3708 = vmul.f32 %v3706, %v611
    %v3709 = vmul.f32 %v3706, %v612
    %v3710 = vmul.f32 %v3706, %v613
    %v3711 = vmul.f32 %v3706, %v614
    %v3712 = vmul.f32 %v3706, %v615
    %v3719 = vrot.slane %v3707, 6
    %v3720 = vrot.slane %v3708, 6
    %v3721 = vsel %vm3687, %v3719, %v3720
    %v3722 = vrot.slane %v3709, 6
    %v3723 = vsel %vm3687, %v3720, %v3722
    %v3724 = vrot.slane %v3710, 6
    %v3725 = vrot.slane %v3711, 6
    %v3726 = vsel %vm3687, %v3724, %v3725
    %v3727 = vrot.slane %v3712, 6
    %v3728 = vsel %vm3687, %v3725, %v3727
    %v3733 = vadd.f32 %v3668, %v3721
    %v3734 = vadd.f32 %v3669, %v3723
    %v3735 = vadd.f32 %v3670, %v3726
    %v3736 = vadd.f32 %v3671, %v3728
    %s3737 = sld [smem:[#allocation7 + $0x2b]]
    %s3738 = sld [smem:[#allocation7 + $0x5c]]
    %v3739 = vstv %s3737
    %v3740 = vmul.f32 %v3739, %v604
    %v3741 = vmul.f32 %v3739, %v605
    %v3742 = vmul.f32 %v3739, %v606
    %v3743 = vmul.f32 %v3739, %v607
    %v3744 = vmul.f32 %v3739, %v608
    %v3745 = vmul.f32 %v3739, %v609
    %v3752 = vrot.slane %v3740, 6
    %v3753 = vrot.slane %v3741, 6
    %v3754 = vsel %vm3687, %v3752, %v3753
    %v3755 = vrot.slane %v3742, 6
    %v3756 = vsel %vm3687, %v3753, %v3755
    %v3757 = vrot.slane %v3743, 6
    %v3758 = vrot.slane %v3744, 6
    %v3759 = vsel %vm3687, %v3757, %v3758
    %v3760 = vrot.slane %v3745, 6
    %v3761 = vsel %vm3687, %v3758, %v3760
    %3762 = vrot.lane.b32.xlu0 %v3754, 127
    %v3763 = vpop.permute.xlu0 %3762
    %3764 = vrot.lane.b32.xlu0 %v3756, 127
    %v3765 = vpop.permute.xlu0 %3764
    %3766 = vrot.lane.b32.xlu0 %v3759, 127
    %v3767 = vpop.permute.xlu0 %3766
    %3768 = vrot.lane.b32.xlu0 %v3761, 127
    %v3769 = vpop.permute.xlu0 %3768
    %v3774 = vadd.f32 %v3702, %v3763
    %v3775 = vadd.f32 %v3703, %v3765
    %v3776 = vadd.f32 %v3704, %v3767
    %v3777 = vadd.f32 %v3705, %v3769
    %v3778 = vstv %s3738
    %v3779 = vmul.f32 %v3778, %v610
    %v3780 = vmul.f32 %v3778, %v611
    %v3781 = vmul.f32 %v3778, %v612
    %v3782 = vmul.f32 %v3778, %v613
    %v3783 = vmul.f32 %v3778, %v614
    %v3784 = vmul.f32 %v3778, %v615
    %v3791 = vrot.slane %v3779, 6
    %v3792 = vrot.slane %v3780, 6
    %v3793 = vsel %vm3687, %v3791, %v3792
    %v3794 = vrot.slane %v3781, 6
    %v3795 = vsel %vm3687, %v3792, %v3794
    %v3796 = vrot.slane %v3782, 6
    %v3797 = vrot.slane %v3783, 6
    %v3798 = vsel %vm3687, %v3796, %v3797
    %v3799 = vrot.slane %v3784, 6
    %v3800 = vsel %vm3687, %v3797, %v3799
    %3801 = vrot.lane.b32.xlu0 %v3793, 127
    %v3802 = vpop.permute.xlu0 %3801
    %3803 = vrot.lane.b32.xlu0 %v3795, 127
    %v3804 = vpop.permute.xlu0 %3803
    %3805 = vrot.lane.b32.xlu0 %v3798, 127
    %v3806 = vpop.permute.xlu0 %3805
    %3807 = vrot.lane.b32.xlu0 %v3800, 127
    %v3808 = vpop.permute.xlu0 %3807
    %v3813 = vadd.f32 %v3733, %v3802
    %v3814 = vadd.f32 %v3734, %v3804
    %v3815 = vadd.f32 %v3735, %v3806
    %v3816 = vadd.f32 %v3736, %v3808
    %s3817 = sld [smem:[#allocation7 + $0x2c]]
    %s3818 = sld [smem:[#allocation7 + $0x5d]]
    %v3819 = vstv %s3817
    %v3820 = vmul.f32 %v3819, %v604
    %v3821 = vmul.f32 %v3819, %v605
    %v3822 = vmul.f32 %v3819, %v606
    %v3823 = vmul.f32 %v3819, %v607
    %v3824 = vmul.f32 %v3819, %v608
    %v3825 = vmul.f32 %v3819, %v609
    %v3832 = vrot.slane %v3820, 6
    %v3833 = vrot.slane %v3821, 6
    %v3834 = vsel %vm3687, %v3832, %v3833
    %v3835 = vrot.slane %v3822, 6
    %v3836 = vsel %vm3687, %v3833, %v3835
    %v3837 = vrot.slane %v3823, 6
    %v3838 = vrot.slane %v3824, 6
    %v3839 = vsel %vm3687, %v3837, %v3838
    %v3840 = vrot.slane %v3825, 6
    %v3841 = vsel %vm3687, %v3838, %v3840
    %3842 = vrot.lane.b32.xlu0 %v3834, 126
    %v3843 = vpop.permute.xlu0 %3842
    %3844 = vrot.lane.b32.xlu0 %v3836, 126
    %v3845 = vpop.permute.xlu0 %3844
    %3846 = vrot.lane.b32.xlu0 %v3839, 126
    %v3847 = vpop.permute.xlu0 %3846
    %3848 = vrot.lane.b32.xlu0 %v3841, 126
    %v3849 = vpop.permute.xlu0 %3848
    %v3854 = vadd.f32 %v3774, %v3843
    %v3855 = vadd.f32 %v3775, %v3845
    %v3856 = vadd.f32 %v3776, %v3847
    %v3857 = vadd.f32 %v3777, %v3849
    %v3858 = vstv %s3818
    %v3859 = vmul.f32 %v3858, %v610
    %v3860 = vmul.f32 %v3858, %v611
    %v3861 = vmul.f32 %v3858, %v612
    %v3862 = vmul.f32 %v3858, %v613
    %v3863 = vmul.f32 %v3858, %v614
    %v3864 = vmul.f32 %v3858, %v615
    %v3871 = vrot.slane %v3859, 6
    %v3872 = vrot.slane %v3860, 6
    %v3873 = vsel %vm3687, %v3871, %v3872
    %v3874 = vrot.slane %v3861, 6
    %v3875 = vsel %vm3687, %v3872, %v3874
    %v3876 = vrot.slane %v3862, 6
    %v3877 = vrot.slane %v3863, 6
    %v3878 = vsel %vm3687, %v3876, %v3877
    %v3879 = vrot.slane %v3864, 6
    %v3880 = vsel %vm3687, %v3877, %v3879
    %3881 = vrot.lane.b32.xlu0 %v3873, 126
    %v3882 = vpop.permute.xlu0 %3881
    %3883 = vrot.lane.b32.xlu0 %v3875, 126
    %v3884 = vpop.permute.xlu0 %3883
    %3885 = vrot.lane.b32.xlu0 %v3878, 126
    %v3886 = vpop.permute.xlu0 %3885
    %3887 = vrot.lane.b32.xlu0 %v3880, 126
    %v3888 = vpop.permute.xlu0 %3887
    %v3893 = vadd.f32 %v3813, %v3882
    %v3894 = vadd.f32 %v3814, %v3884
    %v3895 = vadd.f32 %v3815, %v3886
    %v3896 = vadd.f32 %v3816, %v3888
    %s3897 = sld [smem:[#allocation7 + $0x2d]]
    %s3898 = sld [smem:[#allocation7 + $0x5e]]
    %v3899 = vstv %s3897
    %v3900 = vmul.f32 %v3899, %v604
    %v3901 = vmul.f32 %v3899, %v605
    %v3902 = vmul.f32 %v3899, %v606
    %v3903 = vmul.f32 %v3899, %v607
    %v3904 = vmul.f32 %v3899, %v608
    %v3905 = vmul.f32 %v3899, %v609
    %v3912 = vrot.slane %v3900, 6
    %v3913 = vrot.slane %v3901, 6
    %v3914 = vsel %vm3687, %v3912, %v3913
    %v3915 = vrot.slane %v3902, 6
    %v3916 = vsel %vm3687, %v3913, %v3915
    %v3917 = vrot.slane %v3903, 6
    %v3918 = vrot.slane %v3904, 6
    %v3919 = vsel %vm3687, %v3917, %v3918
    %v3920 = vrot.slane %v3905, 6
    %v3921 = vsel %vm3687, %v3918, %v3920
    %3922 = vrot.lane.b32.xlu0 %v3914, 125
    %v3923 = vpop.permute.xlu0 %3922
    %3924 = vrot.lane.b32.xlu0 %v3916, 125
    %v3925 = vpop.permute.xlu0 %3924
    %3926 = vrot.lane.b32.xlu0 %v3919, 125
    %v3927 = vpop.permute.xlu0 %3926
    %3928 = vrot.lane.b32.xlu0 %v3921, 125
    %v3929 = vpop.permute.xlu0 %3928
    %v3934 = vadd.f32 %v3854, %v3923
    %v3935 = vadd.f32 %v3855, %v3925
    %v3936 = vadd.f32 %v3856, %v3927
    %v3937 = vadd.f32 %v3857, %v3929
    %v3938 = vstv %s3898
    %v3939 = vmul.f32 %v3938, %v610
    %v3940 = vmul.f32 %v3938, %v611
    %v3941 = vmul.f32 %v3938, %v612
    %v3942 = vmul.f32 %v3938, %v613
    %v3943 = vmul.f32 %v3938, %v614
    %v3944 = vmul.f32 %v3938, %v615
    %v3951 = vrot.slane %v3939, 6
    %v3952 = vrot.slane %v3940, 6
    %v3953 = vsel %vm3687, %v3951, %v3952
    %v3954 = vrot.slane %v3941, 6
    %v3955 = vsel %vm3687, %v3952, %v3954
    %v3956 = vrot.slane %v3942, 6
    %v3957 = vrot.slane %v3943, 6
    %v3958 = vsel %vm3687, %v3956, %v3957
    %v3959 = vrot.slane %v3944, 6
    %v3960 = vsel %vm3687, %v3957, %v3959
    %3961 = vrot.lane.b32.xlu0 %v3953, 125
    %v3962 = vpop.permute.xlu0 %3961
    %3963 = vrot.lane.b32.xlu0 %v3955, 125
    %v3964 = vpop.permute.xlu0 %3963
    %3965 = vrot.lane.b32.xlu0 %v3958, 125
    %v3966 = vpop.permute.xlu0 %3965
    %3967 = vrot.lane.b32.xlu0 %v3960, 125
    %v3968 = vpop.permute.xlu0 %3967
    %v3973 = vadd.f32 %v3893, %v3962
    %v3974 = vadd.f32 %v3894, %v3964
    %v3975 = vadd.f32 %v3895, %v3966
    %v3976 = vadd.f32 %v3896, %v3968
    %s3977 = sld [smem:[#allocation7 + $0x2e]]
    %s3978 = sld [smem:[#allocation7 + $0x5f]]
    %v3979 = vstv %s3977
    %v3980 = vmul.f32 %v3979, %v604
    %v3981 = vmul.f32 %v3979, %v605
    %v3982 = vmul.f32 %v3979, %v606
    %v3983 = vmul.f32 %v3979, %v607
    %v3984 = vmul.f32 %v3979, %v608
    %v3985 = vmul.f32 %v3979, %v609
    %v3992 = vrot.slane %v3980, 6
    %v3993 = vrot.slane %v3981, 6
    %v3994 = vsel %vm3687, %v3992, %v3993
    %v3995 = vrot.slane %v3982, 6
    %v3996 = vsel %vm3687, %v3993, %v3995
    %v3997 = vrot.slane %v3983, 6
    %v3998 = vrot.slane %v3984, 6
    %v3999 = vsel %vm3687, %v3997, %v3998
    %v4000 = vrot.slane %v3985, 6
    %v4001 = vsel %vm3687, %v3998, %v4000
    %4002 = vrot.lane.b32.xlu0 %v3994, 124
    %v4003 = vpop.permute.xlu0 %4002
    %4004 = vrot.lane.b32.xlu0 %v3996, 124
    %v4005 = vpop.permute.xlu0 %4004
    %4006 = vrot.lane.b32.xlu0 %v3999, 124
    %v4007 = vpop.permute.xlu0 %4006
    %4008 = vrot.lane.b32.xlu0 %v4001, 124
    %v4009 = vpop.permute.xlu0 %4008
    %v4014 = vadd.f32 %v3934, %v4003
    %v4015 = vadd.f32 %v3935, %v4005
    %v4016 = vadd.f32 %v3936, %v4007
    %v4017 = vadd.f32 %v3937, %v4009
    %v4018 = vstv %s3978
    %v4019 = vmul.f32 %v4018, %v610
    %v4020 = vmul.f32 %v4018, %v611
    %v4021 = vmul.f32 %v4018, %v612
    %v4022 = vmul.f32 %v4018, %v613
    %v4023 = vmul.f32 %v4018, %v614
    %v4024 = vmul.f32 %v4018, %v615
    %v4031 = vrot.slane %v4019, 6
    %v4032 = vrot.slane %v4020, 6
    %v4033 = vsel %vm3687, %v4031, %v4032
    %v4034 = vrot.slane %v4021, 6
    %v4035 = vsel %vm3687, %v4032, %v4034
    %v4036 = vrot.slane %v4022, 6
    %v4037 = vrot.slane %v4023, 6
    %v4038 = vsel %vm3687, %v4036, %v4037
    %v4039 = vrot.slane %v4024, 6
    %v4040 = vsel %vm3687, %v4037, %v4039
    %4041 = vrot.lane.b32.xlu0 %v4033, 124
    %v4042 = vpop.permute.xlu0 %4041
    %4043 = vrot.lane.b32.xlu0 %v4035, 124
    %v4044 = vpop.permute.xlu0 %4043
    %4045 = vrot.lane.b32.xlu0 %v4038, 124
    %v4046 = vpop.permute.xlu0 %4045
    %4047 = vrot.lane.b32.xlu0 %v4040, 124
    %v4048 = vpop.permute.xlu0 %4047
    %v4053 = vadd.f32 %v3973, %v4042
    %v4054 = vadd.f32 %v3974, %v4044
    %v4055 = vadd.f32 %v3975, %v4046
    %v4056 = vadd.f32 %v3976, %v4048
    %s4057 = sld [smem:[#allocation7 + $0x2f]]
    %s4058 = sld [smem:[#allocation7 + $0x60]]
    %v4059 = vstv %s4057
    %v4060 = vmul.f32 %v4059, %v604
    %v4061 = vmul.f32 %v4059, %v605
    %v4062 = vmul.f32 %v4059, %v606
    %v4063 = vmul.f32 %v4059, %v607
    %v4064 = vmul.f32 %v4059, %v608
    %v4065 = vmul.f32 %v4059, %v609
    %v4072 = vrot.slane %v4060, 6
    %v4073 = vrot.slane %v4061, 6
    %v4074 = vsel %vm3687, %v4072, %v4073
    %v4075 = vrot.slane %v4062, 6
    %v4076 = vsel %vm3687, %v4073, %v4075
    %v4077 = vrot.slane %v4063, 6
    %v4078 = vrot.slane %v4064, 6
    %v4079 = vsel %vm3687, %v4077, %v4078
    %v4080 = vrot.slane %v4065, 6
    %v4081 = vsel %vm3687, %v4078, %v4080
    %4082 = vrot.lane.b32.xlu0 %v4074, 123
    %v4083 = vpop.permute.xlu0 %4082
    %4084 = vrot.lane.b32.xlu0 %v4076, 123
    %v4085 = vpop.permute.xlu0 %4084
    %4086 = vrot.lane.b32.xlu0 %v4079, 123
    %v4087 = vpop.permute.xlu0 %4086
    %4088 = vrot.lane.b32.xlu0 %v4081, 123
    %v4089 = vpop.permute.xlu0 %4088
    %v4094 = vadd.f32 %v4014, %v4083
    %v4095 = vadd.f32 %v4015, %v4085
    %v4096 = vadd.f32 %v4016, %v4087
    %v4097 = vadd.f32 %v4017, %v4089
    %v4098 = vstv %s4058
    %v4099 = vmul.f32 %v4098, %v610
    %v4100 = vmul.f32 %v4098, %v611
    %v4101 = vmul.f32 %v4098, %v612
    %v4102 = vmul.f32 %v4098, %v613
    %v4103 = vmul.f32 %v4098, %v614
    %v4104 = vmul.f32 %v4098, %v615
    %v4111 = vrot.slane %v4099, 6
    %v4112 = vrot.slane %v4100, 6
    %v4113 = vsel %vm3687, %v4111, %v4112
    %v4114 = vrot.slane %v4101, 6
    %v4115 = vsel %vm3687, %v4112, %v4114
    %v4116 = vrot.slane %v4102, 6
    %v4117 = vrot.slane %v4103, 6
    %v4118 = vsel %vm3687, %v4116, %v4117
    %v4119 = vrot.slane %v4104, 6
    %v4120 = vsel %vm3687, %v4117, %v4119
    %4121 = vrot.lane.b32.xlu0 %v4113, 123
    %v4122 = vpop.permute.xlu0 %4121
    %4123 = vrot.lane.b32.xlu0 %v4115, 123
    %v4124 = vpop.permute.xlu0 %4123
    %4125 = vrot.lane.b32.xlu0 %v4118, 123
    %v4126 = vpop.permute.xlu0 %4125
    %4127 = vrot.lane.b32.xlu0 %v4120, 123
    %v4128 = vpop.permute.xlu0 %4127
    %v4133 = vadd.f32 %v4053, %v4122
    %v4134 = vadd.f32 %v4054, %v4124
    %v4135 = vadd.f32 %v4055, %v4126
    %v4136 = vadd.f32 %v4056, %v4128
    %s4137 = sld [smem:[#allocation7 + $0x30]]
    %s4138 = sld [smem:[#allocation7 + $0x61]]
    %v4139 = vstv %s4137
    %v4140 = vmul.f32 %v4139, %v604
    %v4141 = vmul.f32 %v4139, %v605
    %v4142 = vmul.f32 %v4139, %v606
    %v4143 = vmul.f32 %v4139, %v607
    %v4144 = vmul.f32 %v4139, %v608
    %v4145 = vmul.f32 %v4139, %v609
    %v4152 = vrot.slane %v4140, 6
    %v4153 = vrot.slane %v4141, 6
    %v4154 = vsel %vm3687, %v4152, %v4153
    %v4155 = vrot.slane %v4142, 6
    %v4156 = vsel %vm3687, %v4153, %v4155
    %v4157 = vrot.slane %v4143, 6
    %v4158 = vrot.slane %v4144, 6
    %v4159 = vsel %vm3687, %v4157, %v4158
    %v4160 = vrot.slane %v4145, 6
    %v4161 = vsel %vm3687, %v4158, %v4160
    %4162 = vrot.lane.b32.xlu0 %v4154, 122
    %v4163 = vpop.permute.xlu0 %4162
    %4164 = vrot.lane.b32.xlu0 %v4156, 122
    %v4165 = vpop.permute.xlu0 %4164
    %4166 = vrot.lane.b32.xlu0 %v4159, 122
    %v4167 = vpop.permute.xlu0 %4166
    %4168 = vrot.lane.b32.xlu0 %v4161, 122
    %v4169 = vpop.permute.xlu0 %4168
    %v4174 = vadd.f32 %v4094, %v4163
    %v4175 = vadd.f32 %v4095, %v4165
    %v4176 = vadd.f32 %v4096, %v4167
    %v4177 = vadd.f32 %v4097, %v4169
    %v4178 = vstv %s4138
    %v4179 = vmul.f32 %v4178, %v610
    %v4180 = vmul.f32 %v4178, %v611
    %v4181 = vmul.f32 %v4178, %v612
    %v4182 = vmul.f32 %v4178, %v613
    %v4183 = vmul.f32 %v4178, %v614
    %v4184 = vmul.f32 %v4178, %v615
    %v4191 = vrot.slane %v4179, 6
    %v4192 = vrot.slane %v4180, 6
    %v4193 = vsel %vm3687, %v4191, %v4192
    %v4194 = vrot.slane %v4181, 6
    %v4195 = vsel %vm3687, %v4192, %v4194
    %v4196 = vrot.slane %v4182, 6
    %v4197 = vrot.slane %v4183, 6
    %v4198 = vsel %vm3687, %v4196, %v4197
    %v4199 = vrot.slane %v4184, 6
    %v4200 = vsel %vm3687, %v4197, %v4199
    %4201 = vrot.lane.b32.xlu0 %v4193, 122
    %v4202 = vpop.permute.xlu0 %4201
    %4203 = vrot.lane.b32.xlu0 %v4195, 122
    %v4204 = vpop.permute.xlu0 %4203
    %4205 = vrot.lane.b32.xlu0 %v4198, 122
    %v4206 = vpop.permute.xlu0 %4205
    %4207 = vrot.lane.b32.xlu0 %v4200, 122
    %v4208 = vpop.permute.xlu0 %4207
    %v4213 = vadd.f32 %v4133, %v4202
    %v4214 = vadd.f32 %v4134, %v4204
    %v4215 = vadd.f32 %v4135, %v4206
    %v4216 = vadd.f32 %v4136, %v4208
    %v4217 = vadd.f32 %v4174, %v4213
    %v4218 = vadd.f32 %v4175, %v4214
    %v4219 = vadd.f32 %v4176, %v4215
    %v4220 = vadd.f32 %v4177, %v4216
    %v4221 = vxor.u32 %v4217, 2147483648
    %v4222 = vxor.u32 %v4218, 2147483648
    %v4223 = vxor.u32 %v4219, 2147483648
    %v4224 = vxor.u32 %v4220, 2147483648
    %v4225 = vmul.f32 %v4221, 1.442695
    %v4226 = vpow.pop %v4225
    %v4227 = vmul.f32 %v4222, 1.442695
    %v4228 = vpow.pop %v4227
    %v4229 = vmul.f32 %v4223, 1.442695
    %v4230 = vpow.pop %v4229
    %v4231 = vmul.f32 %v4224, 1.442695
    %v4232 = vpow.pop %v4231
    %v4233 = vadd.f32 %v4226, 1.0
    %v4234 = vadd.f32 %v4228, 1.0
    %v4235 = vadd.f32 %v4230, 1.0
    %v4236 = vadd.f32 %v4232, 1.0
    %v4237 = vrcp.pop %v4233
    %v4238 = vmul.f32 1.0, %v4237
    %v4239 = vrcp.pop %v4234
    %v4240 = vmul.f32 1.0, %v4239
    %v4241 = vrcp.pop %v4235
    %v4242 = vmul.f32 1.0, %v4241
    %v4243 = vrcp.pop %v4236
    %v4244 = vmul.f32 1.0, %v4243
    %v4245 = vcombine.high %v4238, 0.0
    %v4247 = vunpack.c.l.s4 1983009808
    %v4248 = vunpack.c.0.s8 %v4247
    %v4249 = vlaneseq
    %v4250 = vshrl.u32 %v4249, 7
    %v4251 = vsub.s32 %v4248, %v4250
    %v4252 = vrot.slane %v4238, %v4251
    %v4254 = vunpack.c.l.s4 1983009808
    %v4255 = vunpack.c.0.s8 %v4254
    %v4256 = vlaneseq
    %v4257 = vshrl.u32 %v4256, 7
    %v4258 = vsub.s32 %v4255, %v4257
    %v4259 = vrot.slane %v4245, %v4258
    %v4260 = vcombine.high %v4252, 0.0
    %v4262 = vunpack.c.l.s4 1934713408
    %v4263 = vunpack.c.0.s8 %v4262
    %v4264 = vlaneseq
    %v4265 = vshrl.u32 %v4264, 7
    %v4266 = vsub.s32 %v4263, %v4265
    %v4267 = vrot.slane %v4252, %v4266
    %v4269 = vunpack.c.l.s4 1934713408
    %v4270 = vunpack.c.0.s8 %v4269
    %v4271 = vlaneseq
    %v4272 = vshrl.u32 %v4271, 7
    %v4273 = vsub.s32 %v4270, %v4272
    %v4274 = vrot.slane %v4260, %v4273
    %v4275 = vcombine.high %v4259, 0.0
    %v4277 = vunpack.c.l.s4 1934713408
    %v4278 = vunpack.c.0.s8 %v4277
    %v4279 = vlaneseq
    %v4280 = vshrl.u32 %v4279, 7
    %v4281 = vsub.s32 %v4278, %v4280
    %v4282 = vrot.slane %v4259, %v4281
    %v4284 = vunpack.c.l.s4 1934713408
    %v4285 = vunpack.c.0.s8 %v4284
    %v4286 = vlaneseq
    %v4287 = vshrl.u32 %v4286, 7
    %v4288 = vsub.s32 %v4285, %v4287
    %v4289 = vrot.slane %v4275, %v4288
    %v4290 = vcombine.high %v4267, 0.0
    %v4291 = vcombine.high %v4274, 0.0
    %v4292 = vcombine.high %v4282, 0.0
    %v4293 = vcombine.high %v4289, 0.0
    %v4294 = vcombine.high %v4240, 0.0
    %v4296 = vunpack.c.l.s4 1983009808
    %v4297 = vunpack.c.0.s8 %v4296
    %v4298 = vlaneseq
    %v4299 = vshrl.u32 %v4298, 7
    %v4300 = vsub.s32 %v4297, %v4299
    %v4301 = vrot.slane %v4240, %v4300
    %v4303 = vunpack.c.l.s4 1983009808
    %v4304 = vunpack.c.0.s8 %v4303
    %v4305 = vlaneseq
    %v4306 = vshrl.u32 %v4305, 7
    %v4307 = vsub.s32 %v4304, %v4306
    %v4308 = vrot.slane %v4294, %v4307
    %v4309 = vcombine.high %v4301, 0.0
    %v4311 = vunpack.c.l.s4 1934713408
    %v4312 = vunpack.c.0.s8 %v4311
    %v4313 = vlaneseq
    %v4314 = vshrl.u32 %v4313, 7
    %v4315 = vsub.s32 %v4312, %v4314
    %v4316 = vrot.slane %v4301, %v4315
    %v4318 = vunpack.c.l.s4 1934713408
    %v4319 = vunpack.c.0.s8 %v4318
    %v4320 = vlaneseq
    %v4321 = vshrl.u32 %v4320, 7
    %v4322 = vsub.s32 %v4319, %v4321
    %v4323 = vrot.slane %v4309, %v4322
    %v4324 = vcombine.high %v4308, 0.0
    %v4326 = vunpack.c.l.s4 1934713408
    %v4327 = vunpack.c.0.s8 %v4326
    %v4328 = vlaneseq
    %v4329 = vshrl.u32 %v4328, 7
    %v4330 = vsub.s32 %v4327, %v4329
    %v4331 = vrot.slane %v4308, %v4330
    %v4333 = vunpack.c.l.s4 1934713408
    %v4334 = vunpack.c.0.s8 %v4333
    %v4335 = vlaneseq
    %v4336 = vshrl.u32 %v4335, 7
    %v4337 = vsub.s32 %v4334, %v4336
    %v4338 = vrot.slane %v4324, %v4337
    %v4339 = vcombine.high %v4316, 0.0
    %v4340 = vcombine.high %v4323, 0.0
    %v4341 = vcombine.high %v4331, 0.0
    %v4342 = vcombine.high %v4338, 0.0
    %v4343 = vcombine.high %v4242, 0.0
    %v4345 = vunpack.c.l.s4 1983009808
    %v4346 = vunpack.c.0.s8 %v4345
    %v4347 = vlaneseq
    %v4348 = vshrl.u32 %v4347, 7
    %v4349 = vsub.s32 %v4346, %v4348
    %v4350 = vrot.slane %v4242, %v4349
    %v4352 = vunpack.c.l.s4 1983009808
    %v4353 = vunpack.c.0.s8 %v4352
    %v4354 = vlaneseq
    %v4355 = vshrl.u32 %v4354, 7
    %v4356 = vsub.s32 %v4353, %v4355
    %v4357 = vrot.slane %v4343, %v4356
    %v4358 = vcombine.high %v4350, 0.0
    %v4360 = vunpack.c.l.s4 1934713408
    %v4361 = vunpack.c.0.s8 %v4360
    %v4362 = vlaneseq
    %v4363 = vshrl.u32 %v4362, 7
    %v4364 = vsub.s32 %v4361, %v4363
    %v4365 = vrot.slane %v4350, %v4364
    %v4367 = vunpack.c.l.s4 1934713408
    %v4368 = vunpack.c.0.s8 %v4367
    %v4369 = vlaneseq
    %v4370 = vshrl.u32 %v4369, 7
    %v4371 = vsub.s32 %v4368, %v4370
    %v4372 = vrot.slane %v4358, %v4371
    %v4373 = vcombine.high %v4357, 0.0
    %v4375 = vunpack.c.l.s4 1934713408
    %v4376 = vunpack.c.0.s8 %v4375
    %v4377 = vlaneseq
    %v4378 = vshrl.u32 %v4377, 7
    %v4379 = vsub.s32 %v4376, %v4378
    %v4380 = vrot.slane %v4357, %v4379
    %v4382 = vunpack.c.l.s4 1934713408
    %v4383 = vunpack.c.0.s8 %v4382
    %v4384 = vlaneseq
    %v4385 = vshrl.u32 %v4384, 7
    %v4386 = vsub.s32 %v4383, %v4385
    %v4387 = vrot.slane %v4373, %v4386
    %v4388 = vcombine.high %v4365, 0.0
    %v4389 = vcombine.high %v4372, 0.0
    %v4390 = vcombine.high %v4380, 0.0
    %v4391 = vcombine.high %v4387, 0.0
    %v4392 = vcombine.high %v4244, 0.0
    %v4394 = vunpack.c.l.s4 1983009808
    %v4395 = vunpack.c.0.s8 %v4394
    %v4396 = vlaneseq
    %v4397 = vshrl.u32 %v4396, 7
    %v4398 = vsub.s32 %v4395, %v4397
    %v4399 = vrot.slane %v4244, %v4398
    %v4401 = vunpack.c.l.s4 1983009808
    %v4402 = vunpack.c.0.s8 %v4401
    %v4403 = vlaneseq
    %v4404 = vshrl.u32 %v4403, 7
    %v4405 = vsub.s32 %v4402, %v4404
    %v4406 = vrot.slane %v4392, %v4405
    %v4407 = vcombine.high %v4399, 0.0
    %v4409 = vunpack.c.l.s4 1934713408
    %v4410 = vunpack.c.0.s8 %v4409
    %v4411 = vlaneseq
    %v4412 = vshrl.u32 %v4411, 7
    %v4413 = vsub.s32 %v4410, %v4412
    %v4414 = vrot.slane %v4399, %v4413
    %v4416 = vunpack.c.l.s4 1934713408
    %v4417 = vunpack.c.0.s8 %v4416
    %v4418 = vlaneseq
    %v4419 = vshrl.u32 %v4418, 7
    %v4420 = vsub.s32 %v4417, %v4419
    %v4421 = vrot.slane %v4407, %v4420
    %v4422 = vcombine.high %v4406, 0.0
    %v4424 = vunpack.c.l.s4 1934713408
    %v4425 = vunpack.c.0.s8 %v4424
    %v4426 = vlaneseq
    %v4427 = vshrl.u32 %v4426, 7
    %v4428 = vsub.s32 %v4425, %v4427
    %v4429 = vrot.slane %v4406, %v4428
    %v4431 = vunpack.c.l.s4 1934713408
    %v4432 = vunpack.c.0.s8 %v4431
    %v4433 = vlaneseq
    %v4434 = vshrl.u32 %v4433, 7
    %v4435 = vsub.s32 %v4432, %v4434
    %v4436 = vrot.slane %v4422, %v4435
    %v4437 = vcombine.high %v4414, 0.0
    %v4438 = vcombine.high %v4421, 0.0
    %v4439 = vcombine.high %v4429, 0.0
    %v4440 = vcombine.high %v4436, 0.0
    %4443 = vrot.lane.b32.xlu0 %v4290, 16
    %v4444 = vpop.permute.xlu0 %4443
    %4445 = vrot.lane.b32.xlu0 %v4388, 16
    %v4446 = vpop.permute.xlu0 %4445
    %4451 = vrot.lane.b32.xlu0 %v4274, 32
    %v4452 = vpop.permute.xlu0 %4451
    %4453 = vrot.lane.b32.xlu0 %v4372, 32
    %v4454 = vpop.permute.xlu0 %4453
    %4459 = vrot.lane.b32.xlu0 %v4291, 48
    %v4460 = vpop.permute.xlu0 %4459
    %4461 = vrot.lane.b32.xlu0 %v4389, 48
    %v4462 = vpop.permute.xlu0 %4461
    %4467 = vrot.lane.b32.xlu0 %v4282, 64
    %v4468 = vpop.permute.xlu0 %4467
    %4469 = vrot.lane.b32.xlu0 %v4380, 64
    %v4470 = vpop.permute.xlu0 %4469
    %4475 = vrot.lane.b32.xlu0 %v4292, 80
    %v4476 = vpop.permute.xlu0 %4475
    %4477 = vrot.lane.b32.xlu0 %v4390, 80
    %v4478 = vpop.permute.xlu0 %4477
    %4483 = vrot.lane.b32.xlu0 %v4289, 96
    %v4484 = vpop.permute.xlu0 %4483
    %4485 = vrot.lane.b32.xlu0 %v4387, 96
    %v4486 = vpop.permute.xlu0 %4485
    %4491 = vrot.lane.b32.xlu0 %v4293, 112
    %v4492 = vpop.permute.xlu0 %4491
    %4493 = vrot.lane.b32.xlu0 %v4391, 112
    %v4494 = vpop.permute.xlu0 %4493
    %4499 = vrot.lane.b32.xlu0 %v4339, 16
    %v4500 = vpop.permute.xlu0 %4499
    %4501 = vrot.lane.b32.xlu0 %v4437, 16
    %v4502 = vpop.permute.xlu0 %4501
    %4507 = vrot.lane.b32.xlu0 %v4323, 32
    %v4508 = vpop.permute.xlu0 %4507
    %4509 = vrot.lane.b32.xlu0 %v4421, 32
    %v4510 = vpop.permute.xlu0 %4509
    %4515 = vrot.lane.b32.xlu0 %v4340, 48
    %v4516 = vpop.permute.xlu0 %4515
    %4517 = vrot.lane.b32.xlu0 %v4438, 48
    %v4518 = vpop.permute.xlu0 %4517
    %4523 = vrot.lane.b32.xlu0 %v4331, 64
    %v4524 = vpop.permute.xlu0 %4523
    %4525 = vrot.lane.b32.xlu0 %v4429, 64
    %v4526 = vpop.permute.xlu0 %4525
    %4531 = vrot.lane.b32.xlu0 %v4341, 80
    %v4532 = vpop.permute.xlu0 %4531
    %4533 = vrot.lane.b32.xlu0 %v4439, 80
    %v4534 = vpop.permute.xlu0 %4533
    %4539 = vrot.lane.b32.xlu0 %v4338, 96
    %v4540 = vpop.permute.xlu0 %4539
    %4541 = vrot.lane.b32.xlu0 %v4436, 96
    %v4542 = vpop.permute.xlu0 %4541
    %4547 = vrot.lane.b32.xlu0 %v4342, 112
    %v4548 = vpop.permute.xlu0 %4547
    %4549 = vrot.lane.b32.xlu0 %v4440, 112
    %v4550 = vpop.permute.xlu0 %4549
    %vm4553 = vcmask 130048
    %v4554 = vsel %vm4553, %v4267, %v4444
    %v4555 = vsel %vm4553, %v4365, %v4446
    %vm4556 = vcmask 261120
    %v4557 = vsel %vm4556, %v4554, %v4452
    %v4558 = vsel %vm4556, %v4555, %v4454
    %vm4559 = vcmask 392192
    %v4560 = vsel %vm4559, %v4557, %v4460
    %v4561 = vsel %vm4559, %v4558, %v4462
    %vm4562 = vcmask 523264
    %v4563 = vsel %vm4562, %v4560, %v4468
    %v4564 = vsel %vm4562, %v4561, %v4470
    %vm4565 = vcmask 654336
    %v4566 = vsel %vm4565, %v4563, %v4476
    %v4567 = vsel %vm4565, %v4564, %v4478
    %vm4568 = vcmask 785408
    %v4569 = vsel %vm4568, %v4566, %v4484
    %v4570 = vsel %vm4568, %v4567, %v4486
    %vm4571 = vcmask 916480
    %v4572 = vsel %vm4571, %v4569, %v4492
    %v4573 = vsel %vm4571, %v4570, %v4494
    %v4574 = vsel %vm4553, %v4316, %v4500
    %v4575 = vsel %vm4553, %v4414, %v4502
    %v4576 = vsel %vm4556, %v4574, %v4508
    %v4577 = vsel %vm4556, %v4575, %v4510
    %v4578 = vsel %vm4559, %v4576, %v4516
    %v4579 = vsel %vm4559, %v4577, %v4518
    %v4580 = vsel %vm4562, %v4578, %v4524
    %v4581 = vsel %vm4562, %v4579, %v4526
    %v4582 = vsel %vm4565, %v4580, %v4532
    %v4583 = vsel %vm4565, %v4581, %v4534
    %v4584 = vsel %vm4568, %v4582, %v4540
    %v4585 = vsel %vm4568, %v4583, %v4542
    %v4586 = vsel %vm4571, %v4584, %v4548
    %v4587 = vsel %vm4571, %v4585, %v4550
    %v4592 = vcombine.low %v4572, %v4586
    %v4594 = vunpack.c.l.s4 1966171168
    %v4595 = vunpack.c.0.s8 %v4594
    %v4596 = vlaneseq
    %v4597 = vshrl.u32 %v4596, 7
    %v4598 = vsub.s32 %v4595, %v4597
    %v4599 = vrot.slane %v4592, %v4598
    %v4601 = vunpack.c.l.s4 1966171168
    %v4602 = vunpack.c.0.s8 %v4601
    %v4603 = vlaneseq
    %v4604 = vshrl.u32 %v4603, 7
    %v4605 = vsub.s32 %v4602, %v4604
    %v4606 = vrot.slane %v4599, %v4605
    %v4607 = vcombine.low %v4573, %v4587
    %v4609 = vunpack.c.l.s4 1966171168
    %v4610 = vunpack.c.0.s8 %v4609
    %v4611 = vlaneseq
    %v4612 = vshrl.u32 %v4611, 7
    %v4613 = vsub.s32 %v4610, %v4612
    %v4614 = vrot.slane %v4607, %v4613
    %v4616 = vunpack.c.l.s4 1966171168
    %v4617 = vunpack.c.0.s8 %v4616
    %v4618 = vlaneseq
    %v4619 = vshrl.u32 %v4618, 7
    %v4620 = vsub.s32 %v4617, %v4619
    %v4621 = vrot.slane %v4614, %v4620
    %v4624 = vlaneseq
    %vm4625 = vcmp.ge.s32.totalorder %v4624, 0
    %vm4626 = vcmp.lt.s32.totalorder %v4624, 256
    %vm4627 = vmand %vm4625, %vm4626
    %4628 = vst.msk [vmem:[#allocation8] sm:$0x3] %vm4627, %v4606
    %4629 = vst.msk [vmem:[#allocation8 + $0x2] sm:$0x3] %vm4627, %v4621
    // Predicated region
    $region18: #{tpu_custom_call.1} parent=1 // pred_check
      _
    $region19: #{tpu_custom_call.1} parent=1 // pred_check_branch
      %4631 = sbr.rel (0) target = $region21
    $region20: #{tpu_custom_call.1} parent=1 // pred_region
      %s4633 = ssub.s32 64, 64
      %4634 = vsyncadd [#allocation5], %s4633
      %s4635 = sshll.u32 [#allocation8], 4
      %s4636 = int_to_ptr.vmem [resolvable:$true] %s4635
      %4641 = dma.vmem_to_hbm [thread:$0]  %s4636, 64, %s2, [#allocation5], 32, 32, 2
    $region21: #{tpu_custom_call.1} parent=1 // pred_fallthru
      _
    // Predicated region
    $region22: #{tpu_custom_call.1} parent=1 // pred_check
      _
    $region23: #{tpu_custom_call.1} parent=1 // pred_check_branch
      %4643 = sbr.rel (0) target = $region25
    $region24: #{tpu_custom_call.1} parent=1 // pred_region
      %4644 = dma.done [#allocation5], 64
    $region25: #{tpu_custom_call.1} parent=1 // pred_fallthru
      _
    %4645 = vsyncpa [#allocation4], 1
    %4646 = vsyncpa [#allocation5], 1
    %4647 = vsyncpa [#allocation6], 1

</llo_original>
